<compile_context>
chip_gen: v7x
topology: tpu7x:2x2x1
jax: 0.10.0
libtpu: 0.0.40
codegen_flags: <defaults>
</compile_context>

<pallas_src>
import functools
import math

import jax
import jax.numpy as jnp
from jax.experimental import pallas as pl
from jax.experimental.pallas import tpu as pltpu

BN_EPS = 1e-5
BN_SCALE = 1.0 / math.sqrt(1.0 + BN_EPS)  # eval-mode BatchNorm1d, default params
NEG_INF = -1e30
VMEM_LIMIT = 64 * 1024 * 1024


# ----------------------------------------------------------------------------
# Fused per-layer kernel, grid = (R,), all adjacencies dst-major bf16:
#   step r (spatial,  r <  space):
#     h_r   = relu(BN(A_orig[r] (X_s W_rel[r]) + b_rel[r]))      -> relout[r]
#     acc  += A_orig[r] (X_g W_gear[r])
#   step r (attention, r >= space):
#     h_r   = relu(BN(A_conv_attn[r-s] (X_s W_rel[r]) + b_rel[r]))
#     S     = (h_r Wq)(h_r Wk)^T  (scale folded into Wq), window mask, top-k
#     newA  = max(A_orig[r], topk_sel)                           -> newadj[r-s]
#     acc  += newA (X_g W_gear[r])
#   last step: hidden = relu(BN(acc + X_g W_self + b)); readout = sum_nodes
# ----------------------------------------------------------------------------
def _fused_layer_kernel(orig_a_ref, conv_attn_a_ref, xwrel_ref, brel_ref,
                        wq_ref, wk_ref, xwg_ref, self_ref,
                        relout_ref, newadj_ref, hidden_ref, readout_ref,
                        acc_ref, *, space, window_size, topk):
    r = pl.program_id(0)
    last = pl.num_programs(0) - 1
    bf16 = jnp.bfloat16

    @pl.when(r == 0)
    def _():
        acc_ref[...] = jnp.zeros_like(acc_ref)

    def rel_conv(a):
        # relationalGraphStack last sub-layer, relation r (X W_rel hoisted).
        agg = jnp.dot(a, xwrel_ref[0], preferred_element_type=jnp.float32)
        return jnp.maximum((agg + brel_ref[0]) * BN_SCALE, 0.0)

    # ---- spatial relations: adjacency is never rewired ----------------------
    @pl.when(r < space)
    def _():
        a = orig_a_ref[0]
        h = rel_conv(a)
        relout_ref[0] = h.astype(relout_ref.dtype)
        acc_ref[...] += jnp.dot(a, xwg_ref[0], preferred_element_type=jnp.float32)

    # ---- attention relations: scores + window mask + top-k + max-merge ------
    @pl.when(r >= space)
    def _():
        h = rel_conv(conv_attn_a_ref[0])
        relout_ref[0] = h.astype(relout_ref.dtype)

        hb = h.astype(bf16)
        # Heads concatenated; 1/(H*sqrt(dh)) folded into Wq in the wrapper.
        q = jnp.dot(hb, wq_ref[0], preferred_element_type=jnp.float32)
        k = jnp.dot(hb, wk_ref[0], preferred_element_type=jnp.float32)
        # Scores produced directly in dst-major orientation:
        #   s_t[dst, src] = <k[dst], q[src]>
        s_t = jax.lax.dot_general(
            k.astype(bf16), q.astype(bf16), (((1,), (1,)), ((), ())),
            preferred_element_type=jnp.float32)
        n = s_t.shape[0]
        dst = jax.lax.broadcasted_iota(jnp.int32, (n, n), 0)
        src = jax.lax.broadcasted_iota(jnp.int32, (n, n), 1)
        wmask = jnp.abs(dst - src) <= window_size
        s_t = jnp.where(wmask, s_t, NEG_INF)
        # k-th largest score per source node == per column of s_t.
        # TODO(synk): deterministic top-k instead of gumbel sampling; exact
        #             score ties can select more than k edges (measure zero).
        m = s_t
        kth = jnp.max(m, axis=0, keepdims=True)
        for _ in range(topk - 1):
            m = jnp.where(m >= kth, NEG_INF, m)
            kth = jnp.max(m, axis=0, keepdims=True)
        sel = jnp.logical_and(s_t >= kth, wmask)
        merged = jnp.maximum(orig_a_ref[0].astype(jnp.float32),
                             sel.astype(jnp.float32)).astype(bf16)
        # store once; feed the local value (no store->load round trip)
        newadj_ref[0] = merged
        acc_ref[...] += jnp.dot(merged, xwg_ref[0],
                                preferred_element_type=jnp.float32)

    @pl.when(r == last)
    def _():
        out = jnp.maximum((acc_ref[...] + self_ref[...]) * BN_SCALE, 0.0)
        hidden_ref[...] = out
        # SumReadout fused into the finalize (no separate kernel launch)
        readout_ref[...] = jnp.sum(out, axis=0, keepdims=True)


def fused_layer(orig_adjT, conv_attn_adjT, xw_rel, b_rel, wq, wk, xw_gear,
                self_term, *, space, window_size, topk):
    R, N, _ = orig_adjT.shape
    Ra = R - space
    Dr = xw_rel.shape[-1]
    HD = wq.shape[-1]
    Do = xw_gear.shape[-1]
    kernel = functools.partial(_fused_layer_kernel, space=space,
                               window_size=window_size, topk=topk)

    def attn_idx(r):                       # clamp: spatial steps revisit block 0
        return (jnp.maximum(r - space, 0), 0, 0)

    return pl.pallas_call(
        kernel,
        out_shape=(
            jax.ShapeDtypeStruct((R, N, Dr), jnp.bfloat16),   # relational output
            jax.ShapeDtypeStruct((Ra, N, N), jnp.bfloat16),   # rewired attn adjacency
            jax.ShapeDtypeStruct((N, Do), jnp.float32),       # hidden
            jax.ShapeDtypeStruct((1, Do), jnp.float32),       # sum readout
        ),
        grid_spec=pltpu.PrefetchScalarGridSpec(
            num_scalar_prefetch=0,
            grid=(R,),
            in_specs=[
                pl.BlockSpec((1, N, N), lambda r: (r, 0, 0)),     # original adjacency
                pl.BlockSpec((1, N, N), attn_idx),                # prev rewired attn adj
                pl.BlockSpec((1, N, Dr), lambda r: (r, 0, 0)),    # X_s @ W_rel[r] (bf16)
                pl.BlockSpec((1, 1, Dr), lambda r: (r, 0, 0)),    # b_rel[r]
                pl.BlockSpec((1, Dr, HD), attn_idx),              # Wq (scaled, bf16)
                pl.BlockSpec((1, Dr, HD), attn_idx),              # Wk (bf16)
                pl.BlockSpec((1, N, Do), lambda r: (r, 0, 0)),    # X_g @ W_gear[r] (bf16)
                pl.BlockSpec((N, Do), lambda r: (0, 0)),          # X_g W_self + b (f32)
            ],
            out_specs=(
                pl.BlockSpec((1, N, Dr), lambda r: (r, 0, 0)),
                pl.BlockSpec((1, N, N), attn_idx),
                pl.BlockSpec((N, Do), lambda r: (0, 0)),
                pl.BlockSpec((1, Do), lambda r: (0, 0)),
            ),
            scratch_shapes=[pltpu.VMEM((N, Do), jnp.float32)],
        ),
        compiler_params=pltpu.CompilerParams(
            dimension_semantics=("arbitrary",),
            vmem_limit_bytes=VMEM_LIMIT),
    )(orig_adjT, conv_attn_adjT, xw_rel, b_rel, wq, wk, xw_gear, self_term)


# ----------------------------------------------------------------------------
# Intermediate relational sub-layers: per-relation conv + fused sum over
# relations (accumulator in VMEM, no (R,N,D) HBM round trip).
# ----------------------------------------------------------------------------
def _relsum_kernel(orig_a_ref, attn_a_ref, xw_ref, b_ref, o_ref, acc_ref, *, space):
    r = pl.program_id(0)

    @pl.when(r == 0)
    def _():
        acc_ref[...] = jnp.zeros_like(acc_ref)

    def step(a):
        agg = jnp.dot(a, xw_ref[0], preferred_element_type=jnp.float32)
        acc_ref[...] += jnp.maximum((agg + b_ref[0]) * BN_SCALE, 0.0)

    @pl.when(r < space)
    def _():
        step(orig_a_ref[0])

    @pl.when(r >= space)
    def _():
        step(attn_a_ref[0])

    @pl.when(r == pl.num_programs(0) - 1)
    def _():
        o_ref[...] = acc_ref[...]


def relational_graph_sum(orig_adjT, conv_attn_adjT, xw, b, *, space):
    R, N, _ = orig_adjT.shape
    Dout = xw.shape[-1]
    kernel = functools.partial(_relsum_kernel, space=space)

    def attn_idx(r):
        return (jnp.maximum(r - space, 0), 0, 0)

    return pl.pallas_call(
        kernel,
        out_shape=jax.ShapeDtypeStruct((N, Dout), jnp.float32),
        grid_spec=pltpu.PrefetchScalarGridSpec(
            num_scalar_prefetch=0,
            grid=(R,),
            in_specs=[
                pl.BlockSpec((1, N, N), lambda r: (r, 0, 0)),
                pl.BlockSpec((1, N, N), attn_idx),
                pl.BlockSpec((1, N, Dout), lambda r: (r, 0, 0)),
                pl.BlockSpec((1, 1, Dout), lambda r: (r, 0, 0)),
            ],
            out_specs=pl.BlockSpec((N, Dout), lambda r: (0, 0)),
            scratch_shapes=[pltpu.VMEM((N, Dout), jnp.float32)],
        ),
        compiler_params=pltpu.CompilerParams(
            dimension_semantics=("arbitrary",),
            vmem_limit_bytes=VMEM_LIMIT),
    )(orig_adjT, conv_attn_adjT, xw, b)


# ----------------------------------------------------------------------------
# 2nd+ GearNet sub-layers over [orig spatial | rewired attention] adjacency.
# X @ W_gear hoisted to the wrapper; self-loop term precomputed; fused readout.
# ----------------------------------------------------------------------------
def _gearnet_kernel(orig_a_ref, attn_a_ref, xw_ref, self_ref, o_ref, ro_ref,
                    acc_ref, *, space):
    r = pl.program_id(0)

    @pl.when(r == 0)
    def _():
        acc_ref[...] = jnp.zeros_like(acc_ref)

    @pl.when(r < space)
    def _():
        acc_ref[...] += jnp.dot(orig_a_ref[0], xw_ref[0],
                                preferred_element_type=jnp.float32)

    @pl.when(r >= space)
    def _():
        acc_ref[...] += jnp.dot(attn_a_ref[0], xw_ref[0],
                                preferred_element_type=jnp.float32)

    @pl.when(r == pl.num_programs(0) - 1)
    def _():
        out = jnp.maximum((acc_ref[...] + self_ref[...]) * BN_SCALE, 0.0)
        o_ref[...] = out
        ro_ref[...] = jnp.sum(out, axis=0, keepdims=True)


def gearnet_conv(orig_adjT, attn_adjT, xw, self_term, *, space):
    R, N, _ = orig_adjT.shape
    Do = xw.shape[-1]
    kernel = functools.partial(_gearnet_kernel, space=space)

    def attn_idx(r):
        return (jnp.maximum(r - space, 0), 0, 0)

    return pl.pallas_call(
        kernel,
        out_shape=(jax.ShapeDtypeStruct((N, Do), jnp.float32),
                   jax.ShapeDtypeStruct((1, Do), jnp.float32)),
        grid_spec=pltpu.PrefetchScalarGridSpec(
            num_scalar_prefetch=0,
            grid=(R,),
            in_specs=[
                pl.BlockSpec((1, N, N), lambda r: (r, 0, 0)),
                pl.BlockSpec((1, N, N), attn_idx),
                pl.BlockSpec((1, N, Do), lambda r: (r, 0, 0)),
                pl.BlockSpec((N, Do), lambda r: (0, 0)),
            ],
            out_specs=(pl.BlockSpec((N, Do), lambda r: (0, 0)),
                       pl.BlockSpec((1, Do), lambda r: (0, 0))),
            scratch_shapes=[pltpu.VMEM((N, Do), jnp.float32)],
        ),
        compiler_params=pltpu.CompilerParams(
            dimension_semantics=("arbitrary",),
            vmem_limit_bytes=VMEM_LIMIT),
    )(orig_adjT, attn_adjT, xw, self_term)


# ----------------------------------------------------------------------------
# Parameter construction (deterministic, synthetic).
# ----------------------------------------------------------------------------
def init_params(key, relation_dims, diffusion_dims, num_relation, attn_num_relation,
                score_in_dim, score_out_dim, num_heads):
    head_dim = score_out_dim // num_heads
    params = {"rel_stack": [], "gear_stack": [], "wq": [], "wk": []}
    for i in range(len(relation_dims)):
        # relationalGraphStack params
        rel_layers = []
        dims = relation_dims[i]
        for j in range(len(dims) - 1):
            key, k1, k2 = jax.random.split(key, 3)
            d_in, d_out = dims[j], dims[j + 1]
            w = jax.random.normal(k1, (num_relation, d_in, d_out), jnp.float32) / math.sqrt(d_in)
            b = jax.random.normal(k2, (num_relation, 1, d_out), jnp.float32) * 0.01
            rel_layers.append((w, b))
        params["rel_stack"].append(rel_layers)

        # Rewirescorelayer params (heads concatenated, attention relations only)
        key, k1, k2 = jax.random.split(key, 3)
        wq = jax.random.normal(k1, (attn_num_relation, score_in_dim, num_heads * head_dim),
                               jnp.float32) / math.sqrt(score_in_dim)
        wk = jax.random.normal(k2, (attn_num_relation, score_in_dim, num_heads * head_dim),
                               jnp.float32) / math.sqrt(score_in_dim)
        params["wq"].append(wq)
        params["wk"].append(wk)

        # rewireGearNetstack params
        gear_layers = []
        dims = diffusion_dims[i]
        for j in range(len(dims) - 1):
            key, k1, k2, k3 = jax.random.split(key, 4)
            d_in, d_out = dims[j], dims[j + 1]
            w = jax.random.normal(k1, (num_relation, d_in, d_out), jnp.float32) / math.sqrt(
                num_relation * d_in)
            w_self = jax.random.normal(k2, (d_in, d_out), jnp.float32) / math.sqrt(d_in)
            b = jax.random.normal(k3, (1, d_out), jnp.float32) * 0.01
            gear_layers.append((w, w_self, b))
        params["gear_stack"].append(gear_layers)
    return params


# ----------------------------------------------------------------------------
# Forward pass (mirrors DGMGearnet_only_sequence.forward; num_angle_bin=None,
# short_cut=False, concat_hidden=False, model-level batch_norm=False,
# readout='sum')
# ----------------------------------------------------------------------------
def forward(params, adjacency, x, *, num_relation, attn_num_relation, num_heads,
            window_size, topk):
    N = x.shape[0]
    R = num_relation
    space = R - attn_num_relation                       # space_information_num
    bf16 = jnp.bfloat16

    # One-time layout transform: PyTorch (N, R*N) -> dst-major (R, N_dst, N_src)
    # bf16; kept in this layout for the whole forward pass.
    adj3 = adjacency.reshape(N, R, N).transpose(1, 0, 2)        # (R, src, dst)
    orig_adjT = adj3.transpose(0, 2, 1).astype(bf16)            # (R, dst, src)

    # Only the attention relations are ever rewired (the spatial part of
    # new_edge_list is always the original adjacency), so only (Ra, N, N) is
    # carried/updated between layers.
    conv_attn_adjT = orig_adjT[space:]
    layer_input = x
    score_layer_input = x
    hiddens = []
    readout = None
    num_layers = len(params["gear_stack"])

    for i in range(num_layers):
        # ---- relationalGraphStack (score_layers[2i]); X @ W hoisted out of
        #      the relation loop (one wide lane-dense matmul, bf16 stream).
        rel_layers = params["rel_stack"][i]
        rel_in = score_layer_input
        for (w, b) in rel_layers[:-1]:
            xw = jnp.einsum('nd,rde->rne', rel_in, w).astype(bf16)
            rel_in = relational_graph_sum(orig_adjT, conv_attn_adjT, xw, b,
                                          space=space)
        w_rel, b_rel = rel_layers[-1]
        xw_rel = jnp.einsum('nd,rde->rne', rel_in, w_rel).astype(bf16)

        # Rewirescorelayer weights: 1/(H*sqrt(dh)) folded into Wq, bf16.
        wq, wk = params["wq"][i], params["wk"][i]
        head_dim = wq.shape[-1] // num_heads
        scale = 1.0 / (num_heads * math.sqrt(head_dim))
        wq_s = (wq * scale).astype(bf16)
        wk_b = wk.astype(bf16)

        # rewireGearNetstack sub-layer 0: X @ W_gear hoisted; self term hoisted.
        w_g0, ws_g0, b_g0 = params["gear_stack"][i][0]
        xw_gear = jnp.einsum('nd,rde->rne', layer_input, w_g0).astype(bf16)
        self_term = layer_input @ ws_g0 + b_g0                  # (N, Do) f32

        rel_out3, new_attn_adjT, hidden, readout = fused_layer(
            orig_adjT, conv_attn_adjT, xw_rel, b_rel, wq_s, wk_b, xw_gear,
            self_term, space=space, window_size=window_size, topk=topk)

        # remaining GearNet sub-layers over [orig spatial | rewired attention]
        for (w, ws, b) in params["gear_stack"][i][1:]:
            xw = jnp.einsum('nd,rde->rne', hidden, w).astype(bf16)
            st = hidden @ ws + b
            hidden, readout = gearnet_conv(orig_adjT, new_attn_adjT, xw, st,
                                           space=space)

        hiddens.append(hidden)
        # torch .view(N, R*D) of the (R, N, D)-contiguous relational output ==
        # raw row-major reshape.
        Dr = rel_out3.shape[-1]
        score_layer_input = jnp.concatenate(
            [hidden, rel_out3.reshape(N, R * Dr).astype(jnp.float32)], axis=-1)
        layer_input = hidden
        conv_attn_adjT = new_attn_adjT

    node_feature = hiddens[-1]
    graph_feature = readout                   # SumReadout fused into the kernel
    return {"graph_feature": graph_feature, "node_feature": node_feature}


# ----------------------------------------------------------------------------
if __name__ == "__main__":
    key = jax.random.PRNGKey(0)

    # small configuration consistent with the module
    N = 16                    # num_node
    R = 3                     # num_relation
    Ra = 2                    # attn_num_relation
    E = 24                    # num edges
    D_IN = 8
    HIDDEN = 32
    relation_dims = [[D_IN, HIDDEN], [HIDDEN * (1 + R), HIDDEN, HIDDEN]]
    diffusion_dims = [[D_IN, HIDDEN], [HIDDEN, HIDDEN, HIDDEN]]
    score_in_dim, score_out_dim, num_heads = HIDDEN, 16, 2
    window_size, topk = 4, 3

    # deterministic synthetic graph
    key, k_in, k_out, k_rel, k_x = jax.random.split(key, 5)
    node_in = jax.random.randint(k_in, (E,), 0, N)
    node_out = jax.random.randint(k_out, (E,), 0, N)
    relation = jax.random.randint(k_rel, (E,), 0, R)
    edge_weight = jnp.ones((E,), jnp.float32)
    x = jax.random.normal(k_x, (N, D_IN), jnp.float32)

    # dense adjacency, PyTorch layout: adjacency[i, r*N + j] = w(edge i->j, rel r)
    adj3 = jnp.zeros((R, N, N), jnp.float32).at[relation, node_in, node_out].add(edge_weight)
    adjacency = adj3.transpose(1, 0, 2).reshape(N, R * N)

    key, k_params = jax.random.split(key)
    params = init_params(k_params, relation_dims, diffusion_dims, R, Ra,
                         score_in_dim, score_out_dim, num_heads)

    fwd = jax.jit(functools.partial(
        forward, num_relation=R, attn_num_relation=Ra, num_heads=num_heads,
        window_size=window_size, topk=topk))
    out = fwd(params, adjacency, x)
    jax.block_until_ready(out)

    assert out["node_feature"].shape == (N, HIDDEN)
    assert out["graph_feature"].shape == (1, HIDDEN)
    print("KERNEL_OK")
</pallas_src>

<mosaic_0001>
module attributes {stable_mosaic.version = 11 : i64} {
  func.func @_fused_layer_kernel(%arg0: i32, %arg1: memref<1x16x16xbf16, #tpu.memory_space<vmem>>, %arg2: memref<1x16x16xbf16, #tpu.memory_space<vmem>>, %arg3: memref<1x16x32xbf16, #tpu.memory_space<vmem>>, %arg4: memref<1x1x32xf32, #tpu.memory_space<vmem>>, %arg5: memref<1x32x16xbf16, #tpu.memory_space<vmem>>, %arg6: memref<1x32x16xbf16, #tpu.memory_space<vmem>>, %arg7: memref<1x16x32xbf16, #tpu.memory_space<vmem>>, %arg8: memref<16x32xf32, #tpu.memory_space<vmem>>, %arg9: memref<1x16x32xbf16, #tpu.memory_space<vmem>>, %arg10: memref<1x16x16xbf16, #tpu.memory_space<vmem>>, %arg11: memref<16x32xf32, #tpu.memory_space<vmem>>, %arg12: memref<1x32xf32, #tpu.memory_space<vmem>>, %arg13: memref<16x32xf32, #tpu.memory_space<vmem>>) attributes {dimension_semantics = [#tpu.dimension_semantics<arbitrary>], iteration_bounds = array<i64: 3>, scalar_prefetch = 0 : i64, scratch_operands = 1 : i64, tpu.core_type = #tpu.core_type<tc>, window_params = [{transform_indices = @transform_0, window_bounds = array<i64: 1, 16, 16>}, {transform_indices = @transform_1, window_bounds = array<i64: 1, 16, 16>}, {transform_indices = @transform_2, window_bounds = array<i64: 1, 16, 32>}, {transform_indices = @transform_3, window_bounds = array<i64: 1, 1, 32>}, {transform_indices = @transform_4, window_bounds = array<i64: 1, 32, 16>}, {transform_indices = @transform_5, window_bounds = array<i64: 1, 32, 16>}, {transform_indices = @transform_6, window_bounds = array<i64: 1, 16, 32>}, {pipeline_mode = #tpu.pipeline_mode<synchronous>, transform_indices = @transform_7, window_bounds = array<i64: 16, 32>}, {transform_indices = @transform_8, window_bounds = array<i64: 1, 16, 32>}, {transform_indices = @transform_9, window_bounds = array<i64: 1, 16, 16>}, {pipeline_mode = #tpu.pipeline_mode<synchronous>, transform_indices = @transform_10, window_bounds = array<i64: 16, 32>}, {pipeline_mode = #tpu.pipeline_mode<synchronous>, transform_indices = @transform_11, window_bounds = array<i64: 1, 32>}]} {
    %c0_i32 = arith.constant 0 : i32
    %0 = arith.cmpi eq, %arg0, %c0_i32 : i32
    %1 = arith.extui %0 : i1 to i32
    %c0_i32_0 = arith.constant 0 : i32
    %2 = arith.cmpi ne, %1, %c0_i32_0 : i32
    scf.if %2 {
      %cst = arith.constant 0.000000e+00 : f32
      %12 = vector.broadcast %cst : f32 to vector<16x32xf32>
      %c0 = arith.constant 0 : index
      %c0_5 = arith.constant 0 : index
      %13 = vector.load %arg13[%c0, %c0_5] : memref<16x32xf32, #tpu.memory_space<vmem>>, vector<16x32xf32>
      tpu.vector_store %arg13[%c0, %c0_5], %12 {strides = array<i32>} : memref<16x32xf32, #tpu.memory_space<vmem>>, vector<16x32xf32>,
    } else {
    }
    %c1_i32 = arith.constant 1 : i32
    %3 = arith.cmpi slt, %arg0, %c1_i32 : i32
    %4 = arith.extui %3 : i1 to i32
    %c0_i32_1 = arith.constant 0 : i32
    %5 = arith.cmpi ne, %4, %c0_i32_1 : i32
    scf.if %5 {
      %c0 = arith.constant 0 : index
      %c0_5 = arith.constant 0 : index
      %c0_6 = arith.constant 0 : index
      %12 = vector.load %arg1[%c0, %c0_5, %c0_6] : memref<1x16x16xbf16, #tpu.memory_space<vmem>>, vector<1x16x16xbf16>
      %13 = vector.shape_cast %12 : vector<1x16x16xbf16> to vector<16x16xbf16>
      %c0_7 = arith.constant 0 : index
      %c0_8 = arith.constant 0 : index
      %c0_9 = arith.constant 0 : index
      %14 = vector.load %arg3[%c0_7, %c0_8, %c0_9] : memref<1x16x32xbf16, #tpu.memory_space<vmem>>, vector<1x16x32xbf16>
      %15 = vector.shape_cast %14 : vector<1x16x32xbf16> to vector<16x32xbf16>
      %cst = arith.constant dense<0.000000e+00> : vector<16x32xf32>
      %16 = tpu.matmul %13, %15, %cst {dimension_numbers = #tpu.dot_dimension_numbers<[1], [0], [0], [1], [0, 0, 1, 1], [], []>} : vector<16x16xbf16>, vector<16x32xbf16>, vector<16x32xf32> -> vector<16x32xf32>
      %c0_10 = arith.constant 0 : index
      %c0_11 = arith.constant 0 : index
      %c0_12 = arith.constant 0 : index
      %17 = vector.load %arg4[%c0_10, %c0_11, %c0_12] : memref<1x1x32xf32, #tpu.memory_space<vmem>>, vector<1x1x32xf32>
      %18 = vector.shape_cast %17 : vector<1x1x32xf32> to vector<1x32xf32>
      %19 = vector.broadcast %18 : vector<1x32xf32> to vector<16x32xf32>
      %20 = arith.addf %16, %19 : vector<16x32xf32>
      %cst_13 = arith.constant 0.999994993 : f32
      %21 = vector.broadcast %cst_13 : f32 to vector<16x32xf32>
      %22 = arith.mulf %20, %21 : vector<16x32xf32>
      %cst_14 = arith.constant 0.000000e+00 : f32
      %23 = vector.broadcast %cst_14 : f32 to vector<16x32xf32>
      %24 = arith.maximumf %22, %23 : vector<16x32xf32>
      %25 = arith.truncf %24 : vector<16x32xf32> to vector<16x32xbf16>
      %c0_15 = arith.constant 0 : index
      %c0_16 = arith.constant 0 : index
      %c0_17 = arith.constant 0 : index
      %26 = vector.load %arg9[%c0_15, %c0_16, %c0_17] : memref<1x16x32xbf16, #tpu.memory_space<vmem>>, vector<1x16x32xbf16>
      %27 = vector.shape_cast %26 : vector<1x16x32xbf16> to vector<16x32xbf16>
      %28 = vector.shape_cast %25 : vector<16x32xbf16> to vector<1x16x32xbf16>
      tpu.vector_store %arg9[%c0_15, %c0_16, %c0_17], %28 {strides = array<i32>} : memref<1x16x32xbf16, #tpu.memory_space<vmem>>, vector<1x16x32xbf16>,
      %c0_18 = arith.constant 0 : index
      %c0_19 = arith.constant 0 : index
      %29 = vector.load %arg13[%c0_18, %c0_19] : memref<16x32xf32, #tpu.memory_space<vmem>>, vector<16x32xf32>
      %c0_20 = arith.constant 0 : index
      %c0_21 = arith.constant 0 : index
      %c0_22 = arith.constant 0 : index
      %30 = vector.load %arg7[%c0_20, %c0_21, %c0_22] : memref<1x16x32xbf16, #tpu.memory_space<vmem>>, vector<1x16x32xbf16>
      %31 = vector.shape_cast %30 : vector<1x16x32xbf16> to vector<16x32xbf16>
      %cst_23 = arith.constant dense<0.000000e+00> : vector<16x32xf32>
      %32 = tpu.matmul %13, %31, %cst_23 {dimension_numbers = #tpu.dot_dimension_numbers<[1], [0], [0], [1], [0, 0, 1, 1], [], []>} : vector<16x16xbf16>, vector<16x32xbf16>, vector<16x32xf32> -> vector<16x32xf32>
      %33 = arith.addf %29, %32 : vector<16x32xf32>
      %c0_24 = arith.constant 0 : index
      %c0_25 = arith.constant 0 : index
      %34 = vector.load %arg13[%c0_24, %c0_25] : memref<16x32xf32, #tpu.memory_space<vmem>>, vector<16x32xf32>
      tpu.vector_store %arg13[%c0_24, %c0_25], %33 {strides = array<i32>} : memref<16x32xf32, #tpu.memory_space<vmem>>, vector<16x32xf32>,
    } else {
    }
    %c1_i32_2 = arith.constant 1 : i32
    %6 = arith.cmpi sge, %arg0, %c1_i32_2 : i32
    %7 = arith.extui %6 : i1 to i32
    %c0_i32_3 = arith.constant 0 : i32
    %8 = arith.cmpi ne, %7, %c0_i32_3 : i32
    scf.if %8 {
      %c0 = arith.constant 0 : index
      %c0_5 = arith.constant 0 : index
      %c0_6 = arith.constant 0 : index
      %12 = vector.load %arg2[%c0, %c0_5, %c0_6] : memref<1x16x16xbf16, #tpu.memory_space<vmem>>, vector<1x16x16xbf16>
      %13 = vector.shape_cast %12 : vector<1x16x16xbf16> to vector<16x16xbf16>
      %c0_7 = arith.constant 0 : index
      %c0_8 = arith.constant 0 : index
      %c0_9 = arith.constant 0 : index
      %14 = vector.load %arg3[%c0_7, %c0_8, %c0_9] : memref<1x16x32xbf16, #tpu.memory_space<vmem>>, vector<1x16x32xbf16>
      %15 = vector.shape_cast %14 : vector<1x16x32xbf16> to vector<16x32xbf16>
      %cst = arith.constant dense<0.000000e+00> : vector<16x32xf32>
      %16 = tpu.matmul %13, %15, %cst {dimension_numbers = #tpu.dot_dimension_numbers<[1], [0], [0], [1], [0, 0, 1, 1], [], []>} : vector<16x16xbf16>, vector<16x32xbf16>, vector<16x32xf32> -> vector<16x32xf32>
      %c0_10 = arith.constant 0 : index
      %c0_11 = arith.constant 0 : index
      %c0_12 = arith.constant 0 : index
      %17 = vector.load %arg4[%c0_10, %c0_11, %c0_12] : memref<1x1x32xf32, #tpu.memory_space<vmem>>, vector<1x1x32xf32>
      %18 = vector.shape_cast %17 : vector<1x1x32xf32> to vector<1x32xf32>
      %19 = vector.broadcast %18 : vector<1x32xf32> to vector<16x32xf32>
      %20 = arith.addf %16, %19 : vector<16x32xf32>
      %cst_13 = arith.constant 0.999994993 : f32
      %21 = vector.broadcast %cst_13 : f32 to vector<16x32xf32>
      %22 = arith.mulf %20, %21 : vector<16x32xf32>
      %cst_14 = arith.constant 0.000000e+00 : f32
      %23 = vector.broadcast %cst_14 : f32 to vector<16x32xf32>
      %24 = arith.maximumf %22, %23 : vector<16x32xf32>
      %25 = arith.truncf %24 : vector<16x32xf32> to vector<16x32xbf16>
      %c0_15 = arith.constant 0 : index
      %c0_16 = arith.constant 0 : index
      %c0_17 = arith.constant 0 : index
      %26 = vector.load %arg9[%c0_15, %c0_16, %c0_17] : memref<1x16x32xbf16, #tpu.memory_space<vmem>>, vector<1x16x32xbf16>
      %27 = vector.shape_cast %26 : vector<1x16x32xbf16> to vector<16x32xbf16>
      %28 = vector.shape_cast %25 : vector<16x32xbf16> to vector<1x16x32xbf16>
      tpu.vector_store %arg9[%c0_15, %c0_16, %c0_17], %28 {strides = array<i32>} : memref<1x16x32xbf16, #tpu.memory_space<vmem>>, vector<1x16x32xbf16>,
      %29 = arith.truncf %24 : vector<16x32xf32> to vector<16x32xbf16>
      %c0_18 = arith.constant 0 : index
      %c0_19 = arith.constant 0 : index
      %c0_20 = arith.constant 0 : index
      %30 = vector.load %arg5[%c0_18, %c0_19, %c0_20] : memref<1x32x16xbf16, #tpu.memory_space<vmem>>, vector<1x32x16xbf16>
      %31 = vector.shape_cast %30 : vector<1x32x16xbf16> to vector<32x16xbf16>
      %cst_21 = arith.constant dense<0.000000e+00> : vector<16x16xf32>
      %32 = tpu.matmul %29, %31, %cst_21 {dimension_numbers = #tpu.dot_dimension_numbers<[1], [0], [0], [1], [0, 0, 1, 1], [], []>} : vector<16x32xbf16>, vector<32x16xbf16>, vector<16x16xf32> -> vector<16x16xf32>
      %c0_22 = arith.constant 0 : index
      %c0_23 = arith.constant 0 : index
      %c0_24 = arith.constant 0 : index
      %33 = vector.load %arg6[%c0_22, %c0_23, %c0_24] : memref<1x32x16xbf16, #tpu.memory_space<vmem>>, vector<1x32x16xbf16>
      %34 = vector.shape_cast %33 : vector<1x32x16xbf16> to vector<32x16xbf16>
      %cst_25 = arith.constant dense<0.000000e+00> : vector<16x16xf32>
      %35 = tpu.matmul %29, %34, %cst_25 {dimension_numbers = #tpu.dot_dimension_numbers<[1], [0], [0], [1], [0, 0, 1, 1], [], []>} : vector<16x32xbf16>, vector<32x16xbf16>, vector<16x16xf32> -> vector<16x16xf32>
      %36 = arith.truncf %35 : vector<16x16xf32> to vector<16x16xbf16>
      %37 = arith.truncf %32 : vector<16x16xf32> to vector<16x16xbf16>
      %cst_26 = arith.constant dense<0.000000e+00> : vector<16x16xf32>
      %38 = tpu.matmul %36, %37, %cst_26 {dimension_numbers = #tpu.dot_dimension_numbers<[1], [1], [0], [0], [0, 0, 1, 0], [], []>} : vector<16x16xbf16>, vector<16x16xbf16>, vector<16x16xf32> -> vector<16x16xf32>
      %39 = tpu.iota {dimensions = array<i32: 0>} : vector<16x16xi32>
      %40 = tpu.iota {dimensions = array<i32: 1>} : vector<16x16xi32>
      %41 = arith.subi %39, %40 : vector<16x16xi32>
      %42 = math.absi %41 : vector<16x16xi32>
      %c4_i32 = arith.constant 4 : i32
      %43 = vector.broadcast %c4_i32 : i32 to vector<16x16xi32>
      %44 = arith.cmpi sle, %42, %43 : vector<16x16xi32>
      %cst_27 = arith.constant -1.000000e+30 : f32
      %45 = vector.broadcast %cst_27 : f32 to vector<16x16xf32>
      %46 = arith.select %44, %38, %45 : vector<16x16xi1>, vector<16x16xf32>
      %cst_28 = arith.constant dense<0xFF800000> : vector<16xf32>
      %47 = vector.multi_reduction <maximumf>, %46, %cst_28 [0] : vector<16x16xf32> to vector<16xf32>
      %48 = vector.shape_cast %47 : vector<16xf32> to vector<1x16xf32>
      %49 = vector.broadcast %48 : vector<1x16xf32> to vector<16x16xf32>
      %50 = arith.cmpf oge, %46, %49 : vector<16x16xf32>
      %cst_29 = arith.constant -1.000000e+30 : f32
      %51 = vector.broadcast %cst_29 : f32 to vector<16x16xf32>
      %52 = arith.select %50, %51, %46 : vector<16x16xi1>, vector<16x16xf32>
      %cst_30 = arith.constant dense<0xFF800000> : vector<16xf32>
      %53 = vector.multi_reduction <maximumf>, %52, %cst_30 [0] : vector<16x16xf32> to vector<16xf32>
      %54 = vector.shape_cast %53 : vector<16xf32> to vector<1x16xf32>
      %55 = vector.broadcast %54 : vector<1x16xf32> to vector<16x16xf32>
      %56 = arith.cmpf oge, %52, %55 : vector<16x16xf32>
      %cst_31 = arith.constant -1.000000e+30 : f32
      %57 = vector.broadcast %cst_31 : f32 to vector<16x16xf32>
      %58 = arith.select %56, %57, %52 : vector<16x16xi1>, vector<16x16xf32>
      %cst_32 = arith.constant dense<0xFF800000> : vector<16xf32>
      %59 = vector.multi_reduction <maximumf>, %58, %cst_32 [0] : vector<16x16xf32> to vector<16xf32>
      %60 = vector.shape_cast %59 : vector<16xf32> to vector<1x16xf32>
      %61 = vector.broadcast %60 : vector<1x16xf32> to vector<16x16xf32>
      %62 = arith.cmpf oge, %46, %61 : vector<16x16xf32>
      %63 = arith.andi %62, %44 : vector<16x16xi1>
      %c0_33 = arith.constant 0 : index
      %c0_34 = arith.constant 0 : index
      %c0_35 = arith.constant 0 : index
      %64 = vector.load %arg1[%c0_33, %c0_34, %c0_35] : memref<1x16x16xbf16, #tpu.memory_space<vmem>>, vector<1x16x16xbf16>
      %65 = vector.shape_cast %64 : vector<1x16x16xbf16> to vector<16x16xbf16>
      %66 = arith.extf %65 : vector<16x16xbf16> to vector<16x16xf32>
      %67 = arith.extui %63 : vector<16x16xi1> to vector<16x16xi32>
      %68 = arith.sitofp %67 : vector<16x16xi32> to vector<16x16xf32>
      %69 = arith.maximumf %66, %68 : vector<16x16xf32>
      %70 = arith.truncf %69 : vector<16x16xf32> to vector<16x16xbf16>
      %c0_36 = arith.constant 0 : index
      %c0_37 = arith.constant 0 : index
      %c0_38 = arith.constant 0 : index
      %71 = vector.load %arg10[%c0_36, %c0_37, %c0_38] : memref<1x16x16xbf16, #tpu.memory_space<vmem>>, vector<1x16x16xbf16>
      %72 = vector.shape_cast %71 : vector<1x16x16xbf16> to vector<16x16xbf16>
      %73 = vector.shape_cast %70 : vector<16x16xbf16> to vector<1x16x16xbf16>
      tpu.vector_store %arg10[%c0_36, %c0_37, %c0_38], %73 {strides = array<i32>} : memref<1x16x16xbf16, #tpu.memory_space<vmem>>, vector<1x16x16xbf16>,
      %c0_39 = arith.constant 0 : index
      %c0_40 = arith.constant 0 : index
      %74 = vector.load %arg13[%c0_39, %c0_40] : memref<16x32xf32, #tpu.memory_space<vmem>>, vector<16x32xf32>
      %c0_41 = arith.constant 0 : index
      %c0_42 = arith.constant 0 : index
      %c0_43 = arith.constant 0 : index
      %75 = vector.load %arg7[%c0_41, %c0_42, %c0_43] : memref<1x16x32xbf16, #tpu.memory_space<vmem>>, vector<1x16x32xbf16>
      %76 = vector.shape_cast %75 : vector<1x16x32xbf16> to vector<16x32xbf16>
      %cst_44 = arith.constant dense<0.000000e+00> : vector<16x32xf32>
      %77 = tpu.matmul %70, %76, %cst_44 {dimension_numbers = #tpu.dot_dimension_numbers<[1], [0], [0], [1], [0, 0, 1, 1], [], []>} : vector<16x16xbf16>, vector<16x32xbf16>, vector<16x32xf32> -> vector<16x32xf32>
      %78 = arith.addf %74, %77 : vector<16x32xf32>
      %c0_45 = arith.constant 0 : index
      %c0_46 = arith.constant 0 : index
      %79 = vector.load %arg13[%c0_45, %c0_46] : memref<16x32xf32, #tpu.memory_space<vmem>>, vector<16x32xf32>
      tpu.vector_store %arg13[%c0_45, %c0_46], %78 {strides = array<i32>} : memref<16x32xf32, #tpu.memory_space<vmem>>, vector<16x32xf32>,
    } else {
    }
    %c2_i32 = arith.constant 2 : i32
    %9 = arith.cmpi eq, %arg0, %c2_i32 : i32
    %10 = arith.extui %9 : i1 to i32
    %c0_i32_4 = arith.constant 0 : i32
    %11 = arith.cmpi ne, %10, %c0_i32_4 : i32
    scf.if %11 {
      %c0 = arith.constant 0 : index
      %c0_5 = arith.constant 0 : index
      %12 = vector.load %arg13[%c0, %c0_5] : memref<16x32xf32, #tpu.memory_space<vmem>>, vector<16x32xf32>
      %c0_6 = arith.constant 0 : index
      %c0_7 = arith.constant 0 : index
      %13 = vector.load %arg8[%c0_6, %c0_7] : memref<16x32xf32, #tpu.memory_space<vmem>>, vector<16x32xf32>
      %14 = arith.addf %12, %13 : vector<16x32xf32>
      %cst = arith.constant 0.999994993 : f32
      %15 = vector.broadcast %cst : f32 to vector<16x32xf32>
      %16 = arith.mulf %14, %15 : vector<16x32xf32>
      %cst_8 = arith.constant 0.000000e+00 : f32
      %17 = vector.broadcast %cst_8 : f32 to vector<16x32xf32>
      %18 = arith.maximumf %16, %17 : vector<16x32xf32>
      %c0_9 = arith.constant 0 : index
      %c0_10 = arith.constant 0 : index
      %19 = vector.load %arg11[%c0_9, %c0_10] : memref<16x32xf32, #tpu.memory_space<vmem>>, vector<16x32xf32>
      tpu.vector_store %arg11[%c0_9, %c0_10], %18 {strides = array<i32>} : memref<16x32xf32, #tpu.memory_space<vmem>>, vector<16x32xf32>,
      %cst_11 = arith.constant dense<0.000000e+00> : vector<32xf32>
      %20 = vector.multi_reduction <add>, %18, %cst_11 [0] : vector<16x32xf32> to vector<32xf32>
      %21 = vector.shape_cast %20 : vector<32xf32> to vector<1x32xf32>
      %c0_12 = arith.constant 0 : index
      %c0_13 = arith.constant 0 : index
      %22 = vector.load %arg12[%c0_12, %c0_13] : memref<1x32xf32, #tpu.memory_space<vmem>>, vector<1x32xf32>
      tpu.vector_store %arg12[%c0_12, %c0_13], %21 {strides = array<i32>} : memref<1x32xf32, #tpu.memory_space<vmem>>, vector<1x32xf32>,
    } else {
    }
    return
  }
  func.func @transform_0(%arg0: i32) -> (i32, i32, i32) {
    %c0_i32 = arith.constant 0 : i32
    %c0_i32_0 = arith.constant 0 : i32
    %c0_i32_1 = arith.constant 0 : i32
    return %arg0, %c0_i32, %c0_i32_0 : i32, i32, i32
  }
  func.func @transform_1(%arg0: i32) -> (i32, i32, i32) {
    %c1_i32 = arith.constant 1 : i32
    %0 = arith.subi %arg0, %c1_i32 : i32
    %c0_i32 = arith.constant 0 : i32
    %1 = arith.maxsi %0, %c0_i32 : i32
    %c0_i32_0 = arith.constant 0 : i32
    %c0_i32_1 = arith.constant 0 : i32
    %c0_i32_2 = arith.constant 0 : i32
    return %1, %c0_i32_0, %c0_i32_1 : i32, i32, i32
  }
  func.func @transform_2(%arg0: i32) -> (i32, i32, i32) {
    %c0_i32 = arith.constant 0 : i32
    %c0_i32_0 = arith.constant 0 : i32
    %c0_i32_1 = arith.constant 0 : i32
    return %arg0, %c0_i32, %c0_i32_0 : i32, i32, i32
  }
  func.func @transform_3(%arg0: i32) -> (i32, i32, i32) {
    %c0_i32 = arith.constant 0 : i32
    %c0_i32_0 = arith.constant 0 : i32
    %c0_i32_1 = arith.constant 0 : i32
    return %arg0, %c0_i32, %c0_i32_0 : i32, i32, i32
  }
  func.func @transform_4(%arg0: i32) -> (i32, i32, i32) {
    %c1_i32 = arith.constant 1 : i32
    %0 = arith.subi %arg0, %c1_i32 : i32
    %c0_i32 = arith.constant 0 : i32
    %1 = arith.maxsi %0, %c0_i32 : i32
    %c0_i32_0 = arith.constant 0 : i32
    %c0_i32_1 = arith.constant 0 : i32
    %c0_i32_2 = arith.constant 0 : i32
    return %1, %c0_i32_0, %c0_i32_1 : i32, i32, i32
  }
  func.func @transform_5(%arg0: i32) -> (i32, i32, i32) {
    %c1_i32 = arith.constant 1 : i32
    %0 = arith.subi %arg0, %c1_i32 : i32
    %c0_i32 = arith.constant 0 : i32
    %1 = arith.maxsi %0, %c0_i32 : i32
    %c0_i32_0 = arith.constant 0 : i32
    %c0_i32_1 = arith.constant 0 : i32
    %c0_i32_2 = arith.constant 0 : i32
    return %1, %c0_i32_0, %c0_i32_1 : i32, i32, i32
  }
  func.func @transform_6(%arg0: i32) -> (i32, i32, i32) {
    %c0_i32 = arith.constant 0 : i32
    %c0_i32_0 = arith.constant 0 : i32
    %c0_i32_1 = arith.constant 0 : i32
    return %arg0, %c0_i32, %c0_i32_0 : i32, i32, i32
  }
  func.func @transform_7(%arg0: i32) -> (i32, i32) {
    %c0_i32 = arith.constant 0 : i32
    %c0_i32_0 = arith.constant 0 : i32
    %c0_i32_1 = arith.constant 0 : i32
    return %c0_i32, %c0_i32_0 : i32, i32
  }
  func.func @transform_8(%arg0: i32) -> (i32, i32, i32) {
    %c0_i32 = arith.constant 0 : i32
    %c0_i32_0 = arith.constant 0 : i32
    %c0_i32_1 = arith.constant 0 : i32
    return %arg0, %c0_i32, %c0_i32_0 : i32, i32, i32
  }
  func.func @transform_9(%arg0: i32) -> (i32, i32, i32) {
    %c1_i32 = arith.constant 1 : i32
    %0 = arith.subi %arg0, %c1_i32 : i32
    %c0_i32 = arith.constant 0 : i32
    %1 = arith.maxsi %0, %c0_i32 : i32
    %c0_i32_0 = arith.constant 0 : i32
    %c0_i32_1 = arith.constant 0 : i32
    %c0_i32_2 = arith.constant 0 : i32
    return %1, %c0_i32_0, %c0_i32_1 : i32, i32, i32
  }
  func.func @transform_10(%arg0: i32) -> (i32, i32) {
    %c0_i32 = arith.constant 0 : i32
    %c0_i32_0 = arith.constant 0 : i32
    %c0_i32_1 = arith.constant 0 : i32
    return %c0_i32, %c0_i32_0 : i32, i32
  }
  func.func @transform_11(%arg0: i32) -> (i32, i32) {
    %c0_i32 = arith.constant 0 : i32
    %c0_i32_0 = arith.constant 0 : i32
    %c0_i32_1 = arith.constant 0 : i32
    return %c0_i32, %c0_i32_0 : i32, i32
  }
}

module attributes {stable_mosaic.version = 11 : i64} {
  func.func @_relsum_kernel(%arg0: i32, %arg1: memref<1x16x16xbf16, #tpu.memory_space<vmem>>, %arg2: memref<1x16x16xbf16, #tpu.memory_space<vmem>>, %arg3: memref<1x16x32xbf16, #tpu.memory_space<vmem>>, %arg4: memref<1x1x32xf32, #tpu.memory_space<vmem>>, %arg5: memref<16x32xf32, #tpu.memory_space<vmem>>, %arg6: memref<16x32xf32, #tpu.memory_space<vmem>>) attributes {dimension_semantics = [#tpu.dimension_semantics<arbitrary>], iteration_bounds = array<i64: 3>, scalar_prefetch = 0 : i64, scratch_operands = 1 : i64, tpu.core_type = #tpu.core_type<tc>, window_params = [{transform_indices = @transform_0, window_bounds = array<i64: 1, 16, 16>}, {transform_indices = @transform_1, window_bounds = array<i64: 1, 16, 16>}, {transform_indices = @transform_2, window_bounds = array<i64: 1, 16, 32>}, {transform_indices = @transform_3, window_bounds = array<i64: 1, 1, 32>}, {pipeline_mode = #tpu.pipeline_mode<synchronous>, transform_indices = @transform_4, window_bounds = array<i64: 16, 32>}]} {
    %c0_i32 = arith.constant 0 : i32
    %0 = arith.cmpi eq, %arg0, %c0_i32 : i32
    %1 = arith.extui %0 : i1 to i32
    %c0_i32_0 = arith.constant 0 : i32
    %2 = arith.cmpi ne, %1, %c0_i32_0 : i32
    scf.if %2 {
      %cst = arith.constant 0.000000e+00 : f32
      %12 = vector.broadcast %cst : f32 to vector<16x32xf32>
      %c0 = arith.constant 0 : index
      %c0_5 = arith.constant 0 : index
      %13 = vector.load %arg6[%c0, %c0_5] : memref<16x32xf32, #tpu.memory_space<vmem>>, vector<16x32xf32>
      tpu.vector_store %arg6[%c0, %c0_5], %12 {strides = array<i32>} : memref<16x32xf32, #tpu.memory_space<vmem>>, vector<16x32xf32>,
    } else {
    }
    %c1_i32 = arith.constant 1 : i32
    %3 = arith.cmpi slt, %arg0, %c1_i32 : i32
    %4 = arith.extui %3 : i1 to i32
    %c0_i32_1 = arith.constant 0 : i32
    %5 = arith.cmpi ne, %4, %c0_i32_1 : i32
    scf.if %5 {
      %c0 = arith.constant 0 : index
      %c0_5 = arith.constant 0 : index
      %c0_6 = arith.constant 0 : index
      %12 = vector.load %arg1[%c0, %c0_5, %c0_6] : memref<1x16x16xbf16, #tpu.memory_space<vmem>>, vector<1x16x16xbf16>
      %13 = vector.shape_cast %12 : vector<1x16x16xbf16> to vector<16x16xbf16>
      %c0_7 = arith.constant 0 : index
      %c0_8 = arith.constant 0 : index
      %c0_9 = arith.constant 0 : index
      %14 = vector.load %arg3[%c0_7, %c0_8, %c0_9] : memref<1x16x32xbf16, #tpu.memory_space<vmem>>, vector<1x16x32xbf16>
      %15 = vector.shape_cast %14 : vector<1x16x32xbf16> to vector<16x32xbf16>
      %cst = arith.constant dense<0.000000e+00> : vector<16x32xf32>
      %16 = tpu.matmul %13, %15, %cst {dimension_numbers = #tpu.dot_dimension_numbers<[1], [0], [0], [1], [0, 0, 1, 1], [], []>} : vector<16x16xbf16>, vector<16x32xbf16>, vector<16x32xf32> -> vector<16x32xf32>
      %c0_10 = arith.constant 0 : index
      %c0_11 = arith.constant 0 : index
      %17 = vector.load %arg6[%c0_10, %c0_11] : memref<16x32xf32, #tpu.memory_space<vmem>>, vector<16x32xf32>
      %c0_12 = arith.constant 0 : index
      %c0_13 = arith.constant 0 : index
      %c0_14 = arith.constant 0 : index
      %18 = vector.load %arg4[%c0_12, %c0_13, %c0_14] : memref<1x1x32xf32, #tpu.memory_space<vmem>>, vector<1x1x32xf32>
      %19 = vector.shape_cast %18 : vector<1x1x32xf32> to vector<1x32xf32>
      %20 = vector.broadcast %19 : vector<1x32xf32> to vector<16x32xf32>
      %21 = arith.addf %16, %20 : vector<16x32xf32>
      %cst_15 = arith.constant 0.999994993 : f32
      %22 = vector.broadcast %cst_15 : f32 to vector<16x32xf32>
      %23 = arith.mulf %21, %22 : vector<16x32xf32>
      %cst_16 = arith.constant 0.000000e+00 : f32
      %24 = vector.broadcast %cst_16 : f32 to vector<16x32xf32>
      %25 = arith.maximumf %23, %24 : vector<16x32xf32>
      %26 = arith.addf %17, %25 : vector<16x32xf32>
      %c0_17 = arith.constant 0 : index
      %c0_18 = arith.constant 0 : index
      %27 = vector.load %arg6[%c0_17, %c0_18] : memref<16x32xf32, #tpu.memory_space<vmem>>, vector<16x32xf32>
      tpu.vector_store %arg6[%c0_17, %c0_18], %26 {strides = array<i32>} : memref<16x32xf32, #tpu.memory_space<vmem>>, vector<16x32xf32>,
    } else {
    }
    %c1_i32_2 = arith.constant 1 : i32
    %6 = arith.cmpi sge, %arg0, %c1_i32_2 : i32
    %7 = arith.extui %6 : i1 to i32
    %c0_i32_3 = arith.constant 0 : i32
    %8 = arith.cmpi ne, %7, %c0_i32_3 : i32
    scf.if %8 {
      %c0 = arith.constant 0 : index
      %c0_5 = arith.constant 0 : index
      %c0_6 = arith.constant 0 : index
      %12 = vector.load %arg2[%c0, %c0_5, %c0_6] : memref<1x16x16xbf16, #tpu.memory_space<vmem>>, vector<1x16x16xbf16>
      %13 = vector.shape_cast %12 : vector<1x16x16xbf16> to vector<16x16xbf16>
      %c0_7 = arith.constant 0 : index
      %c0_8 = arith.constant 0 : index
      %c0_9 = arith.constant 0 : index
      %14 = vector.load %arg3[%c0_7, %c0_8, %c0_9] : memref<1x16x32xbf16, #tpu.memory_space<vmem>>, vector<1x16x32xbf16>
      %15 = vector.shape_cast %14 : vector<1x16x32xbf16> to vector<16x32xbf16>
      %cst = arith.constant dense<0.000000e+00> : vector<16x32xf32>
      %16 = tpu.matmul %13, %15, %cst {dimension_numbers = #tpu.dot_dimension_numbers<[1], [0], [0], [1], [0, 0, 1, 1], [], []>} : vector<16x16xbf16>, vector<16x32xbf16>, vector<16x32xf32> -> vector<16x32xf32>
      %c0_10 = arith.constant 0 : index
      %c0_11 = arith.constant 0 : index
      %17 = vector.load %arg6[%c0_10, %c0_11] : memref<16x32xf32, #tpu.memory_space<vmem>>, vector<16x32xf32>
      %c0_12 = arith.constant 0 : index
      %c0_13 = arith.constant 0 : index
      %c0_14 = arith.constant 0 : index
      %18 = vector.load %arg4[%c0_12, %c0_13, %c0_14] : memref<1x1x32xf32, #tpu.memory_space<vmem>>, vector<1x1x32xf32>
      %19 = vector.shape_cast %18 : vector<1x1x32xf32> to vector<1x32xf32>
      %20 = vector.broadcast %19 : vector<1x32xf32> to vector<16x32xf32>
      %21 = arith.addf %16, %20 : vector<16x32xf32>
      %cst_15 = arith.constant 0.999994993 : f32
      %22 = vector.broadcast %cst_15 : f32 to vector<16x32xf32>
      %23 = arith.mulf %21, %22 : vector<16x32xf32>
      %cst_16 = arith.constant 0.000000e+00 : f32
      %24 = vector.broadcast %cst_16 : f32 to vector<16x32xf32>
      %25 = arith.maximumf %23, %24 : vector<16x32xf32>
      %26 = arith.addf %17, %25 : vector<16x32xf32>
      %c0_17 = arith.constant 0 : index
      %c0_18 = arith.constant 0 : index
      %27 = vector.load %arg6[%c0_17, %c0_18] : memref<16x32xf32, #tpu.memory_space<vmem>>, vector<16x32xf32>
      tpu.vector_store %arg6[%c0_17, %c0_18], %26 {strides = array<i32>} : memref<16x32xf32, #tpu.memory_space<vmem>>, vector<16x32xf32>,
    } else {
    }
    %c2_i32 = arith.constant 2 : i32
    %9 = arith.cmpi eq, %arg0, %c2_i32 : i32
    %10 = arith.extui %9 : i1 to i32
    %c0_i32_4 = arith.constant 0 : i32
    %11 = arith.cmpi ne, %10, %c0_i32_4 : i32
    scf.if %11 {
      %c0 = arith.constant 0 : index
      %c0_5 = arith.constant 0 : index
      %12 = vector.load %arg6[%c0, %c0_5] : memref<16x32xf32, #tpu.memory_space<vmem>>, vector<16x32xf32>
      %c0_6 = arith.constant 0 : index
      %c0_7 = arith.constant 0 : index
      %13 = vector.load %arg5[%c0_6, %c0_7] : memref<16x32xf32, #tpu.memory_space<vmem>>, vector<16x32xf32>
      tpu.vector_store %arg5[%c0_6, %c0_7], %12 {strides = array<i32>} : memref<16x32xf32, #tpu.memory_space<vmem>>, vector<16x32xf32>,
    } else {
    }
    return
  }
  func.func @transform_0(%arg0: i32) -> (i32, i32, i32) {
    %c0_i32 = arith.constant 0 : i32
    %c0_i32_0 = arith.constant 0 : i32
    %c0_i32_1 = arith.constant 0 : i32
    return %arg0, %c0_i32, %c0_i32_0 : i32, i32, i32
  }
  func.func @transform_1(%arg0: i32) -> (i32, i32, i32) {
    %c1_i32 = arith.constant 1 : i32
    %0 = arith.subi %arg0, %c1_i32 : i32
    %c0_i32 = arith.constant 0 : i32
    %1 = arith.maxsi %0, %c0_i32 : i32
    %c0_i32_0 = arith.constant 0 : i32
    %c0_i32_1 = arith.constant 0 : i32
    %c0_i32_2 = arith.constant 0 : i32
    return %1, %c0_i32_0, %c0_i32_1 : i32, i32, i32
  }
  func.func @transform_2(%arg0: i32) -> (i32, i32, i32) {
    %c0_i32 = arith.constant 0 : i32
    %c0_i32_0 = arith.constant 0 : i32
    %c0_i32_1 = arith.constant 0 : i32
    return %arg0, %c0_i32, %c0_i32_0 : i32, i32, i32
  }
  func.func @transform_3(%arg0: i32) -> (i32, i32, i32) {
    %c0_i32 = arith.constant 0 : i32
    %c0_i32_0 = arith.constant 0 : i32
    %c0_i32_1 = arith.constant 0 : i32
    return %arg0, %c0_i32, %c0_i32_0 : i32, i32, i32
  }
  func.func @transform_4(%arg0: i32) -> (i32, i32) {
    %c0_i32 = arith.constant 0 : i32
    %c0_i32_0 = arith.constant 0 : i32
    %c0_i32_1 = arith.constant 0 : i32
    return %c0_i32, %c0_i32_0 : i32, i32
  }
}

module attributes {stable_mosaic.version = 11 : i64} {
  func.func @_fused_layer_kernel(%arg0: i32, %arg1: memref<1x16x16xbf16, #tpu.memory_space<vmem>>, %arg2: memref<1x16x16xbf16, #tpu.memory_space<vmem>>, %arg3: memref<1x16x32xbf16, #tpu.memory_space<vmem>>, %arg4: memref<1x1x32xf32, #tpu.memory_space<vmem>>, %arg5: memref<1x32x16xbf16, #tpu.memory_space<vmem>>, %arg6: memref<1x32x16xbf16, #tpu.memory_space<vmem>>, %arg7: memref<1x16x32xbf16, #tpu.memory_space<vmem>>, %arg8: memref<16x32xf32, #tpu.memory_space<vmem>>, %arg9: memref<1x16x32xbf16, #tpu.memory_space<vmem>>, %arg10: memref<1x16x16xbf16, #tpu.memory_space<vmem>>, %arg11: memref<16x32xf32, #tpu.memory_space<vmem>>, %arg12: memref<1x32xf32, #tpu.memory_space<vmem>>, %arg13: memref<16x32xf32, #tpu.memory_space<vmem>>) attributes {dimension_semantics = [#tpu.dimension_semantics<arbitrary>], iteration_bounds = array<i64: 3>, scalar_prefetch = 0 : i64, scratch_operands = 1 : i64, tpu.core_type = #tpu.core_type<tc>, window_params = [{transform_indices = @transform_0, window_bounds = array<i64: 1, 16, 16>}, {transform_indices = @transform_1, window_bounds = array<i64: 1, 16, 16>}, {transform_indices = @transform_2, window_bounds = array<i64: 1, 16, 32>}, {transform_indices = @transform_3, window_bounds = array<i64: 1, 1, 32>}, {transform_indices = @transform_4, window_bounds = array<i64: 1, 32, 16>}, {transform_indices = @transform_5, window_bounds = array<i64: 1, 32, 16>}, {transform_indices = @transform_6, window_bounds = array<i64: 1, 16, 32>}, {pipeline_mode = #tpu.pipeline_mode<synchronous>, transform_indices = @transform_7, window_bounds = array<i64: 16, 32>}, {transform_indices = @transform_8, window_bounds = array<i64: 1, 16, 32>}, {transform_indices = @transform_9, window_bounds = array<i64: 1, 16, 16>}, {pipeline_mode = #tpu.pipeline_mode<synchronous>, transform_indices = @transform_10, window_bounds = array<i64: 16, 32>}, {pipeline_mode = #tpu.pipeline_mode<synchronous>, transform_indices = @transform_11, window_bounds = array<i64: 1, 32>}]} {
    %c0_i32 = arith.constant 0 : i32
    %0 = arith.cmpi eq, %arg0, %c0_i32 : i32
    %1 = arith.extui %0 : i1 to i32
    %c0_i32_0 = arith.constant 0 : i32
    %2 = arith.cmpi ne, %1, %c0_i32_0 : i32
    scf.if %2 {
      %cst = arith.constant 0.000000e+00 : f32
      %12 = vector.broadcast %cst : f32 to vector<16x32xf32>
      %c0 = arith.constant 0 : index
      %c0_5 = arith.constant 0 : index
      %13 = vector.load %arg13[%c0, %c0_5] : memref<16x32xf32, #tpu.memory_space<vmem>>, vector<16x32xf32>
      tpu.vector_store %arg13[%c0, %c0_5], %12 {strides = array<i32>} : memref<16x32xf32, #tpu.memory_space<vmem>>, vector<16x32xf32>,
    } else {
    }
    %c1_i32 = arith.constant 1 : i32
    %3 = arith.cmpi slt, %arg0, %c1_i32 : i32
    %4 = arith.extui %3 : i1 to i32
    %c0_i32_1 = arith.constant 0 : i32
    %5 = arith.cmpi ne, %4, %c0_i32_1 : i32
    scf.if %5 {
      %c0 = arith.constant 0 : index
      %c0_5 = arith.constant 0 : index
      %c0_6 = arith.constant 0 : index
      %12 = vector.load %arg1[%c0, %c0_5, %c0_6] : memref<1x16x16xbf16, #tpu.memory_space<vmem>>, vector<1x16x16xbf16>
      %13 = vector.shape_cast %12 : vector<1x16x16xbf16> to vector<16x16xbf16>
      %c0_7 = arith.constant 0 : index
      %c0_8 = arith.constant 0 : index
      %c0_9 = arith.constant 0 : index
      %14 = vector.load %arg3[%c0_7, %c0_8, %c0_9] : memref<1x16x32xbf16, #tpu.memory_space<vmem>>, vector<1x16x32xbf16>
      %15 = vector.shape_cast %14 : vector<1x16x32xbf16> to vector<16x32xbf16>
      %cst = arith.constant dense<0.000000e+00> : vector<16x32xf32>
      %16 = tpu.matmul %13, %15, %cst {dimension_numbers = #tpu.dot_dimension_numbers<[1], [0], [0], [1], [0, 0, 1, 1], [], []>} : vector<16x16xbf16>, vector<16x32xbf16>, vector<16x32xf32> -> vector<16x32xf32>
      %c0_10 = arith.constant 0 : index
      %c0_11 = arith.constant 0 : index
      %c0_12 = arith.constant 0 : index
      %17 = vector.load %arg4[%c0_10, %c0_11, %c0_12] : memref<1x1x32xf32, #tpu.memory_space<vmem>>, vector<1x1x32xf32>
      %18 = vector.shape_cast %17 : vector<1x1x32xf32> to vector<1x32xf32>
      %19 = vector.broadcast %18 : vector<1x32xf32> to vector<16x32xf32>
      %20 = arith.addf %16, %19 : vector<16x32xf32>
      %cst_13 = arith.constant 0.999994993 : f32
      %21 = vector.broadcast %cst_13 : f32 to vector<16x32xf32>
      %22 = arith.mulf %20, %21 : vector<16x32xf32>
      %cst_14 = arith.constant 0.000000e+00 : f32
      %23 = vector.broadcast %cst_14 : f32 to vector<16x32xf32>
      %24 = arith.maximumf %22, %23 : vector<16x32xf32>
      %25 = arith.truncf %24 : vector<16x32xf32> to vector<16x32xbf16>
      %c0_15 = arith.constant 0 : index
      %c0_16 = arith.constant 0 : index
      %c0_17 = arith.constant 0 : index
      %26 = vector.load %arg9[%c0_15, %c0_16, %c0_17] : memref<1x16x32xbf16, #tpu.memory_space<vmem>>, vector<1x16x32xbf16>
      %27 = vector.shape_cast %26 : vector<1x16x32xbf16> to vector<16x32xbf16>
      %28 = vector.shape_cast %25 : vector<16x32xbf16> to vector<1x16x32xbf16>
      tpu.vector_store %arg9[%c0_15, %c0_16, %c0_17], %28 {strides = array<i32>} : memref<1x16x32xbf16, #tpu.memory_space<vmem>>, vector<1x16x32xbf16>,
      %c0_18 = arith.constant 0 : index
      %c0_19 = arith.constant 0 : index
      %29 = vector.load %arg13[%c0_18, %c0_19] : memref<16x32xf32, #tpu.memory_space<vmem>>, vector<16x32xf32>
      %c0_20 = arith.constant 0 : index
      %c0_21 = arith.constant 0 : index
      %c0_22 = arith.constant 0 : index
      %30 = vector.load %arg7[%c0_20, %c0_21, %c0_22] : memref<1x16x32xbf16, #tpu.memory_space<vmem>>, vector<1x16x32xbf16>
      %31 = vector.shape_cast %30 : vector<1x16x32xbf16> to vector<16x32xbf16>
      %cst_23 = arith.constant dense<0.000000e+00> : vector<16x32xf32>
      %32 = tpu.matmul %13, %31, %cst_23 {dimension_numbers = #tpu.dot_dimension_numbers<[1], [0], [0], [1], [0, 0, 1, 1], [], []>} : vector<16x16xbf16>, vector<16x32xbf16>, vector<16x32xf32> -> vector<16x32xf32>
      %33 = arith.addf %29, %32 : vector<16x32xf32>
      %c0_24 = arith.constant 0 : index
      %c0_25 = arith.constant 0 : index
      %34 = vector.load %arg13[%c0_24, %c0_25] : memref<16x32xf32, #tpu.memory_space<vmem>>, vector<16x32xf32>
      tpu.vector_store %arg13[%c0_24, %c0_25], %33 {strides = array<i32>} : memref<16x32xf32, #tpu.memory_space<vmem>>, vector<16x32xf32>,
    } else {
    }
    %c1_i32_2 = arith.constant 1 : i32
    %6 = arith.cmpi sge, %arg0, %c1_i32_2 : i32
    %7 = arith.extui %6 : i1 to i32
    %c0_i32_3 = arith.constant 0 : i32
    %8 = arith.cmpi ne, %7, %c0_i32_3 : i32
    scf.if %8 {
      %c0 = arith.constant 0 : index
      %c0_5 = arith.constant 0 : index
      %c0_6 = arith.constant 0 : index
      %12 = vector.load %arg2[%c0, %c0_5, %c0_6] : memref<1x16x16xbf16, #tpu.memory_space<vmem>>, vector<1x16x16xbf16>
      %13 = vector.shape_cast %12 : vector<1x16x16xbf16> to vector<16x16xbf16>
      %c0_7 = arith.constant 0 : index
      %c0_8 = arith.constant 0 : index
      %c0_9 = arith.constant 0 : index
      %14 = vector.load %arg3[%c0_7, %c0_8, %c0_9] : memref<1x16x32xbf16, #tpu.memory_space<vmem>>, vector<1x16x32xbf16>
      %15 = vector.shape_cast %14 : vector<1x16x32xbf16> to vector<16x32xbf16>
      %cst = arith.constant dense<0.000000e+00> : vector<16x32xf32>
      %16 = tpu.matmul %13, %15, %cst {dimension_numbers = #tpu.dot_dimension_numbers<[1], [0], [0], [1], [0, 0, 1, 1], [], []>} : vector<16x16xbf16>, vector<16x32xbf16>, vector<16x32xf32> -> vector<16x32xf32>
      %c0_10 = arith.constant 0 : index
      %c0_11 = arith.constant 0 : index
      %c0_12 = arith.constant 0 : index
      %17 = vector.load %arg4[%c0_10, %c0_11, %c0_12] : memref<1x1x32xf32, #tpu.memory_space<vmem>>, vector<1x1x32xf32>
      %18 = vector.shape_cast %17 : vector<1x1x32xf32> to vector<1x32xf32>
      %19 = vector.broadcast %18 : vector<1x32xf32> to vector<16x32xf32>
      %20 = arith.addf %16, %19 : vector<16x32xf32>
      %cst_13 = arith.constant 0.999994993 : f32
      %21 = vector.broadcast %cst_13 : f32 to vector<16x32xf32>
      %22 = arith.mulf %20, %21 : vector<16x32xf32>
      %cst_14 = arith.constant 0.000000e+00 : f32
      %23 = vector.broadcast %cst_14 : f32 to vector<16x32xf32>
      %24 = arith.maximumf %22, %23 : vector<16x32xf32>
      %25 = arith.truncf %24 : vector<16x32xf32> to vector<16x32xbf16>
      %c0_15 = arith.constant 0 : index
      %c0_16 = arith.constant 0 : index
      %c0_17 = arith.constant 0 : index
      %26 = vector.load %arg9[%c0_15, %c0_16, %c0_17] : memref<1x16x32xbf16, #tpu.memory_space<vmem>>, vector<1x16x32xbf16>
      %27 = vector.shape_cast %26 : vector<1x16x32xbf16> to vector<16x32xbf16>
      %28 = vector.shape_cast %25 : vector<16x32xbf16> to vector<1x16x32xbf16>
      tpu.vector_store %arg9[%c0_15, %c0_16, %c0_17], %28 {strides = array<i32>} : memref<1x16x32xbf16, #tpu.memory_space<vmem>>, vector<1x16x32xbf16>,
      %29 = arith.truncf %24 : vector<16x32xf32> to vector<16x32xbf16>
      %c0_18 = arith.constant 0 : index
      %c0_19 = arith.constant 0 : index
      %c0_20 = arith.constant 0 : index
      %30 = vector.load %arg5[%c0_18, %c0_19, %c0_20] : memref<1x32x16xbf16, #tpu.memory_space<vmem>>, vector<1x32x16xbf16>
      %31 = vector.shape_cast %30 : vector<1x32x16xbf16> to vector<32x16xbf16>
      %cst_21 = arith.constant dense<0.000000e+00> : vector<16x16xf32>
      %32 = tpu.matmul %29, %31, %cst_21 {dimension_numbers = #tpu.dot_dimension_numbers<[1], [0], [0], [1], [0, 0, 1, 1], [], []>} : vector<16x32xbf16>, vector<32x16xbf16>, vector<16x16xf32> -> vector<16x16xf32>
      %c0_22 = arith.constant 0 : index
      %c0_23 = arith.constant 0 : index
      %c0_24 = arith.constant 0 : index
      %33 = vector.load %arg6[%c0_22, %c0_23, %c0_24] : memref<1x32x16xbf16, #tpu.memory_space<vmem>>, vector<1x32x16xbf16>
      %34 = vector.shape_cast %33 : vector<1x32x16xbf16> to vector<32x16xbf16>
      %cst_25 = arith.constant dense<0.000000e+00> : vector<16x16xf32>
      %35 = tpu.matmul %29, %34, %cst_25 {dimension_numbers = #tpu.dot_dimension_numbers<[1], [0], [0], [1], [0, 0, 1, 1], [], []>} : vector<16x32xbf16>, vector<32x16xbf16>, vector<16x16xf32> -> vector<16x16xf32>
      %36 = arith.truncf %35 : vector<16x16xf32> to vector<16x16xbf16>
      %37 = arith.truncf %32 : vector<16x16xf32> to vector<16x16xbf16>
      %cst_26 = arith.constant dense<0.000000e+00> : vector<16x16xf32>
      %38 = tpu.matmul %36, %37, %cst_26 {dimension_numbers = #tpu.dot_dimension_numbers<[1], [1], [0], [0], [0, 0, 1, 0], [], []>} : vector<16x16xbf16>, vector<16x16xbf16>, vector<16x16xf32> -> vector<16x16xf32>
      %39 = tpu.iota {dimensions = array<i32: 0>} : vector<16x16xi32>
      %40 = tpu.iota {dimensions = array<i32: 1>} : vector<16x16xi32>
      %41 = arith.subi %39, %40 : vector<16x16xi32>
      %42 = math.absi %41 : vector<16x16xi32>
      %c4_i32 = arith.constant 4 : i32
      %43 = vector.broadcast %c4_i32 : i32 to vector<16x16xi32>
      %44 = arith.cmpi sle, %42, %43 : vector<16x16xi32>
      %cst_27 = arith.constant -1.000000e+30 : f32
      %45 = vector.broadcast %cst_27 : f32 to vector<16x16xf32>
      %46 = arith.select %44, %38, %45 : vector<16x16xi1>, vector<16x16xf32>
      %cst_28 = arith.constant dense<0xFF800000> : vector<16xf32>
      %47 = vector.multi_reduction <maximumf>, %46, %cst_28 [0] : vector<16x16xf32> to vector<16xf32>
      %48 = vector.shape_cast %47 : vector<16xf32> to vector<1x16xf32>
      %49 = vector.broadcast %48 : vector<1x16xf32> to vector<16x16xf32>
      %50 = arith.cmpf oge, %46, %49 : vector<16x16xf32>
      %cst_29 = arith.constant -1.000000e+30 : f32
      %51 = vector.broadcast %cst_29 : f32 to vector<16x16xf32>
      %52 = arith.select %50, %51, %46 : vector<16x16xi1>, vector<16x16xf32>
      %cst_30 = arith.constant dense<0xFF800000> : vector<16xf32>
      %53 = vector.multi_reduction <maximumf>, %52, %cst_30 [0] : vector<16x16xf32> to vector<16xf32>
      %54 = vector.shape_cast %53 : vector<16xf32> to vector<1x16xf32>
      %55 = vector.broadcast %54 : vector<1x16xf32> to vector<16x16xf32>
      %56 = arith.cmpf oge, %52, %55 : vector<16x16xf32>
      %cst_31 = arith.constant -1.000000e+30 : f32
      %57 = vector.broadcast %cst_31 : f32 to vector<16x16xf32>
      %58 = arith.select %56, %57, %52 : vector<16x16xi1>, vector<16x16xf32>
      %cst_32 = arith.constant dense<0xFF800000> : vector<16xf32>
      %59 = vector.multi_reduction <maximumf>, %58, %cst_32 [0] : vector<16x16xf32> to vector<16xf32>
      %60 = vector.shape_cast %59 : vector<16xf32> to vector<1x16xf32>
      %61 = vector.broadcast %60 : vector<1x16xf32> to vector<16x16xf32>
      %62 = arith.cmpf oge, %46, %61 : vector<16x16xf32>
      %63 = arith.andi %62, %44 : vector<16x16xi1>
      %c0_33 = arith.constant 0 : index
      %c0_34 = arith.constant 0 : index
      %c0_35 = arith.constant 0 : index
      %64 = vector.load %arg1[%c0_33, %c0_34, %c0_35] : memref<1x16x16xbf16, #tpu.memory_space<vmem>>, vector<1x16x16xbf16>
      %65 = vector.shape_cast %64 : vector<1x16x16xbf16> to vector<16x16xbf16>
      %66 = arith.extf %65 : vector<16x16xbf16> to vector<16x16xf32>
      %67 = arith.extui %63 : vector<16x16xi1> to vector<16x16xi32>
      %68 = arith.sitofp %67 : vector<16x16xi32> to vector<16x16xf32>
      %69 = arith.maximumf %66, %68 : vector<16x16xf32>
      %70 = arith.truncf %69 : vector<16x16xf32> to vector<16x16xbf16>
      %c0_36 = arith.constant 0 : index
      %c0_37 = arith.constant 0 : index
      %c0_38 = arith.constant 0 : index
      %71 = vector.load %arg10[%c0_36, %c0_37, %c0_38] : memref<1x16x16xbf16, #tpu.memory_space<vmem>>, vector<1x16x16xbf16>
      %72 = vector.shape_cast %71 : vector<1x16x16xbf16> to vector<16x16xbf16>
      %73 = vector.shape_cast %70 : vector<16x16xbf16> to vector<1x16x16xbf16>
      tpu.vector_store %arg10[%c0_36, %c0_37, %c0_38], %73 {strides = array<i32>} : memref<1x16x16xbf16, #tpu.memory_space<vmem>>, vector<1x16x16xbf16>,
      %c0_39 = arith.constant 0 : index
      %c0_40 = arith.constant 0 : index
      %74 = vector.load %arg13[%c0_39, %c0_40] : memref<16x32xf32, #tpu.memory_space<vmem>>, vector<16x32xf32>
      %c0_41 = arith.constant 0 : index
      %c0_42 = arith.constant 0 : index
      %c0_43 = arith.constant 0 : index
      %75 = vector.load %arg7[%c0_41, %c0_42, %c0_43] : memref<1x16x32xbf16, #tpu.memory_space<vmem>>, vector<1x16x32xbf16>
      %76 = vector.shape_cast %75 : vector<1x16x32xbf16> to vector<16x32xbf16>
      %cst_44 = arith.constant dense<0.000000e+00> : vector<16x32xf32>
      %77 = tpu.matmul %70, %76, %cst_44 {dimension_numbers = #tpu.dot_dimension_numbers<[1], [0], [0], [1], [0, 0, 1, 1], [], []>} : vector<16x16xbf16>, vector<16x32xbf16>, vector<16x32xf32> -> vector<16x32xf32>
      %78 = arith.addf %74, %77 : vector<16x32xf32>
      %c0_45 = arith.constant 0 : index
      %c0_46 = arith.constant 0 : index
      %79 = vector.load %arg13[%c0_45, %c0_46] : memref<16x32xf32, #tpu.memory_space<vmem>>, vector<16x32xf32>
      tpu.vector_store %arg13[%c0_45, %c0_46], %78 {strides = array<i32>} : memref<16x32xf32, #tpu.memory_space<vmem>>, vector<16x32xf32>,
    } else {
    }
    %c2_i32 = arith.constant 2 : i32
    %9 = arith.cmpi eq, %arg0, %c2_i32 : i32
    %10 = arith.extui %9 : i1 to i32
    %c0_i32_4 = arith.constant 0 : i32
    %11 = arith.cmpi ne, %10, %c0_i32_4 : i32
    scf.if %11 {
      %c0 = arith.constant 0 : index
      %c0_5 = arith.constant 0 : index
      %12 = vector.load %arg13[%c0, %c0_5] : memref<16x32xf32, #tpu.memory_space<vmem>>, vector<16x32xf32>
      %c0_6 = arith.constant 0 : index
      %c0_7 = arith.constant 0 : index
      %13 = vector.load %arg8[%c0_6, %c0_7] : memref<16x32xf32, #tpu.memory_space<vmem>>, vector<16x32xf32>
      %14 = arith.addf %12, %13 : vector<16x32xf32>
      %cst = arith.constant 0.999994993 : f32
      %15 = vector.broadcast %cst : f32 to vector<16x32xf32>
      %16 = arith.mulf %14, %15 : vector<16x32xf32>
      %cst_8 = arith.constant 0.000000e+00 : f32
      %17 = vector.broadcast %cst_8 : f32 to vector<16x32xf32>
      %18 = arith.maximumf %16, %17 : vector<16x32xf32>
      %c0_9 = arith.constant 0 : index
      %c0_10 = arith.constant 0 : index
      %19 = vector.load %arg11[%c0_9, %c0_10] : memref<16x32xf32, #tpu.memory_space<vmem>>, vector<16x32xf32>
      tpu.vector_store %arg11[%c0_9, %c0_10], %18 {strides = array<i32>} : memref<16x32xf32, #tpu.memory_space<vmem>>, vector<16x32xf32>,
      %cst_11 = arith.constant dense<0.000000e+00> : vector<32xf32>
      %20 = vector.multi_reduction <add>, %18, %cst_11 [0] : vector<16x32xf32> to vector<32xf32>
      %21 = vector.shape_cast %20 : vector<32xf32> to vector<1x32xf32>
      %c0_12 = arith.constant 0 : index
      %c0_13 = arith.constant 0 : index
      %22 = vector.load %arg12[%c0_12, %c0_13] : memref<1x32xf32, #tpu.memory_space<vmem>>, vector<1x32xf32>
      tpu.vector_store %arg12[%c0_12, %c0_13], %21 {strides = array<i32>} : memref<1x32xf32, #tpu.memory_space<vmem>>, vector<1x32xf32>,
    } else {
    }
    return
  }
  func.func @transform_0(%arg0: i32) -> (i32, i32, i32) {
    %c0_i32 = arith.constant 0 : i32
    %c0_i32_0 = arith.constant 0 : i32
    %c0_i32_1 = arith.constant 0 : i32
    return %arg0, %c0_i32, %c0_i32_0 : i32, i32, i32
  }
  func.func @transform_1(%arg0: i32) -> (i32, i32, i32) {
    %c1_i32 = arith.constant 1 : i32
    %0 = arith.subi %arg0, %c1_i32 : i32
    %c0_i32 = arith.constant 0 : i32
    %1 = arith.maxsi %0, %c0_i32 : i32
    %c0_i32_0 = arith.constant 0 : i32
    %c0_i32_1 = arith.constant 0 : i32
    %c0_i32_2 = arith.constant 0 : i32
    return %1, %c0_i32_0, %c0_i32_1 : i32, i32, i32
  }
  func.func @transform_2(%arg0: i32) -> (i32, i32, i32) {
    %c0_i32 = arith.constant 0 : i32
    %c0_i32_0 = arith.constant 0 : i32
    %c0_i32_1 = arith.constant 0 : i32
    return %arg0, %c0_i32, %c0_i32_0 : i32, i32, i32
  }
  func.func @transform_3(%arg0: i32) -> (i32, i32, i32) {
    %c0_i32 = arith.constant 0 : i32
    %c0_i32_0 = arith.constant 0 : i32
    %c0_i32_1 = arith.constant 0 : i32
    return %arg0, %c0_i32, %c0_i32_0 : i32, i32, i32
  }
  func.func @transform_4(%arg0: i32) -> (i32, i32, i32) {
    %c1_i32 = arith.constant 1 : i32
    %0 = arith.subi %arg0, %c1_i32 : i32
    %c0_i32 = arith.constant 0 : i32
    %1 = arith.maxsi %0, %c0_i32 : i32
    %c0_i32_0 = arith.constant 0 : i32
    %c0_i32_1 = arith.constant 0 : i32
    %c0_i32_2 = arith.constant 0 : i32
    return %1, %c0_i32_0, %c0_i32_1 : i32, i32, i32
  }
  func.func @transform_5(%arg0: i32) -> (i32, i32, i32) {
    %c1_i32 = arith.constant 1 : i32
    %0 = arith.subi %arg0, %c1_i32 : i32
    %c0_i32 = arith.constant 0 : i32
    %1 = arith.maxsi %0, %c0_i32 : i32
    %c0_i32_0 = arith.constant 0 : i32
    %c0_i32_1 = arith.constant 0 : i32
    %c0_i32_2 = arith.constant 0 : i32
    return %1, %c0_i32_0, %c0_i32_1 : i32, i32, i32
  }
  func.func @transform_6(%arg0: i32) -> (i32, i32, i32) {
    %c0_i32 = arith.constant 0 : i32
    %c0_i32_0 = arith.constant 0 : i32
    %c0_i32_1 = arith.constant 0 : i32
    return %arg0, %c0_i32, %c0_i32_0 : i32, i32, i32
  }
  func.func @transform_7(%arg0: i32) -> (i32, i32) {
    %c0_i32 = arith.constant 0 : i32
    %c0_i32_0 = arith.constant 0 : i32
    %c0_i32_1 = arith.constant 0 : i32
    return %c0_i32, %c0_i32_0 : i32, i32
  }
  func.func @transform_8(%arg0: i32) -> (i32, i32, i32) {
    %c0_i32 = arith.constant 0 : i32
    %c0_i32_0 = arith.constant 0 : i32
    %c0_i32_1 = arith.constant 0 : i32
    return %arg0, %c0_i32, %c0_i32_0 : i32, i32, i32
  }
  func.func @transform_9(%arg0: i32) -> (i32, i32, i32) {
    %c1_i32 = arith.constant 1 : i32
    %0 = arith.subi %arg0, %c1_i32 : i32
    %c0_i32 = arith.constant 0 : i32
    %1 = arith.maxsi %0, %c0_i32 : i32
    %c0_i32_0 = arith.constant 0 : i32
    %c0_i32_1 = arith.constant 0 : i32
    %c0_i32_2 = arith.constant 0 : i32
    return %1, %c0_i32_0, %c0_i32_1 : i32, i32, i32
  }
  func.func @transform_10(%arg0: i32) -> (i32, i32) {
    %c0_i32 = arith.constant 0 : i32
    %c0_i32_0 = arith.constant 0 : i32
    %c0_i32_1 = arith.constant 0 : i32
    return %c0_i32, %c0_i32_0 : i32, i32
  }
  func.func @transform_11(%arg0: i32) -> (i32, i32) {
    %c0_i32 = arith.constant 0 : i32
    %c0_i32_0 = arith.constant 0 : i32
    %c0_i32_1 = arith.constant 0 : i32
    return %c0_i32, %c0_i32_0 : i32, i32
  }
}

module attributes {stable_mosaic.version = 11 : i64} {
  func.func @_gearnet_kernel(%arg0: i32, %arg1: memref<1x16x16xbf16, #tpu.memory_space<vmem>>, %arg2: memref<1x16x16xbf16, #tpu.memory_space<vmem>>, %arg3: memref<1x16x32xbf16, #tpu.memory_space<vmem>>, %arg4: memref<16x32xf32, #tpu.memory_space<vmem>>, %arg5: memref<16x32xf32, #tpu.memory_space<vmem>>, %arg6: memref<1x32xf32, #tpu.memory_space<vmem>>, %arg7: memref<16x32xf32, #tpu.memory_space<vmem>>) attributes {dimension_semantics = [#tpu.dimension_semantics<arbitrary>], iteration_bounds = array<i64: 3>, scalar_prefetch = 0 : i64, scratch_operands = 1 : i64, tpu.core_type = #tpu.core_type<tc>, window_params = [{transform_indices = @transform_0, window_bounds = array<i64: 1, 16, 16>}, {transform_indices = @transform_1, window_bounds = array<i64: 1, 16, 16>}, {transform_indices = @transform_2, window_bounds = array<i64: 1, 16, 32>}, {pipeline_mode = #tpu.pipeline_mode<synchronous>, transform_indices = @transform_3, window_bounds = array<i64: 16, 32>}, {pipeline_mode = #tpu.pipeline_mode<synchronous>, transform_indices = @transform_4, window_bounds = array<i64: 16, 32>}, {pipeline_mode = #tpu.pipeline_mode<synchronous>, transform_indices = @transform_5, window_bounds = array<i64: 1, 32>}]} {
    %c0_i32 = arith.constant 0 : i32
    %0 = arith.cmpi eq, %arg0, %c0_i32 : i32
    %1 = arith.extui %0 : i1 to i32
    %c0_i32_0 = arith.constant 0 : i32
    %2 = arith.cmpi ne, %1, %c0_i32_0 : i32
    scf.if %2 {
      %cst = arith.constant 0.000000e+00 : f32
      %12 = vector.broadcast %cst : f32 to vector<16x32xf32>
      %c0 = arith.constant 0 : index
      %c0_5 = arith.constant 0 : index
      %13 = vector.load %arg7[%c0, %c0_5] : memref<16x32xf32, #tpu.memory_space<vmem>>, vector<16x32xf32>
      tpu.vector_store %arg7[%c0, %c0_5], %12 {strides = array<i32>} : memref<16x32xf32, #tpu.memory_space<vmem>>, vector<16x32xf32>,
    } else {
    }
    %c1_i32 = arith.constant 1 : i32
    %3 = arith.cmpi slt, %arg0, %c1_i32 : i32
    %4 = arith.extui %3 : i1 to i32
    %c0_i32_1 = arith.constant 0 : i32
    %5 = arith.cmpi ne, %4, %c0_i32_1 : i32
    scf.if %5 {
      %c0 = arith.constant 0 : index
      %c0_5 = arith.constant 0 : index
      %12 = vector.load %arg7[%c0, %c0_5] : memref<16x32xf32, #tpu.memory_space<vmem>>, vector<16x32xf32>
      %c0_6 = arith.constant 0 : index
      %c0_7 = arith.constant 0 : index
      %c0_8 = arith.constant 0 : index
      %13 = vector.load %arg1[%c0_6, %c0_7, %c0_8] : memref<1x16x16xbf16, #tpu.memory_space<vmem>>, vector<1x16x16xbf16>
      %14 = vector.shape_cast %13 : vector<1x16x16xbf16> to vector<16x16xbf16>
      %c0_9 = arith.constant 0 : index
      %c0_10 = arith.constant 0 : index
      %c0_11 = arith.constant 0 : index
      %15 = vector.load %arg3[%c0_9, %c0_10, %c0_11] : memref<1x16x32xbf16, #tpu.memory_space<vmem>>, vector<1x16x32xbf16>
      %16 = vector.shape_cast %15 : vector<1x16x32xbf16> to vector<16x32xbf16>
      %cst = arith.constant dense<0.000000e+00> : vector<16x32xf32>
      %17 = tpu.matmul %14, %16, %cst {dimension_numbers = #tpu.dot_dimension_numbers<[1], [0], [0], [1], [0, 0, 1, 1], [], []>} : vector<16x16xbf16>, vector<16x32xbf16>, vector<16x32xf32> -> vector<16x32xf32>
      %18 = arith.addf %12, %17 : vector<16x32xf32>
      %c0_12 = arith.constant 0 : index
      %c0_13 = arith.constant 0 : index
      %19 = vector.load %arg7[%c0_12, %c0_13] : memref<16x32xf32, #tpu.memory_space<vmem>>, vector<16x32xf32>
      tpu.vector_store %arg7[%c0_12, %c0_13], %18 {strides = array<i32>} : memref<16x32xf32, #tpu.memory_space<vmem>>, vector<16x32xf32>,
    } else {
    }
    %c1_i32_2 = arith.constant 1 : i32
    %6 = arith.cmpi sge, %arg0, %c1_i32_2 : i32
    %7 = arith.extui %6 : i1 to i32
    %c0_i32_3 = arith.constant 0 : i32
    %8 = arith.cmpi ne, %7, %c0_i32_3 : i32
    scf.if %8 {
      %c0 = arith.constant 0 : index
      %c0_5 = arith.constant 0 : index
      %12 = vector.load %arg7[%c0, %c0_5] : memref<16x32xf32, #tpu.memory_space<vmem>>, vector<16x32xf32>
      %c0_6 = arith.constant 0 : index
      %c0_7 = arith.constant 0 : index
      %c0_8 = arith.constant 0 : index
      %13 = vector.load %arg2[%c0_6, %c0_7, %c0_8] : memref<1x16x16xbf16, #tpu.memory_space<vmem>>, vector<1x16x16xbf16>
      %14 = vector.shape_cast %13 : vector<1x16x16xbf16> to vector<16x16xbf16>
      %c0_9 = arith.constant 0 : index
      %c0_10 = arith.constant 0 : index
      %c0_11 = arith.constant 0 : index
      %15 = vector.load %arg3[%c0_9, %c0_10, %c0_11] : memref<1x16x32xbf16, #tpu.memory_space<vmem>>, vector<1x16x32xbf16>
      %16 = vector.shape_cast %15 : vector<1x16x32xbf16> to vector<16x32xbf16>
      %cst = arith.constant dense<0.000000e+00> : vector<16x32xf32>
      %17 = tpu.matmul %14, %16, %cst {dimension_numbers = #tpu.dot_dimension_numbers<[1], [0], [0], [1], [0, 0, 1, 1], [], []>} : vector<16x16xbf16>, vector<16x32xbf16>, vector<16x32xf32> -> vector<16x32xf32>
      %18 = arith.addf %12, %17 : vector<16x32xf32>
      %c0_12 = arith.constant 0 : index
      %c0_13 = arith.constant 0 : index
      %19 = vector.load %arg7[%c0_12, %c0_13] : memref<16x32xf32, #tpu.memory_space<vmem>>, vector<16x32xf32>
      tpu.vector_store %arg7[%c0_12, %c0_13], %18 {strides = array<i32>} : memref<16x32xf32, #tpu.memory_space<vmem>>, vector<16x32xf32>,
    } else {
    }
    %c2_i32 = arith.constant 2 : i32
    %9 = arith.cmpi eq, %arg0, %c2_i32 : i32
    %10 = arith.extui %9 : i1 to i32
    %c0_i32_4 = arith.constant 0 : i32
    %11 = arith.cmpi ne, %10, %c0_i32_4 : i32
    scf.if %11 {
      %c0 = arith.constant 0 : index
      %c0_5 = arith.constant 0 : index
      %12 = vector.load %arg7[%c0, %c0_5] : memref<16x32xf32, #tpu.memory_space<vmem>>, vector<16x32xf32>
      %c0_6 = arith.constant 0 : index
      %c0_7 = arith.constant 0 : index
      %13 = vector.load %arg4[%c0_6, %c0_7] : memref<16x32xf32, #tpu.memory_space<vmem>>, vector<16x32xf32>
      %14 = arith.addf %12, %13 : vector<16x32xf32>
      %cst = arith.constant 0.999994993 : f32
      %15 = vector.broadcast %cst : f32 to vector<16x32xf32>
      %16 = arith.mulf %14, %15 : vector<16x32xf32>
      %cst_8 = arith.constant 0.000000e+00 : f32
      %17 = vector.broadcast %cst_8 : f32 to vector<16x32xf32>
      %18 = arith.maximumf %16, %17 : vector<16x32xf32>
      %c0_9 = arith.constant 0 : index
      %c0_10 = arith.constant 0 : index
      %19 = vector.load %arg5[%c0_9, %c0_10] : memref<16x32xf32, #tpu.memory_space<vmem>>, vector<16x32xf32>
      tpu.vector_store %arg5[%c0_9, %c0_10], %18 {strides = array<i32>} : memref<16x32xf32, #tpu.memory_space<vmem>>, vector<16x32xf32>,
      %cst_11 = arith.constant dense<0.000000e+00> : vector<32xf32>
      %20 = vector.multi_reduction <add>, %18, %cst_11 [0] : vector<16x32xf32> to vector<32xf32>
      %21 = vector.shape_cast %20 : vector<32xf32> to vector<1x32xf32>
      %c0_12 = arith.constant 0 : index
      %c0_13 = arith.constant 0 : index
      %22 = vector.load %arg6[%c0_12, %c0_13] : memref<1x32xf32, #tpu.memory_space<vmem>>, vector<1x32xf32>
      tpu.vector_store %arg6[%c0_12, %c0_13], %21 {strides = array<i32>} : memref<1x32xf32, #tpu.memory_space<vmem>>, vector<1x32xf32>,
    } else {
    }
    return
  }
  func.func @transform_0(%arg0: i32) -> (i32, i32, i32) {
    %c0_i32 = arith.constant 0 : i32
    %c0_i32_0 = arith.constant 0 : i32
    %c0_i32_1 = arith.constant 0 : i32
    return %arg0, %c0_i32, %c0_i32_0 : i32, i32, i32
  }
  func.func @transform_1(%arg0: i32) -> (i32, i32, i32) {
    %c1_i32 = arith.constant 1 : i32
    %0 = arith.subi %arg0, %c1_i32 : i32
    %c0_i32 = arith.constant 0 : i32
    %1 = arith.maxsi %0, %c0_i32 : i32
    %c0_i32_0 = arith.constant 0 : i32
    %c0_i32_1 = arith.constant 0 : i32
    %c0_i32_2 = arith.constant 0 : i32
    return %1, %c0_i32_0, %c0_i32_1 : i32, i32, i32
  }
  func.func @transform_2(%arg0: i32) -> (i32, i32, i32) {
    %c0_i32 = arith.constant 0 : i32
    %c0_i32_0 = arith.constant 0 : i32
    %c0_i32_1 = arith.constant 0 : i32
    return %arg0, %c0_i32, %c0_i32_0 : i32, i32, i32
  }
  func.func @transform_3(%arg0: i32) -> (i32, i32) {
    %c0_i32 = arith.constant 0 : i32
    %c0_i32_0 = arith.constant 0 : i32
    %c0_i32_1 = arith.constant 0 : i32
    return %c0_i32, %c0_i32_0 : i32, i32
  }
  func.func @transform_4(%arg0: i32) -> (i32, i32) {
    %c0_i32 = arith.constant 0 : i32
    %c0_i32_0 = arith.constant 0 : i32
    %c0_i32_1 = arith.constant 0 : i32
    return %c0_i32, %c0_i32_0 : i32, i32
  }
  func.func @transform_5(%arg0: i32) -> (i32, i32) {
    %c0_i32 = arith.constant 0 : i32
    %c0_i32_0 = arith.constant 0 : i32
    %c0_i32_1 = arith.constant 0 : i32
    return %c0_i32, %c0_i32_0 : i32, i32
  }
}

</mosaic_0001>

<llo_original>
// kernel: forward.5
$region0: #{forward.5}
  #allocation0 [shape = 'u32[]', space=smem, size = 0x4, offset = 0x4, fixed_abs, tag = 'smem constant byte address 0x4 - core index']
  #allocation1 [shape = 'u32[144,128]{1,0:T(1,128)}', space=vmem, size = 0x12000, scoped, tag = 'internal scratch']
  #allocation2 [shape = 'f32[16,32]{1,0:T(8,128)}', space=vmem, size = 0x2000, scoped, tag = 'scratch operand']
  %s0 = inlined_call_operand.hbm [shape: bf16[3,16,16], index: 0, kind: input, shape index: {}]
  %s1 = inlined_call_operand.hbm [shape: bf16[2,16,16], index: 1, kind: input, shape index: {}]
  %s2 = inlined_call_operand.hbm [shape: bf16[3,16,32], index: 2, kind: input, shape index: {}]
  %s3 = inlined_call_operand.hbm [shape: f32[3,1,32], index: 3, kind: input, shape index: {}]
  %s4 = inlined_call_operand.hbm [shape: f32[16,32], index: 4, kind: output, shape index: {}]
  %s5 = sld [smem:[#allocation0]]
  $region81: #{forward.5} parent=0
    _
  %s7 = ssub.s32 1, %s5
  %s8 = scalar_select 0, %s7, %s5
  $region1: #{forward.5} parent=0
    #allocation3 [shape = 'u8[8192]{0}', space=vmem, size = 0x2000, scoped, tag = 'input window, operand 0']
    #allocation4 [shape = 's32[2]{0}', space=sflag, size = 0x8, scoped, tag = 'scoped memory for forward.5']
    #allocation5 [shape = 's32[2]{0}', space=sflag, size = 0x8, scoped, tag = 'scoped memory for forward.5']
    #allocation6 [shape = 'u8[8192]{0}', space=vmem, size = 0x2000, scoped, tag = 'input window, operand 1']
    #allocation7 [shape = 's32[2]{0}', space=sflag, size = 0x8, scoped, tag = 'scoped memory for forward.5']
    #allocation8 [shape = 'u8[8192]{0}', space=vmem, size = 0x2000, scoped, tag = 'input window, operand 2']
    #allocation9 [shape = 'u8[1024]{0}', space=vmem, size = 0x400, scoped, tag = 'input window, operand 3']
    #allocation10 [shape = 's32[2]{0}', space=sflag, size = 0x8, scoped, tag = 'scoped memory for forward.5']
    #allocation11 [shape = 'u8[8192]{0}', space=vmem, size = 0x2000, scoped, tag = 'output window, operand 0, single buffered']
    %9 = vsyncpa [#allocation4], 0
    %s10 = scalar_lea.sflag [#allocation4], 1
    %11 = vsyncpa %s10, 0
    %12 = vsyncpa [#allocation7], 0
    %s13 = scalar_lea.sflag [#allocation7], 1
    %14 = vsyncpa %s13, 0
    %15 = vsyncpa [#allocation10], 0
    %s16 = scalar_lea.sflag [#allocation10], 1
    %17 = vsyncpa %s16, 0
    %18 = vsyncpa [#allocation5], 0
    loop: start=0, step=1, limit=5
    $region2: #{forward.5} parent=1 // loop_pre_header
      _
    $region3: #{forward.5} parent=1 // loop_header
      %s20 = sphi 0, %s24
      %p21 = scmp.ge.s32.totalorder %s20, 5
      %s30 = sphi 0, %s32
      %s33 = sphi 0, %s30
      %s34 = sphi 0, %s33
      %s50 = sphi 0, %s34
      %s62 = sphi 0, %s64
      %s65 = sphi 0, %s62
      %s66 = sphi 0, %s65
      %s82 = sphi 0, %s66
      %s88 = sphi 0, %s90
      %s91 = sphi 0, %s88
      %s92 = sphi 0, %s91
      %s108 = sphi 0, %s92
      %s114 = sphi 0, %s116
      %s117 = sphi 0, %s114
      %s118 = sphi 0, %s117
      %s134 = sphi 0, %s118
      %s138 = sphi 0, %s138
      %s140 = sphi 0, %s138
      %s141 = sphi 0, %s140
      %s155 = sphi 0, %s141
    $region4: #{forward.5} parent=1 // loop_header_branch
      %23 = sbr.rel (%p21) target = $region8
    $region5: #{forward.5} parent=1 // loop_body
      %s25 = ssub.s32 %s20, 1
      %s26 = ssub.s32 %s20, 2
      %s27 = sadd.s32 %s20, 1
      %s28 = ssub.s32 %s20, %s27
      %p29 = scmp.eq.s32.totalorder %s28, 0
      %s31 = sadd.s32 %s30, 1
      %s32 = scalar_select %p29, %s30, %s31
      %p35 = pneg %p29
      %p36 = scmp.eq.s32.totalorder %s20, 2
      %p37 = por %p35, %p36
      %p38 = scmp.ne.s32.totalorder %s30, %s33
      %p39 = scmp.eq.s32.totalorder %s20, 0
      %p40 = por %p38, %p39
      %p41 = scmp.ne.s32.totalorder %s30, %s33
      %p42 = scmp.eq.s32.totalorder %s25, 2
      %p43 = por %p41, %p42
      %p44 = scmp.ne.s32.totalorder %s33, %s34
      %p45 = scmp.eq.s32.totalorder %s25, 0
      %p46 = por %p44, %p45
      %p47 = scmp.ne.s32.totalorder %s33, %s34
      %p48 = scmp.eq.s32.totalorder %s26, 2
      %p49 = por %p47, %p48
      %p51 = scmp.ne.s32.totalorder %s34, %s50
      %p52 = scmp.eq.s32.totalorder %s26, 0
      %p53 = por %p51, %p52
      %s54 = ssub.s32 %s20, 1
      %p55 = scmp.gt.s32.totalorder %s54, 0
      %s56 = scalar_select %p55, %s54, 0
      %s57 = ssub.s32 %s27, 1
      %p58 = scmp.gt.s32.totalorder %s57, 0
      %s59 = scalar_select %p58, %s57, 0
      %s60 = ssub.s32 %s56, %s59
      %p61 = scmp.eq.s32.totalorder %s60, 0
      %s63 = sadd.s32 %s62, 1
      %s64 = scalar_select %p61, %s62, %s63
      %p67 = pneg %p61
      %p68 = scmp.eq.s32.totalorder %s20, 2
      %p69 = por %p67, %p68
      %p70 = scmp.ne.s32.totalorder %s62, %s65
      %p71 = scmp.eq.s32.totalorder %s20, 0
      %p72 = por %p70, %p71
      %p73 = scmp.ne.s32.totalorder %s62, %s65
      %p74 = scmp.eq.s32.totalorder %s25, 2
      %p75 = por %p73, %p74
      %p76 = scmp.ne.s32.totalorder %s65, %s66
      %p77 = scmp.eq.s32.totalorder %s25, 0
      %p78 = por %p76, %p77
      %p79 = scmp.ne.s32.totalorder %s65, %s66
      %p80 = scmp.eq.s32.totalorder %s26, 2
      %p81 = por %p79, %p80
      %p83 = scmp.ne.s32.totalorder %s66, %s82
      %p84 = scmp.eq.s32.totalorder %s26, 0
      %p85 = por %p83, %p84
      %s86 = ssub.s32 %s20, %s27
      %p87 = scmp.eq.s32.totalorder %s86, 0
      %s89 = sadd.s32 %s88, 1
      %s90 = scalar_select %p87, %s88, %s89
      %p93 = pneg %p87
      %p94 = scmp.eq.s32.totalorder %s20, 2
      %p95 = por %p93, %p94
      %p96 = scmp.ne.s32.totalorder %s88, %s91
      %p97 = scmp.eq.s32.totalorder %s20, 0
      %p98 = por %p96, %p97
      %p99 = scmp.ne.s32.totalorder %s88, %s91
      %p100 = scmp.eq.s32.totalorder %s25, 2
      %p101 = por %p99, %p100
      %p102 = scmp.ne.s32.totalorder %s91, %s92
      %p103 = scmp.eq.s32.totalorder %s25, 0
      %p104 = por %p102, %p103
      %p105 = scmp.ne.s32.totalorder %s91, %s92
      %p106 = scmp.eq.s32.totalorder %s26, 2
      %p107 = por %p105, %p106
      %p109 = scmp.ne.s32.totalorder %s92, %s108
      %p110 = scmp.eq.s32.totalorder %s26, 0
      %p111 = por %p109, %p110
      %s112 = ssub.s32 %s20, %s27
      %p113 = scmp.eq.s32.totalorder %s112, 0
      %s115 = sadd.s32 %s114, 1
      %s116 = scalar_select %p113, %s114, %s115
      %p119 = pneg %p113
      %p120 = scmp.eq.s32.totalorder %s20, 2
      %p121 = por %p119, %p120
      %p122 = scmp.ne.s32.totalorder %s114, %s117
      %p123 = scmp.eq.s32.totalorder %s20, 0
      %p124 = por %p122, %p123
      %p125 = scmp.ne.s32.totalorder %s114, %s117
      %p126 = scmp.eq.s32.totalorder %s25, 2
      %p127 = por %p125, %p126
      %p128 = scmp.ne.s32.totalorder %s117, %s118
      %p129 = scmp.eq.s32.totalorder %s25, 0
      %p130 = por %p128, %p129
      %p131 = scmp.ne.s32.totalorder %s117, %s118
      %p132 = scmp.eq.s32.totalorder %s26, 2
      %p133 = por %p131, %p132
      %p135 = scmp.ne.s32.totalorder %s118, %s134
      %p136 = scmp.eq.s32.totalorder %s26, 0
      %p137 = por %p135, %p136
      %s139 = sadd.s32 %s138, 1
      %p142 = scmp.eq.s32.totalorder %s20, 2
      %p143 = scmp.ne.s32.totalorder %s138, %s140
      %p144 = scmp.eq.s32.totalorder %s20, 0
      %p145 = por %p143, %p144
      %p146 = scmp.ne.s32.totalorder %s138, %s140
      %p147 = scmp.eq.s32.totalorder %s25, 2
      %p148 = por %p146, %p147
      %p149 = scmp.ne.s32.totalorder %s140, %s141
      %p150 = scmp.eq.s32.totalorder %s25, 0
      %p151 = por %p149, %p150
      %p152 = scmp.ne.s32.totalorder %s140, %s141
      %p153 = scmp.eq.s32.totalorder %s26, 2
      %p154 = por %p152, %p153
      %p156 = scmp.ne.s32.totalorder %s141, %s155
      %p157 = scmp.eq.s32.totalorder %s26, 0
      %p158 = por %p156, %p157
      %p159 = scmp.le.s32.totalorder 1, %s20
      %p160 = scmp.lt.s32.totalorder %s20, 4
      %p161 = pnand %p159, %p160
      %p162 = pneg %p161
      // Predicated region
      $region9: #{forward.5} parent=5 // pred_check
        _
      $region10: #{forward.5} parent=5 // pred_check_branch
        %164 = sbr.rel (%p161) target = $region12
      $region11: #{forward.5} parent=5 // pred_region
        %s165 = ssub.s32 %s20, 1
      $region12: #{forward.5} parent=5 // pred_fallthru
        _
      %p166 = scmp.lt.s32.totalorder %s20, 3
      // Predicated region
      $region13: #{forward.5} parent=5 // pred_check
        %p167 = pneg %p166
      $region14: #{forward.5} parent=5 // pred_check_branch
        %169 = sbr.rel (%p167) target = $region16
      $region15: #{forward.5} parent=5 // pred_region
        // Predicated region
        $region17: #{forward.5} parent=15 // pred_check
          %p170 = pneg %p40
        $region18: #{forward.5} parent=15 // pred_check_branch
          %172 = sbr.rel (%p170) target = $region20
        $region19: #{forward.5} parent=15 // pred_region
          %s173 = sand.u32 %s30, 1
          %s174 = scalar_lea.sflag [#allocation4], %s173
          %s175 = sand.u32 %s30, 1
          %s176 = smul.addr %s175, 8
          %s177 = scalar_lea.vmem [#allocation3], %s176
          %s179 = ssub.s32 128, 128
          %180 = vsyncadd %s174, %s179
          %s181 = smul.addr %s20, 2
          %s182 = smul.addr %s181, 64
          %s183 = scalar_lea.hbm %s0, %s182
          %s184 = sshll.u32 %s177, 4
          %s185 = int_to_ptr.vmem [resolvable:$true] %s184
          %190 = dma.hbm_to_vmem [thread:$0]  %s183, 128, %s185, %s174, 64, 64, 4
        $region20: #{forward.5} parent=15 // pred_fallthru
          _
        // Predicated region
        $region21: #{forward.5} parent=15 // pred_check
          %p191 = pneg %p72
        $region22: #{forward.5} parent=15 // pred_check_branch
          %193 = sbr.rel (%p191) target = $region24
        $region23: #{forward.5} parent=15 // pred_region
          %s194 = sand.u32 %s20, 1
          %s195 = scalar_lea.sflag [#allocation7], %s194
          %s196 = sand.u32 %s62, 1
          %s197 = smul.addr %s196, 8
          %s198 = scalar_lea.vmem [#allocation6], %s197
          %s199 = ssub.s32 %s20, 1
          %p200 = scmp.gt.s32.totalorder %s199, 0
          %s201 = scalar_select %p200, %s199, 0
          %s203 = ssub.s32 128, 128
          %204 = vsyncadd %s195, %s203
          %s205 = smul.addr %s201, 2
          %s206 = smul.addr %s205, 64
          %s207 = scalar_lea.hbm %s1, %s206
          %s208 = sshll.u32 %s198, 4
          %s209 = int_to_ptr.vmem [resolvable:$true] %s208
          %214 = dma.hbm_to_vmem [thread:$0]  %s207, 128, %s209, %s195, 64, 64, 4
        $region24: #{forward.5} parent=15 // pred_fallthru
          _
        // Predicated region
        $region25: #{forward.5} parent=15 // pred_check
          %p215 = pneg %p98
        $region26: #{forward.5} parent=15 // pred_check_branch
          %217 = sbr.rel (%p215) target = $region28
        $region27: #{forward.5} parent=15 // pred_region
          %s218 = sand.u32 %s20, 1
          %s219 = scalar_lea.sflag [#allocation7], %s218
          %s220 = sand.u32 %s88, 1
          %s221 = smul.addr %s220, 8
          %s222 = scalar_lea.vmem [#allocation8], %s221
          %s224 = ssub.s32 128, 128
          %225 = vsyncadd %s219, %s224
          %s226 = smul.addr %s20, 2
          %s227 = smul.addr %s226, 64
          %s228 = scalar_lea.hbm %s2, %s227
          %s229 = sshll.u32 %s222, 4
          %s230 = int_to_ptr.vmem [resolvable:$true] %s229
          %235 = dma.hbm_to_vmem [thread:$0]  %s228, 128, %s230, %s219, 64, 64, 4
        $region28: #{forward.5} parent=15 // pred_fallthru
          _
        // Predicated region
        $region29: #{forward.5} parent=15 // pred_check
          %p236 = pneg %p124
        $region30: #{forward.5} parent=15 // pred_check_branch
          %238 = sbr.rel (%p236) target = $region32
        $region31: #{forward.5} parent=15 // pred_region
          %s239 = sand.u32 %s114, 1
          %s240 = scalar_lea.sflag [#allocation10], %s239
          %s241 = sand.u32 %s114, 1
          %s242 = scalar_lea.vmem [#allocation9], %s241
          %s244 = ssub.s32 16, 16
          %245 = vsyncadd %s240, %s244
          %s246 = smul.addr %s20, 16
          %s247 = scalar_lea.hbm %s3, %s246
          %s249 = sshll.u32 %s242, 4
          %s250 = int_to_ptr.vmem [resolvable:$true] %s249
          %252 = dma.hbm_to_vmem [thread:$0]  %s247, 16, %s250, %s240
        $region32: #{forward.5} parent=15 // pred_fallthru
          _
      $region16: #{forward.5} parent=5 // pred_fallthru
        _
      %p253 = scmp.le.s32.totalorder 1, %s20
      %p254 = scmp.lt.s32.totalorder %s20, 4
      %p255 = pnand %p253, %p254
      %p256 = pneg %p255
      // Predicated region
      $region33: #{forward.5} parent=5 // pred_check
        _
      $region34: #{forward.5} parent=5 // pred_check_branch
        %258 = sbr.rel (%p255) target = $region36
      $region35: #{forward.5} parent=5 // pred_region
        %s259 = ssub.s32 %s20, 1
        %s260 = sand.u32 %s33, 1
        %s261 = scalar_lea.sflag [#allocation4], %s260
        %s262 = sand.u32 %s33, 1
        %s263 = smul.addr %s262, 8
        %s264 = scalar_lea.vmem [#allocation3], %s263
        // Predicated region
        $region37: #{forward.5} parent=35 // pred_check
          %p265 = pneg %p46
        $region38: #{forward.5} parent=35 // pred_check_branch
          %267 = sbr.rel (%p265) target = $region40
        $region39: #{forward.5} parent=35 // pred_region
          %268 = dma.done %s261, 128
        $region40: #{forward.5} parent=35 // pred_fallthru
          _
        %s269 = sand.u32 %s25, 1
        %s270 = scalar_lea.sflag [#allocation7], %s269
        %s271 = sand.u32 %s65, 1
        %s272 = smul.addr %s271, 8
        %s273 = scalar_lea.vmem [#allocation6], %s272
        // Predicated region
        $region41: #{forward.5} parent=35 // pred_check
          %p274 = pneg %p78
        $region42: #{forward.5} parent=35 // pred_check_branch
          %276 = sbr.rel (%p274) target = $region44
        $region43: #{forward.5} parent=35 // pred_region
          %277 = dma.done %s270, 128
        $region44: #{forward.5} parent=35 // pred_fallthru
          _
        %s278 = sand.u32 %s25, 1
        %s279 = scalar_lea.sflag [#allocation7], %s278
        %s280 = sand.u32 %s91, 1
        %s281 = smul.addr %s280, 8
        %s282 = scalar_lea.vmem [#allocation8], %s281
        // Predicated region
        $region45: #{forward.5} parent=35 // pred_check
          %p283 = pneg %p104
        $region46: #{forward.5} parent=35 // pred_check_branch
          %285 = sbr.rel (%p283) target = $region48
        $region47: #{forward.5} parent=35 // pred_region
          %286 = dma.done %s279, 128
        $region48: #{forward.5} parent=35 // pred_fallthru
          _
        %s287 = sand.u32 %s117, 1
        %s288 = scalar_lea.sflag [#allocation10], %s287
        %s289 = sand.u32 %s117, 1
        %s290 = scalar_lea.vmem [#allocation9], %s289
        // Predicated region
        $region49: #{forward.5} parent=35 // pred_check
          %p291 = pneg %p130
        $region50: #{forward.5} parent=35 // pred_check_branch
          %293 = sbr.rel (%p291) target = $region52
        $region51: #{forward.5} parent=35 // pred_region
          %294 = dma.done %s288, 16
        $region52: #{forward.5} parent=35 // pred_fallthru
          _
        %s295 = sand.u32 %s33, 1
        %s296 = scalar_lea.sflag [#allocation4], %s295
        %s297 = sand.u32 %s33, 1
        %s298 = smul.addr %s297, 8
        %s299 = scalar_lea.vmem [#allocation3], %s298
        %p300 = pneg %p46
        %p301 = pneg %p43
        %s302 = sand.u32 %s25, 1
        %s303 = scalar_lea.sflag [#allocation7], %s302
        %s304 = sand.u32 %s65, 1
        %s305 = smul.addr %s304, 8
        %s306 = scalar_lea.vmem [#allocation6], %s305
        %p307 = pneg %p78
        %p308 = pneg %p75
        %s309 = sand.u32 %s25, 1
        %s310 = scalar_lea.sflag [#allocation7], %s309
        %s311 = sand.u32 %s91, 1
        %s312 = smul.addr %s311, 8
        %s313 = scalar_lea.vmem [#allocation8], %s312
        %p314 = pneg %p104
        %p315 = pneg %p101
        %s316 = sand.u32 %s117, 1
        %s317 = scalar_lea.sflag [#allocation10], %s316
        %s318 = sand.u32 %s117, 1
        %s319 = scalar_lea.vmem [#allocation9], %s318
        %p320 = pneg %p130
        %p321 = pneg %p127
        %p322 = pneg %p151
        %p323 = pneg %p148
        %s324 = ssub.s32 %s25, 1
        %p325 = scmp.gt.s32.totalorder %s324, 0
        %s326 = scalar_select %p325, %s324, 0
        %p328 = scmp.eq.s32.totalorder %s25, 0
        // Predicated region
        $region53: #{forward.5} parent=35 // pred_check
          %p329 = pneg %p328
        $region54: #{forward.5} parent=35 // pred_check_branch
          %331 = sbr.rel (%p329) target = $region56
        $region55: #{forward.5} parent=35 // pred_region
          %vm332 = vcmask 261120
          %333 = vst.msk [vmem:[#allocation2] sm:$0xff] %vm332, 0.0
          %334 = vst.msk [vmem:[#allocation2 + $0x8] sm:$0xff] %vm332, 0.0
        $region56: #{forward.5} parent=35 // pred_fallthru
          _
        %p335 = scmp.lt.s32.totalorder %s25, 1
        // Predicated region
        $region57: #{forward.5} parent=35 // pred_check
          %p336 = pneg %p335
        $region58: #{forward.5} parent=35 // pred_check_branch
          %338 = sbr.rel (%p336) target = $region60
        $region59: #{forward.5} parent=35 // pred_region
          %v339 = vld [vmem:[%s264] sm:$0xf]
          %v340 = vld [vmem:[%s264 + $0x4] sm:$0xf]
          %v341 = vld [vmem:[%s282] sm:$0xf]
          %v342 = vld [vmem:[%s282 + $0x4] sm:$0xf]
          %v343 = vld [vmem:[#allocation2] sm:$0xff]
          %v344 = vld [vmem:[#allocation2 + $0x8] sm:$0xff]
          %v345 = vld [vmem:[%s290] sm:$0x1]
          %v347 = vlaneseq
          %v348 = vshrl.u32 %v347, 7
          %v349 = vsub.s32 0, %v348
          %v350 = vrot.slane %v345, %v349
          %v354 = vunpack.c.l.b16 %v339
          %v355 = vunpack.c.l.b16 %v340
          %v356 = vpack.c.b16 %v355, %v354
          %v359 = vunpack.c.l.b16 %v341
          %v360 = vunpack.c.l.b16 %v342
          %v361 = vpack.c.b16 %v360, %v359
          %vm363 = vcmask 130048
          %v365 = vsel %vm363, %v356, 0
          %367 = vmatprep.subr.bf16.mxu0 0
          %368 = vmatpush1.bf16.msra.mxu0 %v361
          %369 = vmatprep.subr.bf16.mxu0 0
          %370 = vmatpush1.bf16.msra.mxu0 0
          %371 = vmatprep.subr.bf16.mxu0 0
          %372 = vmatpush1.bf16.msra.mxu0 0
          %373 = vmatprep.subr.bf16.mxu0 0
          %374 = vmatpush1.bf16.msra.mxu0 0
          %375 = vmatprep.subr.bf16.mxu0 0
          %376 = vmatpush1.bf16.msra.mxu0 0
          %377 = vmatprep.subr.bf16.mxu0 0
          %378 = vmatpush1.bf16.msra.mxu0 0
          %379 = vmatprep.subr.bf16.mxu0 0
          %380 = vmatpush1.bf16.msra.mxu0 0
          %381 = vmatprep.subr.bf16.mxu0 0
          %382 = vmatpush1.bf16.msra.mxu0 0
          %383 = vmatprep.subr.bf16.mxu0 0
          %384 = vmatpush1.bf16.msra.mxu0 0
          %385 = vmatprep.subr.bf16.mxu0 0
          %386 = vmatpush1.bf16.msra.mxu0 0
          %387 = vmatprep.subr.bf16.mxu0 0
          %388 = vmatpush1.bf16.msra.mxu0 0
          %389 = vmatprep.subr.bf16.mxu0 0
          %390 = vmatpush1.bf16.msra.mxu0 0
          %391 = vmatprep.subr.bf16.mxu0 0
          %392 = vmatpush1.bf16.msra.mxu0 0
          %393 = vmatprep.subr.bf16.mxu0 0
          %394 = vmatpush1.bf16.msra.mxu0 0
          %395 = vmatprep.subr.bf16.mxu0 0
          %396 = vmatpush1.bf16.msra.mxu0 0
          %397 = vmatprep.subr.bf16.mxu0 0
          %398 = vmatpush1.bf16.msra.mxu0 0
          %399 = vmatprep.mubr.bf16.mxu0 0
          %400 = vmatmul.mubr.bf16.gmra.mrb[0].mxu0 %v365
          %v401 = vpop.f32.mrb[0].mxu0
          %v402 = vadd.f32 %v350, %v401
          %v403 = vpop.f32.mrb[0].mxu0
          %v404 = vpop.f32.mrb[0].mxu0
          %v405 = vadd.f32 %v350, %v404
          %v406 = vpop.f32.mrb[0].mxu0
          %407 = vdwg.mxu0
          %v408 = vmul.f32 %v402, 0.999995
          %v409 = vmul.f32 %v405, 0.999995
          %v410 = vmax.f32 %v408, 0.0
          %v411 = vmax.f32 %v409, 0.0
          %v412 = vadd.f32 %v343, %v410
          %v413 = vadd.f32 %v344, %v411
          %vm414 = vcmask 261120
          %415 = vst.msk [vmem:[#allocation2] sm:$0xff] %vm414, %v412
          %416 = vst.msk [vmem:[#allocation2 + $0x8] sm:$0xff] %vm414, %v413
        $region60: #{forward.5} parent=35 // pred_fallthru
          _
        %p417 = scmp.ge.s32.totalorder %s25, 1
        // Predicated region
        $region61: #{forward.5} parent=35 // pred_check
          %p418 = pneg %p417
        $region62: #{forward.5} parent=35 // pred_check_branch
          %420 = sbr.rel (%p418) target = $region64
        $region63: #{forward.5} parent=35 // pred_region
          %v421 = vld [vmem:[%s273] sm:$0xf]
          %v422 = vld [vmem:[%s273 + $0x4] sm:$0xf]
          %v423 = vld [vmem:[%s282] sm:$0xf]
          %v424 = vld [vmem:[%s282 + $0x4] sm:$0xf]
          %v425 = vld [vmem:[#allocation2] sm:$0xff]
          %v426 = vld [vmem:[#allocation2 + $0x8] sm:$0xff]
          %v427 = vld [vmem:[%s290] sm:$0x1]
          %v429 = vlaneseq
          %v430 = vshrl.u32 %v429, 7
          %v431 = vsub.s32 0, %v430
          %v432 = vrot.slane %v427, %v431
          %v436 = vunpack.c.l.b16 %v421
          %v437 = vunpack.c.l.b16 %v422
          %v438 = vpack.c.b16 %v437, %v436
          %v441 = vunpack.c.l.b16 %v423
          %v442 = vunpack.c.l.b16 %v424
          %v443 = vpack.c.b16 %v442, %v441
          %vm445 = vcmask 130048
          %v447 = vsel %vm445, %v438, 0
          %449 = vmatprep.subr.bf16.mxu0 0
          %450 = vmatpush1.bf16.msra.mxu0 %v443
          %451 = vmatprep.subr.bf16.mxu0 0
          %452 = vmatpush1.bf16.msra.mxu0 0
          %453 = vmatprep.subr.bf16.mxu0 0
          %454 = vmatpush1.bf16.msra.mxu0 0
          %455 = vmatprep.subr.bf16.mxu0 0
          %456 = vmatpush1.bf16.msra.mxu0 0
          %457 = vmatprep.subr.bf16.mxu0 0
          %458 = vmatpush1.bf16.msra.mxu0 0
          %459 = vmatprep.subr.bf16.mxu0 0
          %460 = vmatpush1.bf16.msra.mxu0 0
          %461 = vmatprep.subr.bf16.mxu0 0
          %462 = vmatpush1.bf16.msra.mxu0 0
          %463 = vmatprep.subr.bf16.mxu0 0
          %464 = vmatpush1.bf16.msra.mxu0 0
          %465 = vmatprep.subr.bf16.mxu0 0
          %466 = vmatpush1.bf16.msra.mxu0 0
          %467 = vmatprep.subr.bf16.mxu0 0
          %468 = vmatpush1.bf16.msra.mxu0 0
          %469 = vmatprep.subr.bf16.mxu0 0
          %470 = vmatpush1.bf16.msra.mxu0 0
          %471 = vmatprep.subr.bf16.mxu0 0
          %472 = vmatpush1.bf16.msra.mxu0 0
          %473 = vmatprep.subr.bf16.mxu0 0
          %474 = vmatpush1.bf16.msra.mxu0 0
          %475 = vmatprep.subr.bf16.mxu0 0
          %476 = vmatpush1.bf16.msra.mxu0 0
          %477 = vmatprep.subr.bf16.mxu0 0
          %478 = vmatpush1.bf16.msra.mxu0 0
          %479 = vmatprep.subr.bf16.mxu0 0
          %480 = vmatpush1.bf16.msra.mxu0 0
          %481 = vmatprep.mubr.bf16.mxu0 0
          %482 = vmatmul.mubr.bf16.gmra.mrb[0].mxu0 %v447
          %v483 = vpop.f32.mrb[0].mxu0
          %v484 = vadd.f32 %v432, %v483
          %v485 = vpop.f32.mrb[0].mxu0
          %v486 = vpop.f32.mrb[0].mxu0
          %v487 = vadd.f32 %v432, %v486
          %v488 = vpop.f32.mrb[0].mxu0
          %489 = vdwg.mxu0
          %v490 = vmul.f32 %v484, 0.999995
          %v491 = vmul.f32 %v487, 0.999995
          %v492 = vmax.f32 %v490, 0.0
          %v493 = vmax.f32 %v491, 0.0
          %v494 = vadd.f32 %v425, %v492
          %v495 = vadd.f32 %v426, %v493
          %vm496 = vcmask 261120
          %497 = vst.msk [vmem:[#allocation2] sm:$0xff] %vm496, %v494
          %498 = vst.msk [vmem:[#allocation2 + $0x8] sm:$0xff] %vm496, %v495
        $region64: #{forward.5} parent=35 // pred_fallthru
          _
        %p499 = scmp.eq.s32.totalorder %s25, 2
        // Predicated region
        $region65: #{forward.5} parent=35 // pred_check
          %p500 = pneg %p499
        $region66: #{forward.5} parent=35 // pred_check_branch
          %502 = sbr.rel (%p500) target = $region68
        $region67: #{forward.5} parent=35 // pred_region
          %v503 = vld [vmem:[#allocation2] sm:$0xff]
          %v504 = vld [vmem:[#allocation2 + $0x8] sm:$0xff]
          %vm505 = vcmask 261120
          %506 = vst.msk [vmem:[#allocation11] sm:$0xff] %vm505, %v503
          %507 = vst.msk [vmem:[#allocation11 + $0x8] sm:$0xff] %vm505, %v504
        $region68: #{forward.5} parent=35 // pred_fallthru
          _
        // Predicated region
        $region69: #{forward.5} parent=35 // pred_check
          %p508 = pneg %p148
        $region70: #{forward.5} parent=35 // pred_check_branch
          %510 = sbr.rel (%p508) target = $region72
        $region71: #{forward.5} parent=35 // pred_region
          %s512 = ssub.s32 256, 256
          %513 = vsyncadd [#allocation5], %s512
          %s514 = sshll.u32 [#allocation11], 4
          %s515 = int_to_ptr.vmem [resolvable:$true] %s514
          %520 = dma.vmem_to_hbm [thread:$0]  %s515, 256, %s4, [#allocation5], 128, 128, 8
        $region72: #{forward.5} parent=35 // pred_fallthru
          _
        // Predicated region
        $region73: #{forward.5} parent=35 // pred_check
          %p521 = pneg %p148
        $region74: #{forward.5} parent=35 // pred_check_branch
          %523 = sbr.rel (%p521) target = $region76
        $region75: #{forward.5} parent=35 // pred_region
          %524 = dma.done [#allocation5], 256
        $region76: #{forward.5} parent=35 // pred_fallthru
          _
      $region36: #{forward.5} parent=5 // pred_fallthru
        _
      %p525 = scmp.le.s32.totalorder 2, %s20
      // Predicated region
      $region77: #{forward.5} parent=5 // pred_check
        %p526 = pneg %p525
      $region78: #{forward.5} parent=5 // pred_check_branch
        %528 = sbr.rel (%p526) target = $region80
      $region79: #{forward.5} parent=5 // pred_region
        %s529 = ssub.s32 %s20, 2
      $region80: #{forward.5} parent=5 // pred_fallthru
        _
    $region6: #{forward.5} parent=1 // loop_footer
      %s24 = sadd.s32 1, %s20
    $region7: #{forward.5} parent=1 // loop_footer_branch
      %19 = sbr.rel target = $region3
    $region8: #{forward.5} parent=1 // loop_exit
      _
    %530 = vsyncpa [#allocation4], 1
    %s531 = scalar_lea.sflag [#allocation4], 1
    %532 = vsyncpa %s531, 1
    %533 = vsyncpa [#allocation7], 1
    %s534 = scalar_lea.sflag [#allocation7], 1
    %535 = vsyncpa %s534, 1
    %536 = vsyncpa [#allocation10], 1
    %s537 = scalar_lea.sflag [#allocation10], 1
    %538 = vsyncpa %s537, 1
    %539 = vsyncpa [#allocation5], 1
    %s540 = scalar_lea.sflag [#allocation5], 1
    %541 = vsyncpa %s540, 1

// kernel: forward.4
$region0: #{forward.4}
  #allocation0 [shape = 'u32[]', space=smem, size = 0x4, offset = 0x4, fixed_abs, tag = 'smem constant byte address 0x4 - core index']
  #allocation1 [shape = 'u32[144,128]{1,0:T(1,128)}', space=vmem, size = 0x12000, scoped, tag = 'internal scratch']
  #allocation2 [shape = 'f32[16,32]{1,0:T(8,128)}', space=vmem, size = 0x2000, scoped, tag = 'scratch operand']
  %s0 = inlined_call_operand.hbm [shape: bf16[3,16,16], index: 0, kind: input, shape index: {}]
  %s1 = inlined_call_operand.hbm [shape: bf16[2,16,16], index: 1, kind: input, shape index: {}]
  %s2 = inlined_call_operand.hbm [shape: bf16[3,16,32], index: 2, kind: input, shape index: {}]
  %s3 = inlined_call_operand.hbm [shape: f32[3,1,32], index: 3, kind: input, shape index: {}]
  %s4 = inlined_call_operand.hbm [shape: bf16[2,32,16], index: 4, kind: input, shape index: {}]
  %s5 = inlined_call_operand.hbm [shape: bf16[2,32,16], index: 5, kind: input, shape index: {}]
  %s6 = inlined_call_operand.hbm [shape: bf16[3,16,32], index: 6, kind: input, shape index: {}]
  %s7 = inlined_call_operand.hbm [shape: f32[16,32], index: 7, kind: input, shape index: {}]
  %s8 = inlined_call_operand.hbm [shape: bf16[3,16,32], index: 8, kind: output, shape index: {0}]
  %s9 = inlined_call_operand.hbm [shape: bf16[2,16,16], index: 9, kind: output, shape index: {1}]
  %s10 = inlined_call_operand.hbm [shape: f32[16,32], index: 10, kind: output, shape index: {2}]
  %s11 = inlined_call_operand.hbm [shape: f32[1,32], index: 11, kind: output, shape index: {3}]
  %12 = xla_tuple %s8, %s9, %s10, %s11
  %s13 = sld [smem:[#allocation0]]
  $region137: #{forward.4} parent=0
    _
  %s15 = ssub.s32 1, %s13
  %s16 = scalar_select 0, %s15, %s13
  $region1: #{forward.4} parent=0
    #allocation3 [shape = 'u8[8192]{0}', space=vmem, size = 0x2000, scoped, tag = 'input window, operand 0']
    #allocation4 [shape = 's32[2]{0}', space=sflag, size = 0x8, scoped, tag = 'scoped memory for forward.4']
    #allocation5 [shape = 's32[2]{0}', space=sflag, size = 0x8, scoped, tag = 'scoped memory for forward.4']
    #allocation6 [shape = 'u8[8192]{0}', space=vmem, size = 0x2000, scoped, tag = 'input window, operand 1']
    #allocation7 [shape = 's32[2]{0}', space=sflag, size = 0x8, scoped, tag = 'scoped memory for forward.4']
    #allocation8 [shape = 'u8[8192]{0}', space=vmem, size = 0x2000, scoped, tag = 'input window, operand 2']
    #allocation9 [shape = 'u8[1024]{0}', space=vmem, size = 0x400, scoped, tag = 'input window, operand 3']
    #allocation10 [shape = 's32[2]{0}', space=sflag, size = 0x8, scoped, tag = 'scoped memory for forward.4']
    #allocation11 [shape = 'u8[16384]{0}', space=vmem, size = 0x4000, scoped, tag = 'input window, operand 4']
    #allocation12 [shape = 'u8[16384]{0}', space=vmem, size = 0x4000, scoped, tag = 'input window, operand 5']
    #allocation13 [shape = 's32[2]{0}', space=sflag, size = 0x8, scoped, tag = 'scoped memory for forward.4']
    #allocation14 [shape = 'u8[8192]{0}', space=vmem, size = 0x2000, scoped, tag = 'input window, operand 6']
    #allocation15 [shape = 'u8[8192]{0}', space=vmem, size = 0x2000, scoped, tag = 'input window, operand 7, single buffered']
    #allocation16 [shape = 's32[1]{0}', space=sflag, size = 0x4, scoped, tag = 'scoped memory for forward.4']
    #allocation17 [shape = 'u8[8192]{0}', space=vmem, size = 0x2000, scoped, tag = 'output window, operand 0']
    #allocation18 [shape = 'u8[8192]{0}', space=vmem, size = 0x2000, scoped, tag = 'output window, operand 1']
    #allocation19 [shape = 's32[2]{0}', space=sflag, size = 0x8, scoped, tag = 'scoped memory for forward.4']
    #allocation20 [shape = 'u8[8192]{0}', space=vmem, size = 0x2000, scoped, tag = 'output window, operand 2, single buffered']
    #allocation21 [shape = 'u8[512]{0}', space=vmem, size = 0x400, scoped, tag = 'output window, operand 3, single buffered']
    #allocation22 [shape = 's32[1]{0}', space=sflag, size = 0x4, scoped, tag = 'scoped memory for forward.4']
    %17 = vsyncpa [#allocation4], 0
    %s18 = scalar_lea.sflag [#allocation4], 1
    %19 = vsyncpa %s18, 0
    %20 = vsyncpa [#allocation7], 0
    %s21 = scalar_lea.sflag [#allocation7], 1
    %22 = vsyncpa %s21, 0
    %23 = vsyncpa [#allocation10], 0
    %s24 = scalar_lea.sflag [#allocation10], 1
    %25 = vsyncpa %s24, 0
    %26 = vsyncpa [#allocation13], 0
    %s27 = scalar_lea.sflag [#allocation13], 1
    %28 = vsyncpa %s27, 0
    %29 = vsyncpa [#allocation16], 0
    %30 = vsyncpa [#allocation5], 0
    %s31 = scalar_lea.sflag [#allocation5], 1
    %32 = vsyncpa %s31, 0
    %33 = vsyncpa [#allocation19], 0
    %s34 = scalar_lea.sflag [#allocation19], 1
    %35 = vsyncpa %s34, 0
    %36 = vsyncpa [#allocation22], 0
    loop: start=0, step=1, limit=5
    $region2: #{forward.4} parent=1 // loop_pre_header
      _
    $region3: #{forward.4} parent=1 // loop_header
      %s38 = sphi 0, %s42
      %p39 = scmp.ge.s32.totalorder %s38, 5
      %s48 = sphi 0, %s50
      %s51 = sphi 0, %s48
      %s52 = sphi 0, %s51
      %s68 = sphi 0, %s52
      %s80 = sphi 0, %s82
      %s83 = sphi 0, %s80
      %s84 = sphi 0, %s83
      %s100 = sphi 0, %s84
      %s106 = sphi 0, %s108
      %s109 = sphi 0, %s106
      %s110 = sphi 0, %s109
      %s126 = sphi 0, %s110
      %s132 = sphi 0, %s134
      %s135 = sphi 0, %s132
      %s136 = sphi 0, %s135
      %s152 = sphi 0, %s136
      %s164 = sphi 0, %s166
      %s167 = sphi 0, %s164
      %s168 = sphi 0, %s167
      %s184 = sphi 0, %s168
      %s196 = sphi 0, %s198
      %s199 = sphi 0, %s196
      %s200 = sphi 0, %s199
      %s216 = sphi 0, %s200
      %s222 = sphi 0, %s224
      %s225 = sphi 0, %s222
      %s226 = sphi 0, %s225
      %s242 = sphi 0, %s226
      %s246 = sphi 0, %s246
      %s248 = sphi 0, %s246
      %s249 = sphi 0, %s248
      %s263 = sphi 0, %s249
      %s269 = sphi 0, %s271
      %s272 = sphi 0, %s269
      %s273 = sphi 0, %s272
      %s289 = sphi 0, %s273
      %s301 = sphi 0, %s303
      %s304 = sphi 0, %s301
      %s305 = sphi 0, %s304
      %s321 = sphi 0, %s305
      %s325 = sphi 0, %s325
      %s327 = sphi 0, %s325
      %s328 = sphi 0, %s327
      %s342 = sphi 0, %s328
      %s346 = sphi 0, %s346
      %s348 = sphi 0, %s346
      %s349 = sphi 0, %s348
      %s363 = sphi 0, %s349
    $region4: #{forward.4} parent=1 // loop_header_branch
      %41 = sbr.rel (%p39) target = $region8
    $region5: #{forward.4} parent=1 // loop_body
      %s43 = ssub.s32 %s38, 1
      %s44 = ssub.s32 %s38, 2
      %s45 = sadd.s32 %s38, 1
      %s46 = ssub.s32 %s38, %s45
      %p47 = scmp.eq.s32.totalorder %s46, 0
      %s49 = sadd.s32 %s48, 1
      %s50 = scalar_select %p47, %s48, %s49
      %p53 = pneg %p47
      %p54 = scmp.eq.s32.totalorder %s38, 2
      %p55 = por %p53, %p54
      %p56 = scmp.ne.s32.totalorder %s48, %s51
      %p57 = scmp.eq.s32.totalorder %s38, 0
      %p58 = por %p56, %p57
      %p59 = scmp.ne.s32.totalorder %s48, %s51
      %p60 = scmp.eq.s32.totalorder %s43, 2
      %p61 = por %p59, %p60
      %p62 = scmp.ne.s32.totalorder %s51, %s52
      %p63 = scmp.eq.s32.totalorder %s43, 0
      %p64 = por %p62, %p63
      %p65 = scmp.ne.s32.totalorder %s51, %s52
      %p66 = scmp.eq.s32.totalorder %s44, 2
      %p67 = por %p65, %p66
      %p69 = scmp.ne.s32.totalorder %s52, %s68
      %p70 = scmp.eq.s32.totalorder %s44, 0
      %p71 = por %p69, %p70
      %s72 = ssub.s32 %s38, 1
      %p73 = scmp.gt.s32.totalorder %s72, 0
      %s74 = scalar_select %p73, %s72, 0
      %s75 = ssub.s32 %s45, 1
      %p76 = scmp.gt.s32.totalorder %s75, 0
      %s77 = scalar_select %p76, %s75, 0
      %s78 = ssub.s32 %s74, %s77
      %p79 = scmp.eq.s32.totalorder %s78, 0
      %s81 = sadd.s32 %s80, 1
      %s82 = scalar_select %p79, %s80, %s81
      %p85 = pneg %p79
      %p86 = scmp.eq.s32.totalorder %s38, 2
      %p87 = por %p85, %p86
      %p88 = scmp.ne.s32.totalorder %s80, %s83
      %p89 = scmp.eq.s32.totalorder %s38, 0
      %p90 = por %p88, %p89
      %p91 = scmp.ne.s32.totalorder %s80, %s83
      %p92 = scmp.eq.s32.totalorder %s43, 2
      %p93 = por %p91, %p92
      %p94 = scmp.ne.s32.totalorder %s83, %s84
      %p95 = scmp.eq.s32.totalorder %s43, 0
      %p96 = por %p94, %p95
      %p97 = scmp.ne.s32.totalorder %s83, %s84
      %p98 = scmp.eq.s32.totalorder %s44, 2
      %p99 = por %p97, %p98
      %p101 = scmp.ne.s32.totalorder %s84, %s100
      %p102 = scmp.eq.s32.totalorder %s44, 0
      %p103 = por %p101, %p102
      %s104 = ssub.s32 %s38, %s45
      %p105 = scmp.eq.s32.totalorder %s104, 0
      %s107 = sadd.s32 %s106, 1
      %s108 = scalar_select %p105, %s106, %s107
      %p111 = pneg %p105
      %p112 = scmp.eq.s32.totalorder %s38, 2
      %p113 = por %p111, %p112
      %p114 = scmp.ne.s32.totalorder %s106, %s109
      %p115 = scmp.eq.s32.totalorder %s38, 0
      %p116 = por %p114, %p115
      %p117 = scmp.ne.s32.totalorder %s106, %s109
      %p118 = scmp.eq.s32.totalorder %s43, 2
      %p119 = por %p117, %p118
      %p120 = scmp.ne.s32.totalorder %s109, %s110
      %p121 = scmp.eq.s32.totalorder %s43, 0
      %p122 = por %p120, %p121
      %p123 = scmp.ne.s32.totalorder %s109, %s110
      %p124 = scmp.eq.s32.totalorder %s44, 2
      %p125 = por %p123, %p124
      %p127 = scmp.ne.s32.totalorder %s110, %s126
      %p128 = scmp.eq.s32.totalorder %s44, 0
      %p129 = por %p127, %p128
      %s130 = ssub.s32 %s38, %s45
      %p131 = scmp.eq.s32.totalorder %s130, 0
      %s133 = sadd.s32 %s132, 1
      %s134 = scalar_select %p131, %s132, %s133
      %p137 = pneg %p131
      %p138 = scmp.eq.s32.totalorder %s38, 2
      %p139 = por %p137, %p138
      %p140 = scmp.ne.s32.totalorder %s132, %s135
      %p141 = scmp.eq.s32.totalorder %s38, 0
      %p142 = por %p140, %p141
      %p143 = scmp.ne.s32.totalorder %s132, %s135
      %p144 = scmp.eq.s32.totalorder %s43, 2
      %p145 = por %p143, %p144
      %p146 = scmp.ne.s32.totalorder %s135, %s136
      %p147 = scmp.eq.s32.totalorder %s43, 0
      %p148 = por %p146, %p147
      %p149 = scmp.ne.s32.totalorder %s135, %s136
      %p150 = scmp.eq.s32.totalorder %s44, 2
      %p151 = por %p149, %p150
      %p153 = scmp.ne.s32.totalorder %s136, %s152
      %p154 = scmp.eq.s32.totalorder %s44, 0
      %p155 = por %p153, %p154
      %s156 = ssub.s32 %s38, 1
      %p157 = scmp.gt.s32.totalorder %s156, 0
      %s158 = scalar_select %p157, %s156, 0
      %s159 = ssub.s32 %s45, 1
      %p160 = scmp.gt.s32.totalorder %s159, 0
      %s161 = scalar_select %p160, %s159, 0
      %s162 = ssub.s32 %s158, %s161
      %p163 = scmp.eq.s32.totalorder %s162, 0
      %s165 = sadd.s32 %s164, 1
      %s166 = scalar_select %p163, %s164, %s165
      %p169 = pneg %p163
      %p170 = scmp.eq.s32.totalorder %s38, 2
      %p171 = por %p169, %p170
      %p172 = scmp.ne.s32.totalorder %s164, %s167
      %p173 = scmp.eq.s32.totalorder %s38, 0
      %p174 = por %p172, %p173
      %p175 = scmp.ne.s32.totalorder %s164, %s167
      %p176 = scmp.eq.s32.totalorder %s43, 2
      %p177 = por %p175, %p176
      %p178 = scmp.ne.s32.totalorder %s167, %s168
      %p179 = scmp.eq.s32.totalorder %s43, 0
      %p180 = por %p178, %p179
      %p181 = scmp.ne.s32.totalorder %s167, %s168
      %p182 = scmp.eq.s32.totalorder %s44, 2
      %p183 = por %p181, %p182
      %p185 = scmp.ne.s32.totalorder %s168, %s184
      %p186 = scmp.eq.s32.totalorder %s44, 0
      %p187 = por %p185, %p186
      %s188 = ssub.s32 %s38, 1
      %p189 = scmp.gt.s32.totalorder %s188, 0
      %s190 = scalar_select %p189, %s188, 0
      %s191 = ssub.s32 %s45, 1
      %p192 = scmp.gt.s32.totalorder %s191, 0
      %s193 = scalar_select %p192, %s191, 0
      %s194 = ssub.s32 %s190, %s193
      %p195 = scmp.eq.s32.totalorder %s194, 0
      %s197 = sadd.s32 %s196, 1
      %s198 = scalar_select %p195, %s196, %s197
      %p201 = pneg %p195
      %p202 = scmp.eq.s32.totalorder %s38, 2
      %p203 = por %p201, %p202
      %p204 = scmp.ne.s32.totalorder %s196, %s199
      %p205 = scmp.eq.s32.totalorder %s38, 0
      %p206 = por %p204, %p205
      %p207 = scmp.ne.s32.totalorder %s196, %s199
      %p208 = scmp.eq.s32.totalorder %s43, 2
      %p209 = por %p207, %p208
      %p210 = scmp.ne.s32.totalorder %s199, %s200
      %p211 = scmp.eq.s32.totalorder %s43, 0
      %p212 = por %p210, %p211
      %p213 = scmp.ne.s32.totalorder %s199, %s200
      %p214 = scmp.eq.s32.totalorder %s44, 2
      %p215 = por %p213, %p214
      %p217 = scmp.ne.s32.totalorder %s200, %s216
      %p218 = scmp.eq.s32.totalorder %s44, 0
      %p219 = por %p217, %p218
      %s220 = ssub.s32 %s38, %s45
      %p221 = scmp.eq.s32.totalorder %s220, 0
      %s223 = sadd.s32 %s222, 1
      %s224 = scalar_select %p221, %s222, %s223
      %p227 = pneg %p221
      %p228 = scmp.eq.s32.totalorder %s38, 2
      %p229 = por %p227, %p228
      %p230 = scmp.ne.s32.totalorder %s222, %s225
      %p231 = scmp.eq.s32.totalorder %s38, 0
      %p232 = por %p230, %p231
      %p233 = scmp.ne.s32.totalorder %s222, %s225
      %p234 = scmp.eq.s32.totalorder %s43, 2
      %p235 = por %p233, %p234
      %p236 = scmp.ne.s32.totalorder %s225, %s226
      %p237 = scmp.eq.s32.totalorder %s43, 0
      %p238 = por %p236, %p237
      %p239 = scmp.ne.s32.totalorder %s225, %s226
      %p240 = scmp.eq.s32.totalorder %s44, 2
      %p241 = por %p239, %p240
      %p243 = scmp.ne.s32.totalorder %s226, %s242
      %p244 = scmp.eq.s32.totalorder %s44, 0
      %p245 = por %p243, %p244
      %s247 = sadd.s32 %s246, 1
      %p250 = scmp.eq.s32.totalorder %s38, 2
      %p251 = scmp.ne.s32.totalorder %s246, %s248
      %p252 = scmp.eq.s32.totalorder %s38, 0
      %p253 = por %p251, %p252
      %p254 = scmp.ne.s32.totalorder %s246, %s248
      %p255 = scmp.eq.s32.totalorder %s43, 2
      %p256 = por %p254, %p255
      %p257 = scmp.ne.s32.totalorder %s248, %s249
      %p258 = scmp.eq.s32.totalorder %s43, 0
      %p259 = por %p257, %p258
      %p260 = scmp.ne.s32.totalorder %s248, %s249
      %p261 = scmp.eq.s32.totalorder %s44, 2
      %p262 = por %p260, %p261
      %p264 = scmp.ne.s32.totalorder %s249, %s263
      %p265 = scmp.eq.s32.totalorder %s44, 0
      %p266 = por %p264, %p265
      %s267 = ssub.s32 %s38, %s45
      %p268 = scmp.eq.s32.totalorder %s267, 0
      %s270 = sadd.s32 %s269, 1
      %s271 = scalar_select %p268, %s269, %s270
      %p274 = pneg %p268
      %p275 = scmp.eq.s32.totalorder %s38, 2
      %p276 = por %p274, %p275
      %p277 = scmp.ne.s32.totalorder %s269, %s272
      %p278 = scmp.eq.s32.totalorder %s38, 0
      %p279 = por %p277, %p278
      %p280 = scmp.ne.s32.totalorder %s269, %s272
      %p281 = scmp.eq.s32.totalorder %s43, 2
      %p282 = por %p280, %p281
      %p283 = scmp.ne.s32.totalorder %s272, %s273
      %p284 = scmp.eq.s32.totalorder %s43, 0
      %p285 = por %p283, %p284
      %p286 = scmp.ne.s32.totalorder %s272, %s273
      %p287 = scmp.eq.s32.totalorder %s44, 2
      %p288 = por %p286, %p287
      %p290 = scmp.ne.s32.totalorder %s273, %s289
      %p291 = scmp.eq.s32.totalorder %s44, 0
      %p292 = por %p290, %p291
      %s293 = ssub.s32 %s38, 1
      %p294 = scmp.gt.s32.totalorder %s293, 0
      %s295 = scalar_select %p294, %s293, 0
      %s296 = ssub.s32 %s45, 1
      %p297 = scmp.gt.s32.totalorder %s296, 0
      %s298 = scalar_select %p297, %s296, 0
      %s299 = ssub.s32 %s295, %s298
      %p300 = scmp.eq.s32.totalorder %s299, 0
      %s302 = sadd.s32 %s301, 1
      %s303 = scalar_select %p300, %s301, %s302
      %p306 = pneg %p300
      %p307 = scmp.eq.s32.totalorder %s38, 2
      %p308 = por %p306, %p307
      %p309 = scmp.ne.s32.totalorder %s301, %s304
      %p310 = scmp.eq.s32.totalorder %s38, 0
      %p311 = por %p309, %p310
      %p312 = scmp.ne.s32.totalorder %s301, %s304
      %p313 = scmp.eq.s32.totalorder %s43, 2
      %p314 = por %p312, %p313
      %p315 = scmp.ne.s32.totalorder %s304, %s305
      %p316 = scmp.eq.s32.totalorder %s43, 0
      %p317 = por %p315, %p316
      %p318 = scmp.ne.s32.totalorder %s304, %s305
      %p319 = scmp.eq.s32.totalorder %s44, 2
      %p320 = por %p318, %p319
      %p322 = scmp.ne.s32.totalorder %s305, %s321
      %p323 = scmp.eq.s32.totalorder %s44, 0
      %p324 = por %p322, %p323
      %s326 = sadd.s32 %s325, 1
      %p329 = scmp.eq.s32.totalorder %s38, 2
      %p330 = scmp.ne.s32.totalorder %s325, %s327
      %p331 = scmp.eq.s32.totalorder %s38, 0
      %p332 = por %p330, %p331
      %p333 = scmp.ne.s32.totalorder %s325, %s327
      %p334 = scmp.eq.s32.totalorder %s43, 2
      %p335 = por %p333, %p334
      %p336 = scmp.ne.s32.totalorder %s327, %s328
      %p337 = scmp.eq.s32.totalorder %s43, 0
      %p338 = por %p336, %p337
      %p339 = scmp.ne.s32.totalorder %s327, %s328
      %p340 = scmp.eq.s32.totalorder %s44, 2
      %p341 = por %p339, %p340
      %p343 = scmp.ne.s32.totalorder %s328, %s342
      %p344 = scmp.eq.s32.totalorder %s44, 0
      %p345 = por %p343, %p344
      %s347 = sadd.s32 %s346, 1
      %p350 = scmp.eq.s32.totalorder %s38, 2
      %p351 = scmp.ne.s32.totalorder %s346, %s348
      %p352 = scmp.eq.s32.totalorder %s38, 0
      %p353 = por %p351, %p352
      %p354 = scmp.ne.s32.totalorder %s346, %s348
      %p355 = scmp.eq.s32.totalorder %s43, 2
      %p356 = por %p354, %p355
      %p357 = scmp.ne.s32.totalorder %s348, %s349
      %p358 = scmp.eq.s32.totalorder %s43, 0
      %p359 = por %p357, %p358
      %p360 = scmp.ne.s32.totalorder %s348, %s349
      %p361 = scmp.eq.s32.totalorder %s44, 2
      %p362 = por %p360, %p361
      %p364 = scmp.ne.s32.totalorder %s349, %s363
      %p365 = scmp.eq.s32.totalorder %s44, 0
      %p366 = por %p364, %p365
      %p367 = scmp.le.s32.totalorder 1, %s38
      %p368 = scmp.lt.s32.totalorder %s38, 4
      %p369 = pnand %p367, %p368
      %p370 = pneg %p369
      // Predicated region
      $region9: #{forward.4} parent=5 // pred_check
        _
      $region10: #{forward.4} parent=5 // pred_check_branch
        %372 = sbr.rel (%p369) target = $region12
      $region11: #{forward.4} parent=5 // pred_region
        %s373 = ssub.s32 %s38, 1
        // Predicated region
        $region13: #{forward.4} parent=11 // pred_check
          %p374 = pneg %p259
        $region14: #{forward.4} parent=11 // pred_check_branch
          %376 = sbr.rel (%p374) target = $region16
        $region15: #{forward.4} parent=11 // pred_region
          %s378 = ssub.s32 256, 256
          %379 = vsyncadd [#allocation16], %s378
          %s380 = sshll.u32 [#allocation15], 4
          %s381 = int_to_ptr.vmem [resolvable:$true] %s380
          %386 = dma.hbm_to_vmem [thread:$0]  %s7, 256, %s381, [#allocation16], 128, 128, 8
        $region16: #{forward.4} parent=11 // pred_fallthru
          _
      $region12: #{forward.4} parent=5 // pred_fallthru
        _
      %p387 = scmp.lt.s32.totalorder %s38, 3
      // Predicated region
      $region17: #{forward.4} parent=5 // pred_check
        %p388 = pneg %p387
      $region18: #{forward.4} parent=5 // pred_check_branch
        %390 = sbr.rel (%p388) target = $region20
      $region19: #{forward.4} parent=5 // pred_region
        // Predicated region
        $region21: #{forward.4} parent=19 // pred_check
          %p391 = pneg %p58
        $region22: #{forward.4} parent=19 // pred_check_branch
          %393 = sbr.rel (%p391) target = $region24
        $region23: #{forward.4} parent=19 // pred_region
          %s394 = sand.u32 %s48, 1
          %s395 = scalar_lea.sflag [#allocation4], %s394
          %s396 = sand.u32 %s48, 1
          %s397 = smul.addr %s396, 8
          %s398 = scalar_lea.vmem [#allocation3], %s397
          %s400 = ssub.s32 128, 128
          %401 = vsyncadd %s395, %s400
          %s402 = smul.addr %s38, 2
          %s403 = smul.addr %s402, 64
          %s404 = scalar_lea.hbm %s0, %s403
          %s405 = sshll.u32 %s398, 4
          %s406 = int_to_ptr.vmem [resolvable:$true] %s405
          %411 = dma.hbm_to_vmem [thread:$0]  %s404, 128, %s406, %s395, 64, 64, 4
        $region24: #{forward.4} parent=19 // pred_fallthru
          _
        // Predicated region
        $region25: #{forward.4} parent=19 // pred_check
          %p412 = pneg %p90
        $region26: #{forward.4} parent=19 // pred_check_branch
          %414 = sbr.rel (%p412) target = $region28
        $region27: #{forward.4} parent=19 // pred_region
          %s415 = sand.u32 %s38, 1
          %s416 = scalar_lea.sflag [#allocation7], %s415
          %s417 = sand.u32 %s80, 1
          %s418 = smul.addr %s417, 8
          %s419 = scalar_lea.vmem [#allocation6], %s418
          %s420 = ssub.s32 %s38, 1
          %p421 = scmp.gt.s32.totalorder %s420, 0
          %s422 = scalar_select %p421, %s420, 0
          %s424 = ssub.s32 128, 128
          %425 = vsyncadd %s416, %s424
          %s426 = smul.addr %s422, 2
          %s427 = smul.addr %s426, 64
          %s428 = scalar_lea.hbm %s1, %s427
          %s429 = sshll.u32 %s419, 4
          %s430 = int_to_ptr.vmem [resolvable:$true] %s429
          %435 = dma.hbm_to_vmem [thread:$0]  %s428, 128, %s430, %s416, 64, 64, 4
        $region28: #{forward.4} parent=19 // pred_fallthru
          _
        // Predicated region
        $region29: #{forward.4} parent=19 // pred_check
          %p436 = pneg %p116
        $region30: #{forward.4} parent=19 // pred_check_branch
          %438 = sbr.rel (%p436) target = $region32
        $region31: #{forward.4} parent=19 // pred_region
          %s439 = sand.u32 %s38, 1
          %s440 = scalar_lea.sflag [#allocation7], %s439
          %s441 = sand.u32 %s106, 1
          %s442 = smul.addr %s441, 8
          %s443 = scalar_lea.vmem [#allocation8], %s442
          %s445 = ssub.s32 128, 128
          %446 = vsyncadd %s440, %s445
          %s447 = smul.addr %s38, 2
          %s448 = smul.addr %s447, 64
          %s449 = scalar_lea.hbm %s2, %s448
          %s450 = sshll.u32 %s443, 4
          %s451 = int_to_ptr.vmem [resolvable:$true] %s450
          %456 = dma.hbm_to_vmem [thread:$0]  %s449, 128, %s451, %s440, 64, 64, 4
        $region32: #{forward.4} parent=19 // pred_fallthru
          _
        // Predicated region
        $region33: #{forward.4} parent=19 // pred_check
          %p457 = pneg %p142
        $region34: #{forward.4} parent=19 // pred_check_branch
          %459 = sbr.rel (%p457) target = $region36
        $region35: #{forward.4} parent=19 // pred_region
          %s460 = sand.u32 %s38, 1
          %s461 = scalar_lea.sflag [#allocation10], %s460
          %s462 = sand.u32 %s132, 1
          %s463 = scalar_lea.vmem [#allocation9], %s462
          %s465 = ssub.s32 16, 16
          %466 = vsyncadd %s461, %s465
          %s467 = smul.addr %s38, 16
          %s468 = scalar_lea.hbm %s3, %s467
          %s470 = sshll.u32 %s463, 4
          %s471 = int_to_ptr.vmem [resolvable:$true] %s470
          %473 = dma.hbm_to_vmem [thread:$0]  %s468, 16, %s471, %s461
        $region36: #{forward.4} parent=19 // pred_fallthru
          _
        // Predicated region
        $region37: #{forward.4} parent=19 // pred_check
          %p474 = pneg %p174
        $region38: #{forward.4} parent=19 // pred_check_branch
          %476 = sbr.rel (%p474) target = $region40
        $region39: #{forward.4} parent=19 // pred_region
          %s477 = sand.u32 %s38, 1
          %s478 = scalar_lea.sflag [#allocation10], %s477
          %s479 = sand.u32 %s164, 1
          %s480 = smul.addr %s479, 16
          %s481 = scalar_lea.vmem [#allocation11], %s480
          %s482 = ssub.s32 %s38, 1
          %p483 = scmp.gt.s32.totalorder %s482, 0
          %s484 = scalar_select %p483, %s482, 0
          %s486 = ssub.s32 256, 256
          %487 = vsyncadd %s478, %s486
          %s488 = smul.addr %s484, 4
          %s489 = smul.addr %s488, 64
          %s490 = scalar_lea.hbm %s4, %s489
          %s491 = sshll.u32 %s481, 4
          %s492 = int_to_ptr.vmem [resolvable:$true] %s491
          %497 = dma.hbm_to_vmem [thread:$0]  %s490, 256, %s492, %s478, 64, 64, 4
        $region40: #{forward.4} parent=19 // pred_fallthru
          _
        // Predicated region
        $region41: #{forward.4} parent=19 // pred_check
          %p498 = pneg %p206
        $region42: #{forward.4} parent=19 // pred_check_branch
          %500 = sbr.rel (%p498) target = $region44
        $region43: #{forward.4} parent=19 // pred_region
          %s501 = sand.u32 %s38, 1
          %s502 = scalar_lea.sflag [#allocation13], %s501
          %s503 = sand.u32 %s196, 1
          %s504 = smul.addr %s503, 16
          %s505 = scalar_lea.vmem [#allocation12], %s504
          %s506 = ssub.s32 %s38, 1
          %p507 = scmp.gt.s32.totalorder %s506, 0
          %s508 = scalar_select %p507, %s506, 0
          %s510 = ssub.s32 256, 256
          %511 = vsyncadd %s502, %s510
          %s512 = smul.addr %s508, 4
          %s513 = smul.addr %s512, 64
          %s514 = scalar_lea.hbm %s5, %s513
          %s515 = sshll.u32 %s505, 4
          %s516 = int_to_ptr.vmem [resolvable:$true] %s515
          %521 = dma.hbm_to_vmem [thread:$0]  %s514, 256, %s516, %s502, 64, 64, 4
        $region44: #{forward.4} parent=19 // pred_fallthru
          _
        // Predicated region
        $region45: #{forward.4} parent=19 // pred_check
          %p522 = pneg %p232
        $region46: #{forward.4} parent=19 // pred_check_branch
          %524 = sbr.rel (%p522) target = $region48
        $region47: #{forward.4} parent=19 // pred_region
          %s525 = sand.u32 %s38, 1
          %s526 = scalar_lea.sflag [#allocation13], %s525
          %s527 = sand.u32 %s222, 1
          %s528 = smul.addr %s527, 8
          %s529 = scalar_lea.vmem [#allocation14], %s528
          %s531 = ssub.s32 128, 128
          %532 = vsyncadd %s526, %s531
          %s533 = smul.addr %s38, 2
          %s534 = smul.addr %s533, 64
          %s535 = scalar_lea.hbm %s6, %s534
          %s536 = sshll.u32 %s529, 4
          %s537 = int_to_ptr.vmem [resolvable:$true] %s536
          %542 = dma.hbm_to_vmem [thread:$0]  %s535, 128, %s537, %s526, 64, 64, 4
        $region48: #{forward.4} parent=19 // pred_fallthru
          _
      $region20: #{forward.4} parent=5 // pred_fallthru
        _
      %p543 = scmp.le.s32.totalorder 1, %s38
      %p544 = scmp.lt.s32.totalorder %s38, 4
      %p545 = pnand %p543, %p544
      %p546 = pneg %p545
      // Predicated region
      $region49: #{forward.4} parent=5 // pred_check
        _
      $region50: #{forward.4} parent=5 // pred_check_branch
        %548 = sbr.rel (%p545) target = $region52
      $region51: #{forward.4} parent=5 // pred_region
        %s549 = ssub.s32 %s38, 1
        %s550 = sand.u32 %s51, 1
        %s551 = scalar_lea.sflag [#allocation4], %s550
        %s552 = sand.u32 %s51, 1
        %s553 = smul.addr %s552, 8
        %s554 = scalar_lea.vmem [#allocation3], %s553
        // Predicated region
        $region53: #{forward.4} parent=51 // pred_check
          %p555 = pneg %p64
        $region54: #{forward.4} parent=51 // pred_check_branch
          %557 = sbr.rel (%p555) target = $region56
        $region55: #{forward.4} parent=51 // pred_region
          %558 = dma.done %s551, 128
        $region56: #{forward.4} parent=51 // pred_fallthru
          _
        %s559 = sand.u32 %s43, 1
        %s560 = scalar_lea.sflag [#allocation7], %s559
        %s561 = sand.u32 %s83, 1
        %s562 = smul.addr %s561, 8
        %s563 = scalar_lea.vmem [#allocation6], %s562
        // Predicated region
        $region57: #{forward.4} parent=51 // pred_check
          %p564 = pneg %p96
        $region58: #{forward.4} parent=51 // pred_check_branch
          %566 = sbr.rel (%p564) target = $region60
        $region59: #{forward.4} parent=51 // pred_region
          %567 = dma.done %s560, 128
        $region60: #{forward.4} parent=51 // pred_fallthru
          _
        %s568 = sand.u32 %s43, 1
        %s569 = scalar_lea.sflag [#allocation7], %s568
        %s570 = sand.u32 %s109, 1
        %s571 = smul.addr %s570, 8
        %s572 = scalar_lea.vmem [#allocation8], %s571
        // Predicated region
        $region61: #{forward.4} parent=51 // pred_check
          %p573 = pneg %p122
        $region62: #{forward.4} parent=51 // pred_check_branch
          %575 = sbr.rel (%p573) target = $region64
        $region63: #{forward.4} parent=51 // pred_region
          %576 = dma.done %s569, 128
        $region64: #{forward.4} parent=51 // pred_fallthru
          _
        %s577 = sand.u32 %s43, 1
        %s578 = scalar_lea.sflag [#allocation10], %s577
        %s579 = sand.u32 %s135, 1
        %s580 = scalar_lea.vmem [#allocation9], %s579
        // Predicated region
        $region65: #{forward.4} parent=51 // pred_check
          %p581 = pneg %p148
        $region66: #{forward.4} parent=51 // pred_check_branch
          %583 = sbr.rel (%p581) target = $region68
        $region67: #{forward.4} parent=51 // pred_region
          %584 = dma.done %s578, 16
        $region68: #{forward.4} parent=51 // pred_fallthru
          _
        %s585 = sand.u32 %s43, 1
        %s586 = scalar_lea.sflag [#allocation10], %s585
        %s587 = sand.u32 %s167, 1
        %s588 = smul.addr %s587, 16
        %s589 = scalar_lea.vmem [#allocation11], %s588
        // Predicated region
        $region69: #{forward.4} parent=51 // pred_check
          %p590 = pneg %p180
        $region70: #{forward.4} parent=51 // pred_check_branch
          %592 = sbr.rel (%p590) target = $region72
        $region71: #{forward.4} parent=51 // pred_region
          %593 = dma.done %s586, 256
        $region72: #{forward.4} parent=51 // pred_fallthru
          _
        %s594 = sand.u32 %s43, 1
        %s595 = scalar_lea.sflag [#allocation13], %s594
        %s596 = sand.u32 %s199, 1
        %s597 = smul.addr %s596, 16
        %s598 = scalar_lea.vmem [#allocation12], %s597
        // Predicated region
        $region73: #{forward.4} parent=51 // pred_check
          %p599 = pneg %p212
        $region74: #{forward.4} parent=51 // pred_check_branch
          %601 = sbr.rel (%p599) target = $region76
        $region75: #{forward.4} parent=51 // pred_region
          %602 = dma.done %s595, 256
        $region76: #{forward.4} parent=51 // pred_fallthru
          _
        %s603 = sand.u32 %s43, 1
        %s604 = scalar_lea.sflag [#allocation13], %s603
        %s605 = sand.u32 %s225, 1
        %s606 = smul.addr %s605, 8
        %s607 = scalar_lea.vmem [#allocation14], %s606
        // Predicated region
        $region77: #{forward.4} parent=51 // pred_check
          %p608 = pneg %p238
        $region78: #{forward.4} parent=51 // pred_check_branch
          %610 = sbr.rel (%p608) target = $region80
        $region79: #{forward.4} parent=51 // pred_region
          %611 = dma.done %s604, 128
        $region80: #{forward.4} parent=51 // pred_fallthru
          _
        // Predicated region
        $region81: #{forward.4} parent=51 // pred_check
          %p612 = pneg %p259
        $region82: #{forward.4} parent=51 // pred_check_branch
          %614 = sbr.rel (%p612) target = $region84
        $region83: #{forward.4} parent=51 // pred_region
          %615 = dma.done [#allocation16], 256
        $region84: #{forward.4} parent=51 // pred_fallthru
          _
        %s616 = sand.u32 %s51, 1
        %s617 = scalar_lea.sflag [#allocation4], %s616
        %s618 = sand.u32 %s51, 1
        %s619 = smul.addr %s618, 8
        %s620 = scalar_lea.vmem [#allocation3], %s619
        %p621 = pneg %p64
        %p622 = pneg %p61
        %s623 = sand.u32 %s43, 1
        %s624 = scalar_lea.sflag [#allocation7], %s623
        %s625 = sand.u32 %s83, 1
        %s626 = smul.addr %s625, 8
        %s627 = scalar_lea.vmem [#allocation6], %s626
        %p628 = pneg %p96
        %p629 = pneg %p93
        %s630 = sand.u32 %s43, 1
        %s631 = scalar_lea.sflag [#allocation7], %s630
        %s632 = sand.u32 %s109, 1
        %s633 = smul.addr %s632, 8
        %s634 = scalar_lea.vmem [#allocation8], %s633
        %p635 = pneg %p122
        %p636 = pneg %p119
        %s637 = sand.u32 %s43, 1
        %s638 = scalar_lea.sflag [#allocation10], %s637
        %s639 = sand.u32 %s135, 1
        %s640 = scalar_lea.vmem [#allocation9], %s639
        %p641 = pneg %p148
        %p642 = pneg %p145
        %s643 = sand.u32 %s43, 1
        %s644 = scalar_lea.sflag [#allocation10], %s643
        %s645 = sand.u32 %s167, 1
        %s646 = smul.addr %s645, 16
        %s647 = scalar_lea.vmem [#allocation11], %s646
        %p648 = pneg %p180
        %p649 = pneg %p177
        %s650 = sand.u32 %s43, 1
        %s651 = scalar_lea.sflag [#allocation13], %s650
        %s652 = sand.u32 %s199, 1
        %s653 = smul.addr %s652, 16
        %s654 = scalar_lea.vmem [#allocation12], %s653
        %p655 = pneg %p212
        %p656 = pneg %p209
        %s657 = sand.u32 %s43, 1
        %s658 = scalar_lea.sflag [#allocation13], %s657
        %s659 = sand.u32 %s225, 1
        %s660 = smul.addr %s659, 8
        %s661 = scalar_lea.vmem [#allocation14], %s660
        %p662 = pneg %p238
        %p663 = pneg %p235
        %p664 = pneg %p259
        %p665 = pneg %p256
        %p666 = pneg %p285
        %p667 = pneg %p282
        %s668 = sand.u32 %s272, 1
        %s669 = scalar_lea.sflag [#allocation5], %s668
        %s670 = sand.u32 %s272, 1
        %s671 = smul.addr %s670, 8
        %s672 = scalar_lea.vmem [#allocation17], %s671
        %p673 = pneg %p317
        %p674 = pneg %p314
        %s675 = sand.u32 %s43, 1
        %s676 = scalar_lea.sflag [#allocation19], %s675
        %s677 = sand.u32 %s304, 1
        %s678 = smul.addr %s677, 8
        %s679 = scalar_lea.vmem [#allocation18], %s678
        %p680 = pneg %p338
        %p681 = pneg %p335
        %p682 = pneg %p359
        %p683 = pneg %p356
        %s684 = ssub.s32 %s43, 1
        %p685 = scmp.gt.s32.totalorder %s684, 0
        %s686 = scalar_select %p685, %s684, 0
        %s687 = ssub.s32 %s43, 1
        %p688 = scmp.gt.s32.totalorder %s687, 0
        %s689 = scalar_select %p688, %s687, 0
        %s690 = ssub.s32 %s43, 1
        %p691 = scmp.gt.s32.totalorder %s690, 0
        %s692 = scalar_select %p691, %s690, 0
        %s693 = ssub.s32 %s43, 1
        %p694 = scmp.gt.s32.totalorder %s693, 0
        %s695 = scalar_select %p694, %s693, 0
        %p697 = scmp.eq.s32.totalorder %s43, 0
        // Predicated region
        $region85: #{forward.4} parent=51 // pred_check
          %p698 = pneg %p697
        $region86: #{forward.4} parent=51 // pred_check_branch
          %700 = sbr.rel (%p698) target = $region88
        $region87: #{forward.4} parent=51 // pred_region
          %vm701 = vcmask 261120
          %702 = vst.msk [vmem:[#allocation2] sm:$0xff] %vm701, 0.0
          %703 = vst.msk [vmem:[#allocation2 + $0x8] sm:$0xff] %vm701, 0.0
        $region88: #{forward.4} parent=51 // pred_fallthru
          _
        %p704 = scmp.lt.s32.totalorder %s43, 1
        // Predicated region
        $region89: #{forward.4} parent=51 // pred_check
          %p705 = pneg %p704
        $region90: #{forward.4} parent=51 // pred_check_branch
          %707 = sbr.rel (%p705) target = $region92
        $region91: #{forward.4} parent=51 // pred_region
          %v708 = vld [vmem:[%s554] sm:$0xf]
          %v709 = vld [vmem:[%s554 + $0x4] sm:$0xf]
          %v710 = vld [vmem:[%s572] sm:$0xf]
          %v711 = vld [vmem:[%s572 + $0x4] sm:$0xf]
          %v712 = vld [vmem:[%s580] sm:$0x1]
          %v714 = vlaneseq
          %v715 = vshrl.u32 %v714, 7
          %v716 = vsub.s32 0, %v715
          %v717 = vrot.slane %v712, %v716
          %v721 = vunpack.c.l.b16 %v708
          %v722 = vunpack.c.l.b16 %v709
          %v723 = vpack.c.b16 %v722, %v721
          %v726 = vunpack.c.l.b16 %v710
          %v727 = vunpack.c.l.b16 %v711
          %v728 = vpack.c.b16 %v727, %v726
          %vm730 = vcmask 130048
          %v732 = vsel %vm730, %v723, 0
          %734 = vmatprep.subr.bf16.mxu0 0
          %735 = vmatpush1.bf16.msra.mxu0 %v728
          %736 = vmatprep.subr.bf16.mxu0 0
          %737 = vmatpush1.bf16.msra.mxu0 0
          %738 = vmatprep.subr.bf16.mxu0 0
          %739 = vmatpush1.bf16.msra.mxu0 0
          %740 = vmatprep.subr.bf16.mxu0 0
          %741 = vmatpush1.bf16.msra.mxu0 0
          %742 = vmatprep.subr.bf16.mxu0 0
          %743 = vmatpush1.bf16.msra.mxu0 0
          %744 = vmatprep.subr.bf16.mxu0 0
          %745 = vmatpush1.bf16.msra.mxu0 0
          %746 = vmatprep.subr.bf16.mxu0 0
          %747 = vmatpush1.bf16.msra.mxu0 0
          %748 = vmatprep.subr.bf16.mxu0 0
          %749 = vmatpush1.bf16.msra.mxu0 0
          %750 = vmatprep.subr.bf16.mxu0 0
          %751 = vmatpush1.bf16.msra.mxu0 0
          %752 = vmatprep.subr.bf16.mxu0 0
          %753 = vmatpush1.bf16.msra.mxu0 0
          %754 = vmatprep.subr.bf16.mxu0 0
          %755 = vmatpush1.bf16.msra.mxu0 0
          %756 = vmatprep.subr.bf16.mxu0 0
          %757 = vmatpush1.bf16.msra.mxu0 0
          %758 = vmatprep.subr.bf16.mxu0 0
          %759 = vmatpush1.bf16.msra.mxu0 0
          %760 = vmatprep.subr.bf16.mxu0 0
          %761 = vmatpush1.bf16.msra.mxu0 0
          %762 = vmatprep.subr.bf16.mxu0 0
          %763 = vmatpush1.bf16.msra.mxu0 0
          %764 = vmatprep.subr.bf16.mxu0 0
          %765 = vmatpush1.bf16.msra.mxu0 0
          %766 = vmatprep.mubr.bf16.mxu0 0
          %767 = vmatmul.mubr.bf16.gmra.mrb[0].mxu0 %v732
          %v768 = vpop.f32.mrb[0].mxu0
          %v769 = vadd.f32 %v717, %v768
          %v770 = vpop.f32.mrb[0].mxu0
          %v771 = vpop.f32.mrb[0].mxu0
          %v772 = vadd.f32 %v717, %v771
          %v773 = vpop.f32.mrb[0].mxu0
          %774 = vdwg.mxu0
          %v775 = vmul.f32 %v769, 0.999995
          %v776 = vmul.f32 %v772, 0.999995
          %v777 = vmax.f32 %v775, 0.0
          %v778 = vmax.f32 %v776, 0.0
          %v779 = vpack.c.bf16 %v778, %v777
          %vm780 = vcmask 261120
          %781 = vst.msk [vmem:[%s672] sm:$0xff] %vm780, %v779
          %v782 = vld [vmem:[#allocation2] sm:$0xff]
          %v783 = vld [vmem:[#allocation2 + $0x8] sm:$0xff]
          %v784 = vld [vmem:[%s607] sm:$0xf]
          %v785 = vld [vmem:[%s607 + $0x4] sm:$0xf]
          %v788 = vunpack.c.l.b16 %v784
          %v789 = vunpack.c.l.b16 %v785
          %v790 = vpack.c.b16 %v789, %v788
          %792 = vmatprep.subr.bf16.mxu0 0
          %793 = vmatpush1.bf16.msra.mxu0 %v790
          %794 = vmatprep.subr.bf16.mxu0 0
          %795 = vmatpush1.bf16.msra.mxu0 0
          %796 = vmatprep.subr.bf16.mxu0 0
          %797 = vmatpush1.bf16.msra.mxu0 0
          %798 = vmatprep.subr.bf16.mxu0 0
          %799 = vmatpush1.bf16.msra.mxu0 0
          %800 = vmatprep.subr.bf16.mxu0 0
          %801 = vmatpush1.bf16.msra.mxu0 0
          %802 = vmatprep.subr.bf16.mxu0 0
          %803 = vmatpush1.bf16.msra.mxu0 0
          %804 = vmatprep.subr.bf16.mxu0 0
          %805 = vmatpush1.bf16.msra.mxu0 0
          %806 = vmatprep.subr.bf16.mxu0 0
          %807 = vmatpush1.bf16.msra.mxu0 0
          %808 = vmatprep.subr.bf16.mxu0 0
          %809 = vmatpush1.bf16.msra.mxu0 0
          %810 = vmatprep.subr.bf16.mxu0 0
          %811 = vmatpush1.bf16.msra.mxu0 0
          %812 = vmatprep.subr.bf16.mxu0 0
          %813 = vmatpush1.bf16.msra.mxu0 0
          %814 = vmatprep.subr.bf16.mxu0 0
          %815 = vmatpush1.bf16.msra.mxu0 0
          %816 = vmatprep.subr.bf16.mxu0 0
          %817 = vmatpush1.bf16.msra.mxu0 0
          %818 = vmatprep.subr.bf16.mxu0 0
          %819 = vmatpush1.bf16.msra.mxu0 0
          %820 = vmatprep.subr.bf16.mxu0 0
          %821 = vmatpush1.bf16.msra.mxu0 0
          %822 = vmatprep.subr.bf16.mxu0 0
          %823 = vmatpush1.bf16.msra.mxu0 0
          %824 = vmatprep.mubr.bf16.mxu0 0
          %825 = vmatmul.mubr.bf16.gmra.mrb[0].mxu0 %v732
          %v826 = vpop.f32.mrb[0].mxu0
          %v827 = vadd.f32 0.0, %v826
          %v828 = vpop.f32.mrb[0].mxu0
          %v829 = vpop.f32.mrb[0].mxu0
          %v830 = vadd.f32 0.0, %v829
          %v831 = vpop.f32.mrb[0].mxu0
          %832 = vdwg.mxu0
          %v833 = vadd.f32 %v782, %v827
          %v834 = vadd.f32 %v783, %v830
          %835 = vst.msk [vmem:[#allocation2] sm:$0xff] %vm780, %v833
          %836 = vst.msk [vmem:[#allocation2 + $0x8] sm:$0xff] %vm780, %v834
        $region92: #{forward.4} parent=51 // pred_fallthru
          _
        %p837 = scmp.ge.s32.totalorder %s43, 1
        // Predicated region
        $region93: #{forward.4} parent=51 // pred_check
          %p838 = pneg %p837
        $region94: #{forward.4} parent=51 // pred_check_branch
          %840 = sbr.rel (%p838) target = $region96
        $region95: #{forward.4} parent=51 // pred_region
          %v841 = vld [vmem:[%s563] sm:$0xf]
          %v842 = vld [vmem:[%s563 + $0x4] sm:$0xf]
          %v843 = vld [vmem:[%s572] sm:$0xf]
          %v844 = vld [vmem:[%s572 + $0x4] sm:$0xf]
          %v845 = vld [vmem:[%s580] sm:$0x1]
          %v847 = vlaneseq
          %v848 = vshrl.u32 %v847, 7
          %v849 = vsub.s32 0, %v848
          %v850 = vrot.slane %v845, %v849
          %v854 = vunpack.c.l.b16 %v841
          %v855 = vunpack.c.l.b16 %v842
          %v856 = vpack.c.b16 %v855, %v854
          %v859 = vunpack.c.l.b16 %v843
          %v860 = vunpack.c.l.b16 %v844
          %v861 = vpack.c.b16 %v860, %v859
          %vm863 = vcmask 130048
          %v865 = vsel %vm863, %v856, 0
          %867 = vmatprep.subr.bf16.mxu0 0
          %868 = vmatpush1.bf16.msra.mxu0 %v861
          %869 = vmatprep.subr.bf16.mxu0 0
          %870 = vmatpush1.bf16.msra.mxu0 0
          %871 = vmatprep.subr.bf16.mxu0 0
          %872 = vmatpush1.bf16.msra.mxu0 0
          %873 = vmatprep.subr.bf16.mxu0 0
          %874 = vmatpush1.bf16.msra.mxu0 0
          %875 = vmatprep.subr.bf16.mxu0 0
          %876 = vmatpush1.bf16.msra.mxu0 0
          %877 = vmatprep.subr.bf16.mxu0 0
          %878 = vmatpush1.bf16.msra.mxu0 0
          %879 = vmatprep.subr.bf16.mxu0 0
          %880 = vmatpush1.bf16.msra.mxu0 0
          %881 = vmatprep.subr.bf16.mxu0 0
          %882 = vmatpush1.bf16.msra.mxu0 0
          %883 = vmatprep.subr.bf16.mxu0 0
          %884 = vmatpush1.bf16.msra.mxu0 0
          %885 = vmatprep.subr.bf16.mxu0 0
          %886 = vmatpush1.bf16.msra.mxu0 0
          %887 = vmatprep.subr.bf16.mxu0 0
          %888 = vmatpush1.bf16.msra.mxu0 0
          %889 = vmatprep.subr.bf16.mxu0 0
          %890 = vmatpush1.bf16.msra.mxu0 0
          %891 = vmatprep.subr.bf16.mxu0 0
          %892 = vmatpush1.bf16.msra.mxu0 0
          %893 = vmatprep.subr.bf16.mxu0 0
          %894 = vmatpush1.bf16.msra.mxu0 0
          %895 = vmatprep.subr.bf16.mxu0 0
          %896 = vmatpush1.bf16.msra.mxu0 0
          %897 = vmatprep.subr.bf16.mxu0 0
          %898 = vmatpush1.bf16.msra.mxu0 0
          %899 = vmatprep.mubr.bf16.mxu0 0
          %900 = vmatmul.mubr.bf16.gmra.mrb[0].mxu0 %v865
          %v901 = vpop.f32.mrb[0].mxu0
          %v902 = vadd.f32 %v850, %v901
          %v903 = vpop.f32.mrb[0].mxu0
          %v904 = vpop.f32.mrb[0].mxu0
          %v905 = vadd.f32 %v850, %v904
          %v906 = vpop.f32.mrb[0].mxu0
          %907 = vdwg.mxu0
          %v908 = vmul.f32 %v902, 0.999995
          %v909 = vmul.f32 %v905, 0.999995
          %v910 = vmax.f32 %v908, 0.0
          %v911 = vmax.f32 %v909, 0.0
          %v912 = vpack.c.bf16 %v911, %v910
          %vm913 = vcmask 261120
          %914 = vst.msk [vmem:[%s672] sm:$0xff] %vm913, %v912
          %v915 = vld [vmem:[%s589] sm:$0xf]
          %v916 = vld [vmem:[%s589 + $0x4] sm:$0xf]
          %v917 = vld [vmem:[%s589 + $0x8] sm:$0xf]
          %v918 = vld [vmem:[%s589 + $0xc] sm:$0xf]
          %v923 = vunpack.c.l.b16 %v915
          %v924 = vunpack.c.l.b16 %v916
          %v925 = vunpack.c.l.b16 %v917
          %v926 = vunpack.c.l.b16 %v918
          %v927 = vpack.c.b16 %v924, %v923
          %v928 = vpack.c.b16 %v926, %v925
          %v932 = vsel %vm913, %v912, 0
          %934 = vmatprep.subr.bf16.mxu0 0
          %935 = vmatpush1.bf16.msra.mxu0 %v927
          %936 = vmatprep.subr.bf16.mxu0 0
          %937 = vmatpush1.bf16.msra.mxu0 %v928
          %938 = vmatprep.subr.bf16.mxu0 0
          %939 = vmatpush1.bf16.msra.mxu0 0
          %940 = vmatprep.subr.bf16.mxu0 0
          %941 = vmatpush1.bf16.msra.mxu0 0
          %942 = vmatprep.subr.bf16.mxu0 0
          %943 = vmatpush1.bf16.msra.mxu0 0
          %944 = vmatprep.subr.bf16.mxu0 0
          %945 = vmatpush1.bf16.msra.mxu0 0
          %946 = vmatprep.subr.bf16.mxu0 0
          %947 = vmatpush1.bf16.msra.mxu0 0
          %948 = vmatprep.subr.bf16.mxu0 0
          %949 = vmatpush1.bf16.msra.mxu0 0
          %950 = vmatprep.subr.bf16.mxu0 0
          %951 = vmatpush1.bf16.msra.mxu0 0
          %952 = vmatprep.subr.bf16.mxu0 0
          %953 = vmatpush1.bf16.msra.mxu0 0
          %954 = vmatprep.subr.bf16.mxu0 0
          %955 = vmatpush1.bf16.msra.mxu0 0
          %956 = vmatprep.subr.bf16.mxu0 0
          %957 = vmatpush1.bf16.msra.mxu0 0
          %958 = vmatprep.subr.bf16.mxu0 0
          %959 = vmatpush1.bf16.msra.mxu0 0
          %960 = vmatprep.subr.bf16.mxu0 0
          %961 = vmatpush1.bf16.msra.mxu0 0
          %962 = vmatprep.subr.bf16.mxu0 0
          %963 = vmatpush1.bf16.msra.mxu0 0
          %964 = vmatprep.subr.bf16.mxu0 0
          %965 = vmatpush1.bf16.msra.mxu0 0
          %966 = vmatprep.mubr.bf16.mxu0 0
          %967 = vmatmul.mubr.bf16.gmra.mrb[0].mxu0 %v932
          %v968 = vpop.f32.mrb[0].mxu0
          %v969 = vadd.f32 0.0, %v968
          %v970 = vpop.f32.mrb[0].mxu0
          %v971 = vpop.f32.mrb[0].mxu0
          %v972 = vadd.f32 0.0, %v971
          %v973 = vpop.f32.mrb[0].mxu0
          %974 = vdwg.mxu0
          %v975 = vld [vmem:[%s598] sm:$0xf]
          %v976 = vld [vmem:[%s598 + $0x4] sm:$0xf]
          %v977 = vld [vmem:[%s598 + $0x8] sm:$0xf]
          %v978 = vld [vmem:[%s598 + $0xc] sm:$0xf]
          %v983 = vunpack.c.l.b16 %v975
          %v984 = vunpack.c.l.b16 %v976
          %v985 = vunpack.c.l.b16 %v977
          %v986 = vunpack.c.l.b16 %v978
          %v987 = vpack.c.b16 %v984, %v983
          %v988 = vpack.c.b16 %v986, %v985
          %991 = vmatprep.subr.bf16.mxu0 0
          %992 = vmatpush1.bf16.msra.mxu0 %v987
          %993 = vmatprep.subr.bf16.mxu0 0
          %994 = vmatpush1.bf16.msra.mxu0 %v988
          %995 = vmatprep.subr.bf16.mxu0 0
          %996 = vmatpush1.bf16.msra.mxu0 0
          %997 = vmatprep.subr.bf16.mxu0 0
          %998 = vmatpush1.bf16.msra.mxu0 0
          %999 = vmatprep.subr.bf16.mxu0 0
          %1000 = vmatpush1.bf16.msra.mxu0 0
          %1001 = vmatprep.subr.bf16.mxu0 0
          %1002 = vmatpush1.bf16.msra.mxu0 0
          %1003 = vmatprep.subr.bf16.mxu0 0
          %1004 = vmatpush1.bf16.msra.mxu0 0
          %1005 = vmatprep.subr.bf16.mxu0 0
          %1006 = vmatpush1.bf16.msra.mxu0 0
          %1007 = vmatprep.subr.bf16.mxu0 0
          %1008 = vmatpush1.bf16.msra.mxu0 0
          %1009 = vmatprep.subr.bf16.mxu0 0
          %1010 = vmatpush1.bf16.msra.mxu0 0
          %1011 = vmatprep.subr.bf16.mxu0 0
          %1012 = vmatpush1.bf16.msra.mxu0 0
          %1013 = vmatprep.subr.bf16.mxu0 0
          %1014 = vmatpush1.bf16.msra.mxu0 0
          %1015 = vmatprep.subr.bf16.mxu0 0
          %1016 = vmatpush1.bf16.msra.mxu0 0
          %1017 = vmatprep.subr.bf16.mxu0 0
          %1018 = vmatpush1.bf16.msra.mxu0 0
          %1019 = vmatprep.subr.bf16.mxu0 0
          %1020 = vmatpush1.bf16.msra.mxu0 0
          %1021 = vmatprep.subr.bf16.mxu0 0
          %1022 = vmatpush1.bf16.msra.mxu0 0
          %1023 = vmatprep.mubr.bf16.mxu0 0
          %1024 = vmatmul.mubr.bf16.gmra.mrb[0].mxu0 %v932
          %v1025 = vpop.f32.mrb[0].mxu0
          %v1026 = vadd.f32 0.0, %v1025
          %v1027 = vpop.f32.mrb[0].mxu0
          %v1028 = vpop.f32.mrb[0].mxu0
          %v1029 = vadd.f32 0.0, %v1028
          %v1030 = vpop.f32.mrb[0].mxu0
          %1031 = vdwg.mxu0
          %v1032 = vpack.c.bf16 %v1029, %v1026
          %v1033 = vpack.c.bf16 %v972, %v969
          %v1035 = vsel %vm863, %v1032, 0
          %v1038 = vsel %vm863, %v1033, 0
          %1040 = vmatprep.subr.bf16.mxu0 0
          %1041 = vmatpush1.bf16.xpose.msra.mxu0 %v1038
          %1042 = vmatprep.subr.bf16.mxu0 0
          %1043 = vmatpush1.bf16.xpose.msra.mxu0 0
          %1044 = vmatprep.subr.bf16.mxu0 0
          %1045 = vmatpush1.bf16.xpose.msra.mxu0 0
          %1046 = vmatprep.subr.bf16.mxu0 0
          %1047 = vmatpush1.bf16.xpose.msra.mxu0 0
          %1048 = vmatprep.subr.bf16.mxu0 0
          %1049 = vmatpush1.bf16.xpose.msra.mxu0 0
          %1050 = vmatprep.subr.bf16.mxu0 0
          %1051 = vmatpush1.bf16.xpose.msra.mxu0 0
          %1052 = vmatprep.subr.bf16.mxu0 0
          %1053 = vmatpush1.bf16.xpose.msra.mxu0 0
          %1054 = vmatprep.subr.bf16.mxu0 0
          %1055 = vmatpush1.bf16.xpose.msra.mxu0 0
          %1056 = vmatprep.subr.bf16.mxu0 0
          %1057 = vmatpush1.bf16.xpose.msra.mxu0 0
          %1058 = vmatprep.subr.bf16.mxu0 0
          %1059 = vmatpush1.bf16.xpose.msra.mxu0 0
          %1060 = vmatprep.subr.bf16.mxu0 0
          %1061 = vmatpush1.bf16.xpose.msra.mxu0 0
          %1062 = vmatprep.subr.bf16.mxu0 0
          %1063 = vmatpush1.bf16.xpose.msra.mxu0 0
          %1064 = vmatprep.subr.bf16.mxu0 0
          %1065 = vmatpush1.bf16.xpose.msra.mxu0 0
          %1066 = vmatprep.subr.bf16.mxu0 0
          %1067 = vmatpush1.bf16.xpose.msra.mxu0 0
          %1068 = vmatprep.subr.bf16.mxu0 0
          %1069 = vmatpush1.bf16.xpose.msra.mxu0 0
          %1070 = vmatprep.subr.bf16.mxu0 0
          %1071 = vmatpush1.bf16.xpose.msra.mxu0 0
          %1072 = vmatprep.mubr.bf16.mxu0 0
          %1073 = vmatmul.mubr.bf16.gmra.mrb[0].mxu0 %v1035
          %v1074 = vpop.f32.mrb[0].mxu0
          %v1075 = vadd.f32 0.0, %v1074
          %v1076 = vpop.f32.mrb[0].mxu0
          %v1077 = vpop.f32.mrb[0].mxu0
          %v1078 = vadd.f32 0.0, %v1077
          %v1079 = vpop.f32.mrb[0].mxu0
          %1080 = vdwg.mxu0
          %v1081 = vlaneseq
          %v1082 = vshrl.u32 %v1081, 7
          %v1083 = vadd.s32 %v1082, 8
          %v1084 = vlaneseq
          %v1085 = vand.u32 %v1084, 127
          %v1086 = vsub.s32 %v1082, %v1085
          %v1087 = vsub.s32 %v1083, %v1085
          %vm1088 = vcmp.lt.s32.totalorder %v1086, 0
          %v1089 = vsub.s32 0, %v1086
          %v1090 = vsel %vm1088, %v1089, %v1086
          %vm1091 = vcmp.lt.s32.totalorder %v1087, 0
          %v1092 = vsub.s32 0, %v1087
          %v1093 = vsel %vm1091, %v1092, %v1087
          %vm1094 = vcmp.le.s32.totalorder %v1090, 4
          %vm1095 = vcmp.le.s32.totalorder %v1093, 4
          %v1096 = vsel %vm1094, %v1075, -1e+30
          %v1097 = vsel %vm1095, %v1078, -1e+30
          %v1098 = vsel %vm863, %v1096, -inf
          %v1099 = vsel %vm863, %v1097, -inf
          %v1100 = vmax.f32 %v1098, %v1099
          %v1101 = vrot.slane %v1100, 4
          %v1102 = vmax.f32 %v1100, %v1101
          %v1103 = vrot.slane %v1102, 2
          %v1104 = vmax.f32 %v1102, %v1103
          %v1105 = vrot.slane %v1104, 1
          %v1106 = vmax.f32 %v1104, %v1105
          %vm1107 = vcmp.ge.f32.partialorder %v1096, %v1106
          %vm1108 = vcmp.ge.f32.partialorder %v1097, %v1106
          %v1109 = vsel %vm1107, -1e+30, %v1096
          %v1110 = vsel %vm1108, -1e+30, %v1097
          %v1111 = vsel %vm863, %v1109, -inf
          %v1112 = vsel %vm863, %v1110, -inf
          %v1113 = vmax.f32 %v1111, %v1112
          %v1114 = vrot.slane %v1113, 4
          %v1115 = vmax.f32 %v1113, %v1114
          %v1116 = vrot.slane %v1115, 2
          %v1117 = vmax.f32 %v1115, %v1116
          %v1118 = vrot.slane %v1117, 1
          %v1119 = vmax.f32 %v1117, %v1118
          %vm1120 = vcmp.ge.f32.partialorder %v1109, %v1119
          %vm1121 = vcmp.ge.f32.partialorder %v1110, %v1119
          %v1122 = vsel %vm1120, -1e+30, %v1109
          %v1123 = vsel %vm1121, -1e+30, %v1110
          %v1124 = vsel %vm863, %v1122, -inf
          %v1125 = vsel %vm863, %v1123, -inf
          %v1126 = vmax.f32 %v1124, %v1125
          %v1127 = vrot.slane %v1126, 4
          %v1128 = vmax.f32 %v1126, %v1127
          %v1129 = vrot.slane %v1128, 2
          %v1130 = vmax.f32 %v1128, %v1129
          %v1131 = vrot.slane %v1130, 1
          %v1132 = vmax.f32 %v1130, %v1131
          %vm1133 = vcmp.ge.f32.partialorder %v1096, %v1132
          %vm1134 = vcmp.ge.f32.partialorder %v1097, %v1132
          %vm1135 = vmand %vm1133, %vm1094
          %vm1136 = vmand %vm1134, %vm1095
          %v1137 = vld [vmem:[%s554] sm:$0xf]
          %v1138 = vld [vmem:[%s554 + $0x4] sm:$0xf]
          %v1139 = vunpack.c.l.bf16 %v1137
          %v1140 = vunpack.c.l.bf16 %v1138
          %v1141 = vsel %vm1135, 1, 0
          %v1142 = vsel %vm1136, 1, 0
          %v1143 = vcvt.s32.f32 %v1141
          %v1144 = vcvt.s32.f32 %v1142
          %v1145 = vmax.f32 %v1139, %v1143
          %v1146 = vmax.f32 %v1140, %v1144
          %v1147 = vpack.c.bf16 %v1146, %v1145
          %v1149 = vunpack.c.l.b16 %v1147
          %v1150 = vunpack.c.h.b16 %v1147
          %v1151 = vpack.c.b16 %v1149, %v1149
          %v1152 = vpack.c.b16 %v1150, %v1150
          %vm1155 = vcmask 125952
          %1156 = vst.msk [vmem:[%s679] sm:$0xf] %vm1155, %v1151
          %1157 = vst.msk [vmem:[%s679 + $0x4] sm:$0xf] %vm1155, %v1152
          %v1158 = vld [vmem:[#allocation2] sm:$0xff]
          %v1159 = vld [vmem:[#allocation2 + $0x8] sm:$0xff]
          %v1160 = vld [vmem:[%s607] sm:$0xf]
          %v1161 = vld [vmem:[%s607 + $0x4] sm:$0xf]
          %v1164 = vunpack.c.l.b16 %v1160
          %v1165 = vunpack.c.l.b16 %v1161
          %v1166 = vpack.c.b16 %v1165, %v1164
          %v1169 = vsel %vm863, %v1147, 0
          %1171 = vmatprep.subr.bf16.mxu0 0
          %1172 = vmatpush1.bf16.msra.mxu0 %v1166
          %1173 = vmatprep.subr.bf16.mxu0 0
          %1174 = vmatpush1.bf16.msra.mxu0 0
          %1175 = vmatprep.subr.bf16.mxu0 0
          %1176 = vmatpush1.bf16.msra.mxu0 0
          %1177 = vmatprep.subr.bf16.mxu0 0
          %1178 = vmatpush1.bf16.msra.mxu0 0
          %1179 = vmatprep.subr.bf16.mxu0 0
          %1180 = vmatpush1.bf16.msra.mxu0 0
          %1181 = vmatprep.subr.bf16.mxu0 0
          %1182 = vmatpush1.bf16.msra.mxu0 0
          %1183 = vmatprep.subr.bf16.mxu0 0
          %1184 = vmatpush1.bf16.msra.mxu0 0
          %1185 = vmatprep.subr.bf16.mxu0 0
          %1186 = vmatpush1.bf16.msra.mxu0 0
          %1187 = vmatprep.subr.bf16.mxu0 0
          %1188 = vmatpush1.bf16.msra.mxu0 0
          %1189 = vmatprep.subr.bf16.mxu0 0
          %1190 = vmatpush1.bf16.msra.mxu0 0
          %1191 = vmatprep.subr.bf16.mxu0 0
          %1192 = vmatpush1.bf16.msra.mxu0 0
          %1193 = vmatprep.subr.bf16.mxu0 0
          %1194 = vmatpush1.bf16.msra.mxu0 0
          %1195 = vmatprep.subr.bf16.mxu0 0
          %1196 = vmatpush1.bf16.msra.mxu0 0
          %1197 = vmatprep.subr.bf16.mxu0 0
          %1198 = vmatpush1.bf16.msra.mxu0 0
          %1199 = vmatprep.subr.bf16.mxu0 0
          %1200 = vmatpush1.bf16.msra.mxu0 0
          %1201 = vmatprep.subr.bf16.mxu0 0
          %1202 = vmatpush1.bf16.msra.mxu0 0
          %1203 = vmatprep.mubr.bf16.mxu0 0
          %1204 = vmatmul.mubr.bf16.gmra.mrb[0].mxu0 %v1169
          %v1205 = vpop.f32.mrb[0].mxu0
          %v1206 = vadd.f32 0.0, %v1205
          %v1207 = vpop.f32.mrb[0].mxu0
          %v1208 = vpop.f32.mrb[0].mxu0
          %v1209 = vadd.f32 0.0, %v1208
          %v1210 = vpop.f32.mrb[0].mxu0
          %1211 = vdwg.mxu0
          %v1212 = vadd.f32 %v1158, %v1206
          %v1213 = vadd.f32 %v1159, %v1209
          %1214 = vst.msk [vmem:[#allocation2] sm:$0xff] %vm913, %v1212
          %1215 = vst.msk [vmem:[#allocation2 + $0x8] sm:$0xff] %vm913, %v1213
        $region96: #{forward.4} parent=51 // pred_fallthru
          _
        %p1216 = scmp.eq.s32.totalorder %s43, 2
        // Predicated region
        $region97: #{forward.4} parent=51 // pred_check
          %p1217 = pneg %p1216
        $region98: #{forward.4} parent=51 // pred_check_branch
          %1219 = sbr.rel (%p1217) target = $region100
        $region99: #{forward.4} parent=51 // pred_region
          %v1220 = vld [vmem:[#allocation2] sm:$0xff]
          %v1221 = vld [vmem:[#allocation2 + $0x8] sm:$0xff]
          %v1222 = vld [vmem:[#allocation15] sm:$0xff]
          %v1223 = vld [vmem:[#allocation15 + $0x8] sm:$0xff]
          %v1224 = vadd.f32 %v1220, %v1222
          %v1225 = vadd.f32 %v1221, %v1223
          %v1226 = vmul.f32 %v1224, 0.999995
          %v1227 = vmul.f32 %v1225, 0.999995
          %v1228 = vmax.f32 %v1226, 0.0
          %v1229 = vmax.f32 %v1227, 0.0
          %vm1230 = vcmask 261120
          %1231 = vst.msk [vmem:[#allocation20] sm:$0xff] %vm1230, %v1228
          %1232 = vst.msk [vmem:[#allocation20 + $0x8] sm:$0xff] %vm1230, %v1229
          %v1233 = vsel %vm1230, %v1228, 0.0
          %v1234 = vsel %vm1230, %v1229, 0.0
          %v1235 = vadd.f32 %v1233, %v1234
          %v1236 = vrot.slane %v1235, 4
          %v1237 = vadd.f32 %v1235, %v1236
          %v1238 = vrot.slane %v1237, 2
          %v1239 = vadd.f32 %v1237, %v1238
          %v1240 = vrot.slane %v1239, 1
          %v1241 = vadd.f32 %v1239, %v1240
          %vm1242 = vcmask 253952
          %1243 = vst.msk [vmem:[#allocation21] sm:$0x1] %vm1242, %v1241
        $region100: #{forward.4} parent=51 // pred_fallthru
          _
        %s1244 = sand.u32 %s272, 1
        %s1245 = scalar_lea.sflag [#allocation5], %s1244
        %s1246 = sand.u32 %s272, 1
        %s1247 = smul.addr %s1246, 8
        %s1248 = scalar_lea.vmem [#allocation17], %s1247
        %s1249 = sand.u32 %s43, 1
        %s1250 = scalar_lea.sflag [#allocation19], %s1249
        %s1251 = sand.u32 %s304, 1
        %s1252 = smul.addr %s1251, 8
        %s1253 = scalar_lea.vmem [#allocation18], %s1252
        // Predicated region
        $region101: #{forward.4} parent=51 // pred_check
          %p1254 = pneg %p282
        $region102: #{forward.4} parent=51 // pred_check_branch
          %1256 = sbr.rel (%p1254) target = $region104
        $region103: #{forward.4} parent=51 // pred_region
          %s1258 = ssub.s32 128, 128
          %1259 = vsyncadd %s1245, %s1258
          %s1260 = smul.addr %s43, 128
          %s1261 = scalar_lea.hbm %s8, %s1260
          %s1263 = sshll.u32 %s1248, 4
          %s1264 = int_to_ptr.vmem [resolvable:$true] %s1263
          %1266 = dma.vmem_to_hbm [thread:$0]  %s1264, 128, %s1261, %s1245
        $region104: #{forward.4} parent=51 // pred_fallthru
          _
        // Predicated region
        $region105: #{forward.4} parent=51 // pred_check
          %p1267 = pneg %p314
        $region106: #{forward.4} parent=51 // pred_check_branch
          %1269 = sbr.rel (%p1267) target = $region108
        $region107: #{forward.4} parent=51 // pred_region
          %s1270 = ssub.s32 %s43, 1
          %p1271 = scmp.gt.s32.totalorder %s1270, 0
          %s1272 = scalar_select %p1271, %s1270, 0
          %s1274 = ssub.s32 128, 128
          %1275 = vsyncadd %s1250, %s1274
          %s1276 = smul.addr %s1272, 2
          %s1277 = smul.addr %s1276, 64
          %s1278 = scalar_lea.hbm %s9, %s1277
          %s1279 = sshll.u32 %s1253, 4
          %s1280 = int_to_ptr.vmem [resolvable:$true] %s1279
          %1285 = dma.vmem_to_hbm [thread:$0]  %s1280, 128, %s1278, %s1250, 64, 64, 4
        $region108: #{forward.4} parent=51 // pred_fallthru
          _
        // Predicated region
        $region109: #{forward.4} parent=51 // pred_check
          %p1286 = pneg %p335
        $region110: #{forward.4} parent=51 // pred_check_branch
          %1288 = sbr.rel (%p1286) target = $region112
        $region111: #{forward.4} parent=51 // pred_region
          %s1290 = ssub.s32 256, 256
          %1291 = vsyncadd [#allocation19], %s1290
          %s1292 = sshll.u32 [#allocation20], 4
          %s1293 = int_to_ptr.vmem [resolvable:$true] %s1292
          %1298 = dma.vmem_to_hbm [thread:$0]  %s1293, 256, %s10, [#allocation19], 128, 128, 8
        $region112: #{forward.4} parent=51 // pred_fallthru
          _
        // Predicated region
        $region113: #{forward.4} parent=51 // pred_check
          %p1299 = pneg %p356
        $region114: #{forward.4} parent=51 // pred_check_branch
          %1301 = sbr.rel (%p1299) target = $region116
        $region115: #{forward.4} parent=51 // pred_region
          %s1303 = ssub.s32 16, 16
          %1304 = vsyncadd [#allocation22], %s1303
          %s1306 = sshll.u32 [#allocation21], 4
          %s1307 = int_to_ptr.vmem [resolvable:$true] %s1306
          %1309 = dma.vmem_to_hbm [thread:$0]  %s1307, 16, %s11, [#allocation22]
        $region116: #{forward.4} parent=51 // pred_fallthru
          _
        // Predicated region
        $region117: #{forward.4} parent=51 // pred_check
          %p1310 = pneg %p335
        $region118: #{forward.4} parent=51 // pred_check_branch
          %1312 = sbr.rel (%p1310) target = $region120
        $region119: #{forward.4} parent=51 // pred_region
          %1313 = dma.done [#allocation19], 256
        $region120: #{forward.4} parent=51 // pred_fallthru
          _
        // Predicated region
        $region121: #{forward.4} parent=51 // pred_check
          %p1314 = pneg %p356
        $region122: #{forward.4} parent=51 // pred_check_branch
          %1316 = sbr.rel (%p1314) target = $region124
        $region123: #{forward.4} parent=51 // pred_region
          %1317 = dma.done [#allocation22], 16
        $region124: #{forward.4} parent=51 // pred_fallthru
          _
      $region52: #{forward.4} parent=5 // pred_fallthru
        _
      %p1318 = scmp.le.s32.totalorder 2, %s38
      // Predicated region
      $region125: #{forward.4} parent=5 // pred_check
        %p1319 = pneg %p1318
      $region126: #{forward.4} parent=5 // pred_check_branch
        %1321 = sbr.rel (%p1319) target = $region128
      $region127: #{forward.4} parent=5 // pred_region
        %s1322 = ssub.s32 %s38, 2
        // Predicated region
        $region129: #{forward.4} parent=127 // pred_check
          %p1323 = pneg %p288
        $region130: #{forward.4} parent=127 // pred_check_branch
          %1325 = sbr.rel (%p1323) target = $region132
        $region131: #{forward.4} parent=127 // pred_region
          %s1326 = sand.u32 %s273, 1
          %s1327 = scalar_lea.sflag [#allocation5], %s1326
          %s1328 = sand.u32 %s273, 1
          %s1329 = smul.addr %s1328, 8
          %s1330 = scalar_lea.vmem [#allocation17], %s1329
          %1331 = dma.done %s1327, 128
        $region132: #{forward.4} parent=127 // pred_fallthru
          _
        // Predicated region
        $region133: #{forward.4} parent=127 // pred_check
          %p1332 = pneg %p320
        $region134: #{forward.4} parent=127 // pred_check_branch
          %1334 = sbr.rel (%p1332) target = $region136
        $region135: #{forward.4} parent=127 // pred_region
          %s1335 = sand.u32 %s44, 1
          %s1336 = scalar_lea.sflag [#allocation19], %s1335
          %s1337 = sand.u32 %s305, 1
          %s1338 = smul.addr %s1337, 8
          %s1339 = scalar_lea.vmem [#allocation18], %s1338
          %1340 = dma.done %s1336, 128
        $region136: #{forward.4} parent=127 // pred_fallthru
          _
      $region128: #{forward.4} parent=5 // pred_fallthru
        _
    $region6: #{forward.4} parent=1 // loop_footer
      %s42 = sadd.s32 1, %s38
    $region7: #{forward.4} parent=1 // loop_footer_branch
      %37 = sbr.rel target = $region3
    $region8: #{forward.4} parent=1 // loop_exit
      _
    %1341 = vsyncpa [#allocation4], 1
    %s1342 = scalar_lea.sflag [#allocation4], 1
    %1343 = vsyncpa %s1342, 1
    %1344 = vsyncpa [#allocation7], 1
    %s1345 = scalar_lea.sflag [#allocation7], 1
    %1346 = vsyncpa %s1345, 1
    %1347 = vsyncpa [#allocation10], 1
    %s1348 = scalar_lea.sflag [#allocation10], 1
    %1349 = vsyncpa %s1348, 1
    %1350 = vsyncpa [#allocation13], 1
    %s1351 = scalar_lea.sflag [#allocation13], 1
    %1352 = vsyncpa %s1351, 1
    %1353 = vsyncpa [#allocation16], 1
    %1354 = vsyncpa [#allocation5], 1
    %s1355 = scalar_lea.sflag [#allocation5], 1
    %1356 = vsyncpa %s1355, 1
    %1357 = vsyncpa [#allocation19], 1
    %s1358 = scalar_lea.sflag [#allocation19], 1
    %1359 = vsyncpa %s1358, 1
    %1360 = vsyncpa [#allocation22], 1

// kernel: forward.7
$region0: #{forward.7}
  #allocation0 [shape = 'u32[]', space=smem, size = 0x4, offset = 0x4, fixed_abs, tag = 'smem constant byte address 0x4 - core index']
  #allocation1 [shape = 'u32[144,128]{1,0:T(1,128)}', space=vmem, size = 0x12000, scoped, tag = 'internal scratch']
  #allocation2 [shape = 'f32[16,32]{1,0:T(8,128)}', space=vmem, size = 0x2000, scoped, tag = 'scratch operand']
  %s0 = inlined_call_operand.hbm [shape: bf16[3,16,16], index: 0, kind: input, shape index: {}]
  %s1 = inlined_call_operand.hbm [shape: bf16[2,16,16], index: 1, kind: input, shape index: {}]
  %s2 = inlined_call_operand.hbm [shape: bf16[3,16,32], index: 2, kind: input, shape index: {}]
  %s3 = inlined_call_operand.hbm [shape: f32[16,32], index: 3, kind: input, shape index: {}]
  %s4 = inlined_call_operand.hbm [shape: f32[16,32], index: 4, kind: output, shape index: {0}]
  %s5 = inlined_call_operand.hbm [shape: f32[1,32], index: 5, kind: output, shape index: {1}]
  %6 = xla_tuple %s4, %s5
  %s7 = sld [smem:[#allocation0]]
  $region89: #{forward.7} parent=0
    _
  %s9 = ssub.s32 1, %s7
  %s10 = scalar_select 0, %s9, %s7
  $region1: #{forward.7} parent=0
    #allocation3 [shape = 'u8[8192]{0}', space=vmem, size = 0x2000, scoped, tag = 'input window, operand 0']
    #allocation4 [shape = 's32[2]{0}', space=sflag, size = 0x8, scoped, tag = 'scoped memory for forward.7']
    #allocation5 [shape = 's32[2]{0}', space=sflag, size = 0x8, scoped, tag = 'scoped memory for forward.7']
    #allocation6 [shape = 'u8[8192]{0}', space=vmem, size = 0x2000, scoped, tag = 'input window, operand 1']
    #allocation7 [shape = 's32[2]{0}', space=sflag, size = 0x8, scoped, tag = 'scoped memory for forward.7']
    #allocation8 [shape = 'u8[8192]{0}', space=vmem, size = 0x2000, scoped, tag = 'input window, operand 2']
    #allocation9 [shape = 'u8[8192]{0}', space=vmem, size = 0x2000, scoped, tag = 'input window, operand 3, single buffered']
    #allocation10 [shape = 's32[1]{0}', space=sflag, size = 0x4, scoped, tag = 'scoped memory for forward.7']
    #allocation11 [shape = 'u8[8192]{0}', space=vmem, size = 0x2000, scoped, tag = 'output window, operand 0, single buffered']
    #allocation12 [shape = 'u8[512]{0}', space=vmem, size = 0x400, scoped, tag = 'output window, operand 1, single buffered']
    #allocation13 [shape = 's32[1]{0}', space=sflag, size = 0x4, scoped, tag = 'scoped memory for forward.7']
    %11 = vsyncpa [#allocation4], 0
    %s12 = scalar_lea.sflag [#allocation4], 1
    %13 = vsyncpa %s12, 0
    %14 = vsyncpa [#allocation7], 0
    %s15 = scalar_lea.sflag [#allocation7], 1
    %16 = vsyncpa %s15, 0
    %17 = vsyncpa [#allocation10], 0
    %18 = vsyncpa [#allocation5], 0
    %19 = vsyncpa [#allocation13], 0
    loop: start=0, step=1, limit=5
    $region2: #{forward.7} parent=1 // loop_pre_header
      _
    $region3: #{forward.7} parent=1 // loop_header
      %s21 = sphi 0, %s25
      %p22 = scmp.ge.s32.totalorder %s21, 5
      %s31 = sphi 0, %s33
      %s34 = sphi 0, %s31
      %s35 = sphi 0, %s34
      %s51 = sphi 0, %s35
      %s63 = sphi 0, %s65
      %s66 = sphi 0, %s63
      %s67 = sphi 0, %s66
      %s83 = sphi 0, %s67
      %s89 = sphi 0, %s91
      %s92 = sphi 0, %s89
      %s93 = sphi 0, %s92
      %s109 = sphi 0, %s93
      %s113 = sphi 0, %s113
      %s115 = sphi 0, %s113
      %s116 = sphi 0, %s115
      %s130 = sphi 0, %s116
      %s134 = sphi 0, %s134
      %s136 = sphi 0, %s134
      %s137 = sphi 0, %s136
      %s151 = sphi 0, %s137
      %s155 = sphi 0, %s155
      %s157 = sphi 0, %s155
      %s158 = sphi 0, %s157
      %s172 = sphi 0, %s158
    $region4: #{forward.7} parent=1 // loop_header_branch
      %24 = sbr.rel (%p22) target = $region8
    $region5: #{forward.7} parent=1 // loop_body
      %s26 = ssub.s32 %s21, 1
      %s27 = ssub.s32 %s21, 2
      %s28 = sadd.s32 %s21, 1
      %s29 = ssub.s32 %s21, %s28
      %p30 = scmp.eq.s32.totalorder %s29, 0
      %s32 = sadd.s32 %s31, 1
      %s33 = scalar_select %p30, %s31, %s32
      %p36 = pneg %p30
      %p37 = scmp.eq.s32.totalorder %s21, 2
      %p38 = por %p36, %p37
      %p39 = scmp.ne.s32.totalorder %s31, %s34
      %p40 = scmp.eq.s32.totalorder %s21, 0
      %p41 = por %p39, %p40
      %p42 = scmp.ne.s32.totalorder %s31, %s34
      %p43 = scmp.eq.s32.totalorder %s26, 2
      %p44 = por %p42, %p43
      %p45 = scmp.ne.s32.totalorder %s34, %s35
      %p46 = scmp.eq.s32.totalorder %s26, 0
      %p47 = por %p45, %p46
      %p48 = scmp.ne.s32.totalorder %s34, %s35
      %p49 = scmp.eq.s32.totalorder %s27, 2
      %p50 = por %p48, %p49
      %p52 = scmp.ne.s32.totalorder %s35, %s51
      %p53 = scmp.eq.s32.totalorder %s27, 0
      %p54 = por %p52, %p53
      %s55 = ssub.s32 %s21, 1
      %p56 = scmp.gt.s32.totalorder %s55, 0
      %s57 = scalar_select %p56, %s55, 0
      %s58 = ssub.s32 %s28, 1
      %p59 = scmp.gt.s32.totalorder %s58, 0
      %s60 = scalar_select %p59, %s58, 0
      %s61 = ssub.s32 %s57, %s60
      %p62 = scmp.eq.s32.totalorder %s61, 0
      %s64 = sadd.s32 %s63, 1
      %s65 = scalar_select %p62, %s63, %s64
      %p68 = pneg %p62
      %p69 = scmp.eq.s32.totalorder %s21, 2
      %p70 = por %p68, %p69
      %p71 = scmp.ne.s32.totalorder %s63, %s66
      %p72 = scmp.eq.s32.totalorder %s21, 0
      %p73 = por %p71, %p72
      %p74 = scmp.ne.s32.totalorder %s63, %s66
      %p75 = scmp.eq.s32.totalorder %s26, 2
      %p76 = por %p74, %p75
      %p77 = scmp.ne.s32.totalorder %s66, %s67
      %p78 = scmp.eq.s32.totalorder %s26, 0
      %p79 = por %p77, %p78
      %p80 = scmp.ne.s32.totalorder %s66, %s67
      %p81 = scmp.eq.s32.totalorder %s27, 2
      %p82 = por %p80, %p81
      %p84 = scmp.ne.s32.totalorder %s67, %s83
      %p85 = scmp.eq.s32.totalorder %s27, 0
      %p86 = por %p84, %p85
      %s87 = ssub.s32 %s21, %s28
      %p88 = scmp.eq.s32.totalorder %s87, 0
      %s90 = sadd.s32 %s89, 1
      %s91 = scalar_select %p88, %s89, %s90
      %p94 = pneg %p88
      %p95 = scmp.eq.s32.totalorder %s21, 2
      %p96 = por %p94, %p95
      %p97 = scmp.ne.s32.totalorder %s89, %s92
      %p98 = scmp.eq.s32.totalorder %s21, 0
      %p99 = por %p97, %p98
      %p100 = scmp.ne.s32.totalorder %s89, %s92
      %p101 = scmp.eq.s32.totalorder %s26, 2
      %p102 = por %p100, %p101
      %p103 = scmp.ne.s32.totalorder %s92, %s93
      %p104 = scmp.eq.s32.totalorder %s26, 0
      %p105 = por %p103, %p104
      %p106 = scmp.ne.s32.totalorder %s92, %s93
      %p107 = scmp.eq.s32.totalorder %s27, 2
      %p108 = por %p106, %p107
      %p110 = scmp.ne.s32.totalorder %s93, %s109
      %p111 = scmp.eq.s32.totalorder %s27, 0
      %p112 = por %p110, %p111
      %s114 = sadd.s32 %s113, 1
      %p117 = scmp.eq.s32.totalorder %s21, 2
      %p118 = scmp.ne.s32.totalorder %s113, %s115
      %p119 = scmp.eq.s32.totalorder %s21, 0
      %p120 = por %p118, %p119
      %p121 = scmp.ne.s32.totalorder %s113, %s115
      %p122 = scmp.eq.s32.totalorder %s26, 2
      %p123 = por %p121, %p122
      %p124 = scmp.ne.s32.totalorder %s115, %s116
      %p125 = scmp.eq.s32.totalorder %s26, 0
      %p126 = por %p124, %p125
      %p127 = scmp.ne.s32.totalorder %s115, %s116
      %p128 = scmp.eq.s32.totalorder %s27, 2
      %p129 = por %p127, %p128
      %p131 = scmp.ne.s32.totalorder %s116, %s130
      %p132 = scmp.eq.s32.totalorder %s27, 0
      %p133 = por %p131, %p132
      %s135 = sadd.s32 %s134, 1
      %p138 = scmp.eq.s32.totalorder %s21, 2
      %p139 = scmp.ne.s32.totalorder %s134, %s136
      %p140 = scmp.eq.s32.totalorder %s21, 0
      %p141 = por %p139, %p140
      %p142 = scmp.ne.s32.totalorder %s134, %s136
      %p143 = scmp.eq.s32.totalorder %s26, 2
      %p144 = por %p142, %p143
      %p145 = scmp.ne.s32.totalorder %s136, %s137
      %p146 = scmp.eq.s32.totalorder %s26, 0
      %p147 = por %p145, %p146
      %p148 = scmp.ne.s32.totalorder %s136, %s137
      %p149 = scmp.eq.s32.totalorder %s27, 2
      %p150 = por %p148, %p149
      %p152 = scmp.ne.s32.totalorder %s137, %s151
      %p153 = scmp.eq.s32.totalorder %s27, 0
      %p154 = por %p152, %p153
      %s156 = sadd.s32 %s155, 1
      %p159 = scmp.eq.s32.totalorder %s21, 2
      %p160 = scmp.ne.s32.totalorder %s155, %s157
      %p161 = scmp.eq.s32.totalorder %s21, 0
      %p162 = por %p160, %p161
      %p163 = scmp.ne.s32.totalorder %s155, %s157
      %p164 = scmp.eq.s32.totalorder %s26, 2
      %p165 = por %p163, %p164
      %p166 = scmp.ne.s32.totalorder %s157, %s158
      %p167 = scmp.eq.s32.totalorder %s26, 0
      %p168 = por %p166, %p167
      %p169 = scmp.ne.s32.totalorder %s157, %s158
      %p170 = scmp.eq.s32.totalorder %s27, 2
      %p171 = por %p169, %p170
      %p173 = scmp.ne.s32.totalorder %s158, %s172
      %p174 = scmp.eq.s32.totalorder %s27, 0
      %p175 = por %p173, %p174
      %p176 = scmp.le.s32.totalorder 1, %s21
      %p177 = scmp.lt.s32.totalorder %s21, 4
      %p178 = pnand %p176, %p177
      %p179 = pneg %p178
      // Predicated region
      $region9: #{forward.7} parent=5 // pred_check
        _
      $region10: #{forward.7} parent=5 // pred_check_branch
        %181 = sbr.rel (%p178) target = $region12
      $region11: #{forward.7} parent=5 // pred_region
        %s182 = ssub.s32 %s21, 1
        // Predicated region
        $region13: #{forward.7} parent=11 // pred_check
          %p183 = pneg %p126
        $region14: #{forward.7} parent=11 // pred_check_branch
          %185 = sbr.rel (%p183) target = $region16
        $region15: #{forward.7} parent=11 // pred_region
          %s187 = ssub.s32 256, 256
          %188 = vsyncadd [#allocation10], %s187
          %s189 = sshll.u32 [#allocation9], 4
          %s190 = int_to_ptr.vmem [resolvable:$true] %s189
          %195 = dma.hbm_to_vmem [thread:$0]  %s3, 256, %s190, [#allocation10], 128, 128, 8
        $region16: #{forward.7} parent=11 // pred_fallthru
          _
      $region12: #{forward.7} parent=5 // pred_fallthru
        _
      %p196 = scmp.lt.s32.totalorder %s21, 3
      // Predicated region
      $region17: #{forward.7} parent=5 // pred_check
        %p197 = pneg %p196
      $region18: #{forward.7} parent=5 // pred_check_branch
        %199 = sbr.rel (%p197) target = $region20
      $region19: #{forward.7} parent=5 // pred_region
        // Predicated region
        $region21: #{forward.7} parent=19 // pred_check
          %p200 = pneg %p41
        $region22: #{forward.7} parent=19 // pred_check_branch
          %202 = sbr.rel (%p200) target = $region24
        $region23: #{forward.7} parent=19 // pred_region
          %s203 = sand.u32 %s31, 1
          %s204 = scalar_lea.sflag [#allocation4], %s203
          %s205 = sand.u32 %s31, 1
          %s206 = smul.addr %s205, 8
          %s207 = scalar_lea.vmem [#allocation3], %s206
          %s209 = ssub.s32 128, 128
          %210 = vsyncadd %s204, %s209
          %s211 = smul.addr %s21, 2
          %s212 = smul.addr %s211, 64
          %s213 = scalar_lea.hbm %s0, %s212
          %s214 = sshll.u32 %s207, 4
          %s215 = int_to_ptr.vmem [resolvable:$true] %s214
          %220 = dma.hbm_to_vmem [thread:$0]  %s213, 128, %s215, %s204, 64, 64, 4
        $region24: #{forward.7} parent=19 // pred_fallthru
          _
        // Predicated region
        $region25: #{forward.7} parent=19 // pred_check
          %p221 = pneg %p73
        $region26: #{forward.7} parent=19 // pred_check_branch
          %223 = sbr.rel (%p221) target = $region28
        $region27: #{forward.7} parent=19 // pred_region
          %s224 = sand.u32 %s21, 1
          %s225 = scalar_lea.sflag [#allocation7], %s224
          %s226 = sand.u32 %s63, 1
          %s227 = smul.addr %s226, 8
          %s228 = scalar_lea.vmem [#allocation6], %s227
          %s229 = ssub.s32 %s21, 1
          %p230 = scmp.gt.s32.totalorder %s229, 0
          %s231 = scalar_select %p230, %s229, 0
          %s233 = ssub.s32 128, 128
          %234 = vsyncadd %s225, %s233
          %s235 = smul.addr %s231, 2
          %s236 = smul.addr %s235, 64
          %s237 = scalar_lea.hbm %s1, %s236
          %s238 = sshll.u32 %s228, 4
          %s239 = int_to_ptr.vmem [resolvable:$true] %s238
          %244 = dma.hbm_to_vmem [thread:$0]  %s237, 128, %s239, %s225, 64, 64, 4
        $region28: #{forward.7} parent=19 // pred_fallthru
          _
        // Predicated region
        $region29: #{forward.7} parent=19 // pred_check
          %p245 = pneg %p99
        $region30: #{forward.7} parent=19 // pred_check_branch
          %247 = sbr.rel (%p245) target = $region32
        $region31: #{forward.7} parent=19 // pred_region
          %s248 = sand.u32 %s21, 1
          %s249 = scalar_lea.sflag [#allocation7], %s248
          %s250 = sand.u32 %s89, 1
          %s251 = smul.addr %s250, 8
          %s252 = scalar_lea.vmem [#allocation8], %s251
          %s254 = ssub.s32 128, 128
          %255 = vsyncadd %s249, %s254
          %s256 = smul.addr %s21, 2
          %s257 = smul.addr %s256, 64
          %s258 = scalar_lea.hbm %s2, %s257
          %s259 = sshll.u32 %s252, 4
          %s260 = int_to_ptr.vmem [resolvable:$true] %s259
          %265 = dma.hbm_to_vmem [thread:$0]  %s258, 128, %s260, %s249, 64, 64, 4
        $region32: #{forward.7} parent=19 // pred_fallthru
          _
      $region20: #{forward.7} parent=5 // pred_fallthru
        _
      %p266 = scmp.le.s32.totalorder 1, %s21
      %p267 = scmp.lt.s32.totalorder %s21, 4
      %p268 = pnand %p266, %p267
      %p269 = pneg %p268
      // Predicated region
      $region33: #{forward.7} parent=5 // pred_check
        _
      $region34: #{forward.7} parent=5 // pred_check_branch
        %271 = sbr.rel (%p268) target = $region36
      $region35: #{forward.7} parent=5 // pred_region
        %s272 = ssub.s32 %s21, 1
        %s273 = sand.u32 %s34, 1
        %s274 = scalar_lea.sflag [#allocation4], %s273
        %s275 = sand.u32 %s34, 1
        %s276 = smul.addr %s275, 8
        %s277 = scalar_lea.vmem [#allocation3], %s276
        // Predicated region
        $region37: #{forward.7} parent=35 // pred_check
          %p278 = pneg %p47
        $region38: #{forward.7} parent=35 // pred_check_branch
          %280 = sbr.rel (%p278) target = $region40
        $region39: #{forward.7} parent=35 // pred_region
          %281 = dma.done %s274, 128
        $region40: #{forward.7} parent=35 // pred_fallthru
          _
        %s282 = sand.u32 %s26, 1
        %s283 = scalar_lea.sflag [#allocation7], %s282
        %s284 = sand.u32 %s66, 1
        %s285 = smul.addr %s284, 8
        %s286 = scalar_lea.vmem [#allocation6], %s285
        // Predicated region
        $region41: #{forward.7} parent=35 // pred_check
          %p287 = pneg %p79
        $region42: #{forward.7} parent=35 // pred_check_branch
          %289 = sbr.rel (%p287) target = $region44
        $region43: #{forward.7} parent=35 // pred_region
          %290 = dma.done %s283, 128
        $region44: #{forward.7} parent=35 // pred_fallthru
          _
        %s291 = sand.u32 %s26, 1
        %s292 = scalar_lea.sflag [#allocation7], %s291
        %s293 = sand.u32 %s92, 1
        %s294 = smul.addr %s293, 8
        %s295 = scalar_lea.vmem [#allocation8], %s294
        // Predicated region
        $region45: #{forward.7} parent=35 // pred_check
          %p296 = pneg %p105
        $region46: #{forward.7} parent=35 // pred_check_branch
          %298 = sbr.rel (%p296) target = $region48
        $region47: #{forward.7} parent=35 // pred_region
          %299 = dma.done %s292, 128
        $region48: #{forward.7} parent=35 // pred_fallthru
          _
        // Predicated region
        $region49: #{forward.7} parent=35 // pred_check
          %p300 = pneg %p126
        $region50: #{forward.7} parent=35 // pred_check_branch
          %302 = sbr.rel (%p300) target = $region52
        $region51: #{forward.7} parent=35 // pred_region
          %303 = dma.done [#allocation10], 256
        $region52: #{forward.7} parent=35 // pred_fallthru
          _
        %s304 = sand.u32 %s34, 1
        %s305 = scalar_lea.sflag [#allocation4], %s304
        %s306 = sand.u32 %s34, 1
        %s307 = smul.addr %s306, 8
        %s308 = scalar_lea.vmem [#allocation3], %s307
        %p309 = pneg %p47
        %p310 = pneg %p44
        %s311 = sand.u32 %s26, 1
        %s312 = scalar_lea.sflag [#allocation7], %s311
        %s313 = sand.u32 %s66, 1
        %s314 = smul.addr %s313, 8
        %s315 = scalar_lea.vmem [#allocation6], %s314
        %p316 = pneg %p79
        %p317 = pneg %p76
        %s318 = sand.u32 %s26, 1
        %s319 = scalar_lea.sflag [#allocation7], %s318
        %s320 = sand.u32 %s92, 1
        %s321 = smul.addr %s320, 8
        %s322 = scalar_lea.vmem [#allocation8], %s321
        %p323 = pneg %p105
        %p324 = pneg %p102
        %p325 = pneg %p126
        %p326 = pneg %p123
        %p327 = pneg %p147
        %p328 = pneg %p144
        %p329 = pneg %p168
        %p330 = pneg %p165
        %s331 = ssub.s32 %s26, 1
        %p332 = scmp.gt.s32.totalorder %s331, 0
        %s333 = scalar_select %p332, %s331, 0
        %p335 = scmp.eq.s32.totalorder %s26, 0
        // Predicated region
        $region53: #{forward.7} parent=35 // pred_check
          %p336 = pneg %p335
        $region54: #{forward.7} parent=35 // pred_check_branch
          %338 = sbr.rel (%p336) target = $region56
        $region55: #{forward.7} parent=35 // pred_region
          %vm339 = vcmask 261120
          %340 = vst.msk [vmem:[#allocation2] sm:$0xff] %vm339, 0.0
          %341 = vst.msk [vmem:[#allocation2 + $0x8] sm:$0xff] %vm339, 0.0
        $region56: #{forward.7} parent=35 // pred_fallthru
          _
        %p342 = scmp.lt.s32.totalorder %s26, 1
        // Predicated region
        $region57: #{forward.7} parent=35 // pred_check
          %p343 = pneg %p342
        $region58: #{forward.7} parent=35 // pred_check_branch
          %345 = sbr.rel (%p343) target = $region60
        $region59: #{forward.7} parent=35 // pred_region
          %v346 = vld [vmem:[#allocation2] sm:$0xff]
          %v347 = vld [vmem:[#allocation2 + $0x8] sm:$0xff]
          %v348 = vld [vmem:[%s277] sm:$0xf]
          %v349 = vld [vmem:[%s277 + $0x4] sm:$0xf]
          %v350 = vld [vmem:[%s295] sm:$0xf]
          %v351 = vld [vmem:[%s295 + $0x4] sm:$0xf]
          %v354 = vunpack.c.l.b16 %v348
          %v355 = vunpack.c.l.b16 %v349
          %v356 = vpack.c.b16 %v355, %v354
          %v359 = vunpack.c.l.b16 %v350
          %v360 = vunpack.c.l.b16 %v351
          %v361 = vpack.c.b16 %v360, %v359
          %vm363 = vcmask 130048
          %v365 = vsel %vm363, %v356, 0
          %367 = vmatprep.subr.bf16.mxu0 0
          %368 = vmatpush1.bf16.msra.mxu0 %v361
          %369 = vmatprep.subr.bf16.mxu0 0
          %370 = vmatpush1.bf16.msra.mxu0 0
          %371 = vmatprep.subr.bf16.mxu0 0
          %372 = vmatpush1.bf16.msra.mxu0 0
          %373 = vmatprep.subr.bf16.mxu0 0
          %374 = vmatpush1.bf16.msra.mxu0 0
          %375 = vmatprep.subr.bf16.mxu0 0
          %376 = vmatpush1.bf16.msra.mxu0 0
          %377 = vmatprep.subr.bf16.mxu0 0
          %378 = vmatpush1.bf16.msra.mxu0 0
          %379 = vmatprep.subr.bf16.mxu0 0
          %380 = vmatpush1.bf16.msra.mxu0 0
          %381 = vmatprep.subr.bf16.mxu0 0
          %382 = vmatpush1.bf16.msra.mxu0 0
          %383 = vmatprep.subr.bf16.mxu0 0
          %384 = vmatpush1.bf16.msra.mxu0 0
          %385 = vmatprep.subr.bf16.mxu0 0
          %386 = vmatpush1.bf16.msra.mxu0 0
          %387 = vmatprep.subr.bf16.mxu0 0
          %388 = vmatpush1.bf16.msra.mxu0 0
          %389 = vmatprep.subr.bf16.mxu0 0
          %390 = vmatpush1.bf16.msra.mxu0 0
          %391 = vmatprep.subr.bf16.mxu0 0
          %392 = vmatpush1.bf16.msra.mxu0 0
          %393 = vmatprep.subr.bf16.mxu0 0
          %394 = vmatpush1.bf16.msra.mxu0 0
          %395 = vmatprep.subr.bf16.mxu0 0
          %396 = vmatpush1.bf16.msra.mxu0 0
          %397 = vmatprep.subr.bf16.mxu0 0
          %398 = vmatpush1.bf16.msra.mxu0 0
          %399 = vmatprep.mubr.bf16.mxu0 0
          %400 = vmatmul.mubr.bf16.gmra.mrb[0].mxu0 %v365
          %v401 = vpop.f32.mrb[0].mxu0
          %v402 = vadd.f32 0.0, %v401
          %v403 = vpop.f32.mrb[0].mxu0
          %v404 = vpop.f32.mrb[0].mxu0
          %v405 = vadd.f32 0.0, %v404
          %v406 = vpop.f32.mrb[0].mxu0
          %407 = vdwg.mxu0
          %v408 = vadd.f32 %v346, %v402
          %v409 = vadd.f32 %v347, %v405
          %vm410 = vcmask 261120
          %411 = vst.msk [vmem:[#allocation2] sm:$0xff] %vm410, %v408
          %412 = vst.msk [vmem:[#allocation2 + $0x8] sm:$0xff] %vm410, %v409
        $region60: #{forward.7} parent=35 // pred_fallthru
          _
        %p413 = scmp.ge.s32.totalorder %s26, 1
        // Predicated region
        $region61: #{forward.7} parent=35 // pred_check
          %p414 = pneg %p413
        $region62: #{forward.7} parent=35 // pred_check_branch
          %416 = sbr.rel (%p414) target = $region64
        $region63: #{forward.7} parent=35 // pred_region
          %v417 = vld [vmem:[#allocation2] sm:$0xff]
          %v418 = vld [vmem:[#allocation2 + $0x8] sm:$0xff]
          %v419 = vld [vmem:[%s286] sm:$0xf]
          %v420 = vld [vmem:[%s286 + $0x4] sm:$0xf]
          %v421 = vld [vmem:[%s295] sm:$0xf]
          %v422 = vld [vmem:[%s295 + $0x4] sm:$0xf]
          %v425 = vunpack.c.l.b16 %v419
          %v426 = vunpack.c.l.b16 %v420
          %v427 = vpack.c.b16 %v426, %v425
          %v430 = vunpack.c.l.b16 %v421
          %v431 = vunpack.c.l.b16 %v422
          %v432 = vpack.c.b16 %v431, %v430
          %vm434 = vcmask 130048
          %v436 = vsel %vm434, %v427, 0
          %438 = vmatprep.subr.bf16.mxu0 0
          %439 = vmatpush1.bf16.msra.mxu0 %v432
          %440 = vmatprep.subr.bf16.mxu0 0
          %441 = vmatpush1.bf16.msra.mxu0 0
          %442 = vmatprep.subr.bf16.mxu0 0
          %443 = vmatpush1.bf16.msra.mxu0 0
          %444 = vmatprep.subr.bf16.mxu0 0
          %445 = vmatpush1.bf16.msra.mxu0 0
          %446 = vmatprep.subr.bf16.mxu0 0
          %447 = vmatpush1.bf16.msra.mxu0 0
          %448 = vmatprep.subr.bf16.mxu0 0
          %449 = vmatpush1.bf16.msra.mxu0 0
          %450 = vmatprep.subr.bf16.mxu0 0
          %451 = vmatpush1.bf16.msra.mxu0 0
          %452 = vmatprep.subr.bf16.mxu0 0
          %453 = vmatpush1.bf16.msra.mxu0 0
          %454 = vmatprep.subr.bf16.mxu0 0
          %455 = vmatpush1.bf16.msra.mxu0 0
          %456 = vmatprep.subr.bf16.mxu0 0
          %457 = vmatpush1.bf16.msra.mxu0 0
          %458 = vmatprep.subr.bf16.mxu0 0
          %459 = vmatpush1.bf16.msra.mxu0 0
          %460 = vmatprep.subr.bf16.mxu0 0
          %461 = vmatpush1.bf16.msra.mxu0 0
          %462 = vmatprep.subr.bf16.mxu0 0
          %463 = vmatpush1.bf16.msra.mxu0 0
          %464 = vmatprep.subr.bf16.mxu0 0
          %465 = vmatpush1.bf16.msra.mxu0 0
          %466 = vmatprep.subr.bf16.mxu0 0
          %467 = vmatpush1.bf16.msra.mxu0 0
          %468 = vmatprep.subr.bf16.mxu0 0
          %469 = vmatpush1.bf16.msra.mxu0 0
          %470 = vmatprep.mubr.bf16.mxu0 0
          %471 = vmatmul.mubr.bf16.gmra.mrb[0].mxu0 %v436
          %v472 = vpop.f32.mrb[0].mxu0
          %v473 = vadd.f32 0.0, %v472
          %v474 = vpop.f32.mrb[0].mxu0
          %v475 = vpop.f32.mrb[0].mxu0
          %v476 = vadd.f32 0.0, %v475
          %v477 = vpop.f32.mrb[0].mxu0
          %478 = vdwg.mxu0
          %v479 = vadd.f32 %v417, %v473
          %v480 = vadd.f32 %v418, %v476
          %vm481 = vcmask 261120
          %482 = vst.msk [vmem:[#allocation2] sm:$0xff] %vm481, %v479
          %483 = vst.msk [vmem:[#allocation2 + $0x8] sm:$0xff] %vm481, %v480
        $region64: #{forward.7} parent=35 // pred_fallthru
          _
        %p484 = scmp.eq.s32.totalorder %s26, 2
        // Predicated region
        $region65: #{forward.7} parent=35 // pred_check
          %p485 = pneg %p484
        $region66: #{forward.7} parent=35 // pred_check_branch
          %487 = sbr.rel (%p485) target = $region68
        $region67: #{forward.7} parent=35 // pred_region
          %v488 = vld [vmem:[#allocation2] sm:$0xff]
          %v489 = vld [vmem:[#allocation2 + $0x8] sm:$0xff]
          %v490 = vld [vmem:[#allocation9] sm:$0xff]
          %v491 = vld [vmem:[#allocation9 + $0x8] sm:$0xff]
          %v492 = vadd.f32 %v488, %v490
          %v493 = vadd.f32 %v489, %v491
          %v494 = vmul.f32 %v492, 0.999995
          %v495 = vmul.f32 %v493, 0.999995
          %v496 = vmax.f32 %v494, 0.0
          %v497 = vmax.f32 %v495, 0.0
          %vm498 = vcmask 261120
          %499 = vst.msk [vmem:[#allocation11] sm:$0xff] %vm498, %v496
          %500 = vst.msk [vmem:[#allocation11 + $0x8] sm:$0xff] %vm498, %v497
          %v501 = vsel %vm498, %v496, 0.0
          %v502 = vsel %vm498, %v497, 0.0
          %v503 = vadd.f32 %v501, %v502
          %v504 = vrot.slane %v503, 4
          %v505 = vadd.f32 %v503, %v504
          %v506 = vrot.slane %v505, 2
          %v507 = vadd.f32 %v505, %v506
          %v508 = vrot.slane %v507, 1
          %v509 = vadd.f32 %v507, %v508
          %vm510 = vcmask 253952
          %511 = vst.msk [vmem:[#allocation12] sm:$0x1] %vm510, %v509
        $region68: #{forward.7} parent=35 // pred_fallthru
          _
        // Predicated region
        $region69: #{forward.7} parent=35 // pred_check
          %p512 = pneg %p144
        $region70: #{forward.7} parent=35 // pred_check_branch
          %514 = sbr.rel (%p512) target = $region72
        $region71: #{forward.7} parent=35 // pred_region
          %s516 = ssub.s32 256, 256
          %517 = vsyncadd [#allocation5], %s516
          %s518 = sshll.u32 [#allocation11], 4
          %s519 = int_to_ptr.vmem [resolvable:$true] %s518
          %524 = dma.vmem_to_hbm [thread:$0]  %s519, 256, %s4, [#allocation5], 128, 128, 8
        $region72: #{forward.7} parent=35 // pred_fallthru
          _
        // Predicated region
        $region73: #{forward.7} parent=35 // pred_check
          %p525 = pneg %p165
        $region74: #{forward.7} parent=35 // pred_check_branch
          %527 = sbr.rel (%p525) target = $region76
        $region75: #{forward.7} parent=35 // pred_region
          %s529 = ssub.s32 16, 16
          %530 = vsyncadd [#allocation13], %s529
          %s532 = sshll.u32 [#allocation12], 4
          %s533 = int_to_ptr.vmem [resolvable:$true] %s532
          %535 = dma.vmem_to_hbm [thread:$0]  %s533, 16, %s5, [#allocation13]
        $region76: #{forward.7} parent=35 // pred_fallthru
          _
        // Predicated region
        $region77: #{forward.7} parent=35 // pred_check
          %p536 = pneg %p144
        $region78: #{forward.7} parent=35 // pred_check_branch
          %538 = sbr.rel (%p536) target = $region80
        $region79: #{forward.7} parent=35 // pred_region
          %539 = dma.done [#allocation5], 256
        $region80: #{forward.7} parent=35 // pred_fallthru
          _
        // Predicated region
        $region81: #{forward.7} parent=35 // pred_check
          %p540 = pneg %p165
        $region82: #{forward.7} parent=35 // pred_check_branch
          %542 = sbr.rel (%p540) target = $region84
        $region83: #{forward.7} parent=35 // pred_region
          %543 = dma.done [#allocation13], 16
        $region84: #{forward.7} parent=35 // pred_fallthru
          _
      $region36: #{forward.7} parent=5 // pred_fallthru
        _
      %p544 = scmp.le.s32.totalorder 2, %s21
      // Predicated region
      $region85: #{forward.7} parent=5 // pred_check
        %p545 = pneg %p544
      $region86: #{forward.7} parent=5 // pred_check_branch
        %547 = sbr.rel (%p545) target = $region88
      $region87: #{forward.7} parent=5 // pred_region
        %s548 = ssub.s32 %s21, 2
      $region88: #{forward.7} parent=5 // pred_fallthru
        _
    $region6: #{forward.7} parent=1 // loop_footer
      %s25 = sadd.s32 1, %s21
    $region7: #{forward.7} parent=1 // loop_footer_branch
      %20 = sbr.rel target = $region3
    $region8: #{forward.7} parent=1 // loop_exit
      _
    %549 = vsyncpa [#allocation4], 1
    %s550 = scalar_lea.sflag [#allocation4], 1
    %551 = vsyncpa %s550, 1
    %552 = vsyncpa [#allocation7], 1
    %s553 = scalar_lea.sflag [#allocation7], 1
    %554 = vsyncpa %s553, 1
    %555 = vsyncpa [#allocation10], 1
    %556 = vsyncpa [#allocation5], 1
    %s557 = scalar_lea.sflag [#allocation5], 1
    %558 = vsyncpa %s557, 1
    %559 = vsyncpa [#allocation13], 1

// kernel: forward.6
$region0: #{forward.6}
  #allocation0 [shape = 'u32[]', space=smem, size = 0x4, offset = 0x4, fixed_abs, tag = 'smem constant byte address 0x4 - core index']
  #allocation1 [shape = 'u32[144,128]{1,0:T(1,128)}', space=vmem, size = 0x12000, scoped, tag = 'internal scratch']
  #allocation2 [shape = 'f32[16,32]{1,0:T(8,128)}', space=vmem, size = 0x2000, scoped, tag = 'scratch operand']
  %s0 = inlined_call_operand.hbm [shape: bf16[3,16,16], index: 0, kind: input, shape index: {}]
  %s1 = inlined_call_operand.hbm [shape: bf16[2,16,16], index: 1, kind: input, shape index: {}]
  %s2 = inlined_call_operand.hbm [shape: bf16[3,16,32], index: 2, kind: input, shape index: {}]
  %s3 = inlined_call_operand.hbm [shape: f32[3,1,32], index: 3, kind: input, shape index: {}]
  %s4 = inlined_call_operand.hbm [shape: bf16[2,32,16], index: 4, kind: input, shape index: {}]
  %s5 = inlined_call_operand.hbm [shape: bf16[2,32,16], index: 5, kind: input, shape index: {}]
  %s6 = inlined_call_operand.hbm [shape: bf16[3,16,32], index: 6, kind: input, shape index: {}]
  %s7 = inlined_call_operand.hbm [shape: f32[16,32], index: 7, kind: input, shape index: {}]
  %s8 = inlined_call_operand.hbm [shape: bf16[3,16,32], index: 8, kind: output, shape index: {0}]
  %s9 = inlined_call_operand.hbm [shape: bf16[2,16,16], index: 9, kind: output, shape index: {1}]
  %s10 = inlined_call_operand.hbm [shape: f32[16,32], index: 10, kind: output, shape index: {2}]
  %s11 = inlined_call_operand.hbm [shape: f32[1,32], index: 11, kind: output, shape index: {3}]
  %12 = xla_tuple %s8, %s9, %s10, %s11
  %s13 = sld [smem:[#allocation0]]
  $region137: #{forward.6} parent=0
    _
  %s15 = ssub.s32 1, %s13
  %s16 = scalar_select 0, %s15, %s13
  $region1: #{forward.6} parent=0
    #allocation3 [shape = 'u8[8192]{0}', space=vmem, size = 0x2000, scoped, tag = 'input window, operand 0']
    #allocation4 [shape = 's32[2]{0}', space=sflag, size = 0x8, scoped, tag = 'scoped memory for forward.6']
    #allocation5 [shape = 's32[2]{0}', space=sflag, size = 0x8, scoped, tag = 'scoped memory for forward.6']
    #allocation6 [shape = 'u8[8192]{0}', space=vmem, size = 0x2000, scoped, tag = 'input window, operand 1']
    #allocation7 [shape = 's32[2]{0}', space=sflag, size = 0x8, scoped, tag = 'scoped memory for forward.6']
    #allocation8 [shape = 'u8[8192]{0}', space=vmem, size = 0x2000, scoped, tag = 'input window, operand 2']
    #allocation9 [shape = 'u8[1024]{0}', space=vmem, size = 0x400, scoped, tag = 'input window, operand 3']
    #allocation10 [shape = 's32[2]{0}', space=sflag, size = 0x8, scoped, tag = 'scoped memory for forward.6']
    #allocation11 [shape = 'u8[16384]{0}', space=vmem, size = 0x4000, scoped, tag = 'input window, operand 4']
    #allocation12 [shape = 'u8[16384]{0}', space=vmem, size = 0x4000, scoped, tag = 'input window, operand 5']
    #allocation13 [shape = 's32[2]{0}', space=sflag, size = 0x8, scoped, tag = 'scoped memory for forward.6']
    #allocation14 [shape = 'u8[8192]{0}', space=vmem, size = 0x2000, scoped, tag = 'input window, operand 6']
    #allocation15 [shape = 'u8[8192]{0}', space=vmem, size = 0x2000, scoped, tag = 'input window, operand 7, single buffered']
    #allocation16 [shape = 's32[1]{0}', space=sflag, size = 0x4, scoped, tag = 'scoped memory for forward.6']
    #allocation17 [shape = 'u8[8192]{0}', space=vmem, size = 0x2000, scoped, tag = 'output window, operand 0']
    #allocation18 [shape = 'u8[8192]{0}', space=vmem, size = 0x2000, scoped, tag = 'output window, operand 1']
    #allocation19 [shape = 's32[2]{0}', space=sflag, size = 0x8, scoped, tag = 'scoped memory for forward.6']
    #allocation20 [shape = 'u8[8192]{0}', space=vmem, size = 0x2000, scoped, tag = 'output window, operand 2, single buffered']
    #allocation21 [shape = 'u8[512]{0}', space=vmem, size = 0x400, scoped, tag = 'output window, operand 3, single buffered']
    #allocation22 [shape = 's32[1]{0}', space=sflag, size = 0x4, scoped, tag = 'scoped memory for forward.6']
    %17 = vsyncpa [#allocation4], 0
    %s18 = scalar_lea.sflag [#allocation4], 1
    %19 = vsyncpa %s18, 0
    %20 = vsyncpa [#allocation7], 0
    %s21 = scalar_lea.sflag [#allocation7], 1
    %22 = vsyncpa %s21, 0
    %23 = vsyncpa [#allocation10], 0
    %s24 = scalar_lea.sflag [#allocation10], 1
    %25 = vsyncpa %s24, 0
    %26 = vsyncpa [#allocation13], 0
    %s27 = scalar_lea.sflag [#allocation13], 1
    %28 = vsyncpa %s27, 0
    %29 = vsyncpa [#allocation16], 0
    %30 = vsyncpa [#allocation5], 0
    %s31 = scalar_lea.sflag [#allocation5], 1
    %32 = vsyncpa %s31, 0
    %33 = vsyncpa [#allocation19], 0
    %s34 = scalar_lea.sflag [#allocation19], 1
    %35 = vsyncpa %s34, 0
    %36 = vsyncpa [#allocation22], 0
    loop: start=0, step=1, limit=5
    $region2: #{forward.6} parent=1 // loop_pre_header
      _
    $region3: #{forward.6} parent=1 // loop_header
      %s38 = sphi 0, %s42
      %p39 = scmp.ge.s32.totalorder %s38, 5
      %s48 = sphi 0, %s50
      %s51 = sphi 0, %s48
      %s52 = sphi 0, %s51
      %s68 = sphi 0, %s52
      %s80 = sphi 0, %s82
      %s83 = sphi 0, %s80
      %s84 = sphi 0, %s83
      %s100 = sphi 0, %s84
      %s106 = sphi 0, %s108
      %s109 = sphi 0, %s106
      %s110 = sphi 0, %s109
      %s126 = sphi 0, %s110
      %s132 = sphi 0, %s134
      %s135 = sphi 0, %s132
      %s136 = sphi 0, %s135
      %s152 = sphi 0, %s136
      %s164 = sphi 0, %s166
      %s167 = sphi 0, %s164
      %s168 = sphi 0, %s167
      %s184 = sphi 0, %s168
      %s196 = sphi 0, %s198
      %s199 = sphi 0, %s196
      %s200 = sphi 0, %s199
      %s216 = sphi 0, %s200
      %s222 = sphi 0, %s224
      %s225 = sphi 0, %s222
      %s226 = sphi 0, %s225
      %s242 = sphi 0, %s226
      %s246 = sphi 0, %s246
      %s248 = sphi 0, %s246
      %s249 = sphi 0, %s248
      %s263 = sphi 0, %s249
      %s269 = sphi 0, %s271
      %s272 = sphi 0, %s269
      %s273 = sphi 0, %s272
      %s289 = sphi 0, %s273
      %s301 = sphi 0, %s303
      %s304 = sphi 0, %s301
      %s305 = sphi 0, %s304
      %s321 = sphi 0, %s305
      %s325 = sphi 0, %s325
      %s327 = sphi 0, %s325
      %s328 = sphi 0, %s327
      %s342 = sphi 0, %s328
      %s346 = sphi 0, %s346
      %s348 = sphi 0, %s346
      %s349 = sphi 0, %s348
      %s363 = sphi 0, %s349
    $region4: #{forward.6} parent=1 // loop_header_branch
      %41 = sbr.rel (%p39) target = $region8
    $region5: #{forward.6} parent=1 // loop_body
      %s43 = ssub.s32 %s38, 1
      %s44 = ssub.s32 %s38, 2
      %s45 = sadd.s32 %s38, 1
      %s46 = ssub.s32 %s38, %s45
      %p47 = scmp.eq.s32.totalorder %s46, 0
      %s49 = sadd.s32 %s48, 1
      %s50 = scalar_select %p47, %s48, %s49
      %p53 = pneg %p47
      %p54 = scmp.eq.s32.totalorder %s38, 2
      %p55 = por %p53, %p54
      %p56 = scmp.ne.s32.totalorder %s48, %s51
      %p57 = scmp.eq.s32.totalorder %s38, 0
      %p58 = por %p56, %p57
      %p59 = scmp.ne.s32.totalorder %s48, %s51
      %p60 = scmp.eq.s32.totalorder %s43, 2
      %p61 = por %p59, %p60
      %p62 = scmp.ne.s32.totalorder %s51, %s52
      %p63 = scmp.eq.s32.totalorder %s43, 0
      %p64 = por %p62, %p63
      %p65 = scmp.ne.s32.totalorder %s51, %s52
      %p66 = scmp.eq.s32.totalorder %s44, 2
      %p67 = por %p65, %p66
      %p69 = scmp.ne.s32.totalorder %s52, %s68
      %p70 = scmp.eq.s32.totalorder %s44, 0
      %p71 = por %p69, %p70
      %s72 = ssub.s32 %s38, 1
      %p73 = scmp.gt.s32.totalorder %s72, 0
      %s74 = scalar_select %p73, %s72, 0
      %s75 = ssub.s32 %s45, 1
      %p76 = scmp.gt.s32.totalorder %s75, 0
      %s77 = scalar_select %p76, %s75, 0
      %s78 = ssub.s32 %s74, %s77
      %p79 = scmp.eq.s32.totalorder %s78, 0
      %s81 = sadd.s32 %s80, 1
      %s82 = scalar_select %p79, %s80, %s81
      %p85 = pneg %p79
      %p86 = scmp.eq.s32.totalorder %s38, 2
      %p87 = por %p85, %p86
      %p88 = scmp.ne.s32.totalorder %s80, %s83
      %p89 = scmp.eq.s32.totalorder %s38, 0
      %p90 = por %p88, %p89
      %p91 = scmp.ne.s32.totalorder %s80, %s83
      %p92 = scmp.eq.s32.totalorder %s43, 2
      %p93 = por %p91, %p92
      %p94 = scmp.ne.s32.totalorder %s83, %s84
      %p95 = scmp.eq.s32.totalorder %s43, 0
      %p96 = por %p94, %p95
      %p97 = scmp.ne.s32.totalorder %s83, %s84
      %p98 = scmp.eq.s32.totalorder %s44, 2
      %p99 = por %p97, %p98
      %p101 = scmp.ne.s32.totalorder %s84, %s100
      %p102 = scmp.eq.s32.totalorder %s44, 0
      %p103 = por %p101, %p102
      %s104 = ssub.s32 %s38, %s45
      %p105 = scmp.eq.s32.totalorder %s104, 0
      %s107 = sadd.s32 %s106, 1
      %s108 = scalar_select %p105, %s106, %s107
      %p111 = pneg %p105
      %p112 = scmp.eq.s32.totalorder %s38, 2
      %p113 = por %p111, %p112
      %p114 = scmp.ne.s32.totalorder %s106, %s109
      %p115 = scmp.eq.s32.totalorder %s38, 0
      %p116 = por %p114, %p115
      %p117 = scmp.ne.s32.totalorder %s106, %s109
      %p118 = scmp.eq.s32.totalorder %s43, 2
      %p119 = por %p117, %p118
      %p120 = scmp.ne.s32.totalorder %s109, %s110
      %p121 = scmp.eq.s32.totalorder %s43, 0
      %p122 = por %p120, %p121
      %p123 = scmp.ne.s32.totalorder %s109, %s110
      %p124 = scmp.eq.s32.totalorder %s44, 2
      %p125 = por %p123, %p124
      %p127 = scmp.ne.s32.totalorder %s110, %s126
      %p128 = scmp.eq.s32.totalorder %s44, 0
      %p129 = por %p127, %p128
      %s130 = ssub.s32 %s38, %s45
      %p131 = scmp.eq.s32.totalorder %s130, 0
      %s133 = sadd.s32 %s132, 1
      %s134 = scalar_select %p131, %s132, %s133
      %p137 = pneg %p131
      %p138 = scmp.eq.s32.totalorder %s38, 2
      %p139 = por %p137, %p138
      %p140 = scmp.ne.s32.totalorder %s132, %s135
      %p141 = scmp.eq.s32.totalorder %s38, 0
      %p142 = por %p140, %p141
      %p143 = scmp.ne.s32.totalorder %s132, %s135
      %p144 = scmp.eq.s32.totalorder %s43, 2
      %p145 = por %p143, %p144
      %p146 = scmp.ne.s32.totalorder %s135, %s136
      %p147 = scmp.eq.s32.totalorder %s43, 0
      %p148 = por %p146, %p147
      %p149 = scmp.ne.s32.totalorder %s135, %s136
      %p150 = scmp.eq.s32.totalorder %s44, 2
      %p151 = por %p149, %p150
      %p153 = scmp.ne.s32.totalorder %s136, %s152
      %p154 = scmp.eq.s32.totalorder %s44, 0
      %p155 = por %p153, %p154
      %s156 = ssub.s32 %s38, 1
      %p157 = scmp.gt.s32.totalorder %s156, 0
      %s158 = scalar_select %p157, %s156, 0
      %s159 = ssub.s32 %s45, 1
      %p160 = scmp.gt.s32.totalorder %s159, 0
      %s161 = scalar_select %p160, %s159, 0
      %s162 = ssub.s32 %s158, %s161
      %p163 = scmp.eq.s32.totalorder %s162, 0
      %s165 = sadd.s32 %s164, 1
      %s166 = scalar_select %p163, %s164, %s165
      %p169 = pneg %p163
      %p170 = scmp.eq.s32.totalorder %s38, 2
      %p171 = por %p169, %p170
      %p172 = scmp.ne.s32.totalorder %s164, %s167
      %p173 = scmp.eq.s32.totalorder %s38, 0
      %p174 = por %p172, %p173
      %p175 = scmp.ne.s32.totalorder %s164, %s167
      %p176 = scmp.eq.s32.totalorder %s43, 2
      %p177 = por %p175, %p176
      %p178 = scmp.ne.s32.totalorder %s167, %s168
      %p179 = scmp.eq.s32.totalorder %s43, 0
      %p180 = por %p178, %p179
      %p181 = scmp.ne.s32.totalorder %s167, %s168
      %p182 = scmp.eq.s32.totalorder %s44, 2
      %p183 = por %p181, %p182
      %p185 = scmp.ne.s32.totalorder %s168, %s184
      %p186 = scmp.eq.s32.totalorder %s44, 0
      %p187 = por %p185, %p186
      %s188 = ssub.s32 %s38, 1
      %p189 = scmp.gt.s32.totalorder %s188, 0
      %s190 = scalar_select %p189, %s188, 0
      %s191 = ssub.s32 %s45, 1
      %p192 = scmp.gt.s32.totalorder %s191, 0
      %s193 = scalar_select %p192, %s191, 0
      %s194 = ssub.s32 %s190, %s193
      %p195 = scmp.eq.s32.totalorder %s194, 0
      %s197 = sadd.s32 %s196, 1
      %s198 = scalar_select %p195, %s196, %s197
      %p201 = pneg %p195
      %p202 = scmp.eq.s32.totalorder %s38, 2
      %p203 = por %p201, %p202
      %p204 = scmp.ne.s32.totalorder %s196, %s199
      %p205 = scmp.eq.s32.totalorder %s38, 0
      %p206 = por %p204, %p205
      %p207 = scmp.ne.s32.totalorder %s196, %s199
      %p208 = scmp.eq.s32.totalorder %s43, 2
      %p209 = por %p207, %p208
      %p210 = scmp.ne.s32.totalorder %s199, %s200
      %p211 = scmp.eq.s32.totalorder %s43, 0
      %p212 = por %p210, %p211
      %p213 = scmp.ne.s32.totalorder %s199, %s200
      %p214 = scmp.eq.s32.totalorder %s44, 2
      %p215 = por %p213, %p214
      %p217 = scmp.ne.s32.totalorder %s200, %s216
      %p218 = scmp.eq.s32.totalorder %s44, 0
      %p219 = por %p217, %p218
      %s220 = ssub.s32 %s38, %s45
      %p221 = scmp.eq.s32.totalorder %s220, 0
      %s223 = sadd.s32 %s222, 1
      %s224 = scalar_select %p221, %s222, %s223
      %p227 = pneg %p221
      %p228 = scmp.eq.s32.totalorder %s38, 2
      %p229 = por %p227, %p228
      %p230 = scmp.ne.s32.totalorder %s222, %s225
      %p231 = scmp.eq.s32.totalorder %s38, 0
      %p232 = por %p230, %p231
      %p233 = scmp.ne.s32.totalorder %s222, %s225
      %p234 = scmp.eq.s32.totalorder %s43, 2
      %p235 = por %p233, %p234
      %p236 = scmp.ne.s32.totalorder %s225, %s226
      %p237 = scmp.eq.s32.totalorder %s43, 0
      %p238 = por %p236, %p237
      %p239 = scmp.ne.s32.totalorder %s225, %s226
      %p240 = scmp.eq.s32.totalorder %s44, 2
      %p241 = por %p239, %p240
      %p243 = scmp.ne.s32.totalorder %s226, %s242
      %p244 = scmp.eq.s32.totalorder %s44, 0
      %p245 = por %p243, %p244
      %s247 = sadd.s32 %s246, 1
      %p250 = scmp.eq.s32.totalorder %s38, 2
      %p251 = scmp.ne.s32.totalorder %s246, %s248
      %p252 = scmp.eq.s32.totalorder %s38, 0
      %p253 = por %p251, %p252
      %p254 = scmp.ne.s32.totalorder %s246, %s248
      %p255 = scmp.eq.s32.totalorder %s43, 2
      %p256 = por %p254, %p255
      %p257 = scmp.ne.s32.totalorder %s248, %s249
      %p258 = scmp.eq.s32.totalorder %s43, 0
      %p259 = por %p257, %p258
      %p260 = scmp.ne.s32.totalorder %s248, %s249
      %p261 = scmp.eq.s32.totalorder %s44, 2
      %p262 = por %p260, %p261
      %p264 = scmp.ne.s32.totalorder %s249, %s263
      %p265 = scmp.eq.s32.totalorder %s44, 0
      %p266 = por %p264, %p265
      %s267 = ssub.s32 %s38, %s45
      %p268 = scmp.eq.s32.totalorder %s267, 0
      %s270 = sadd.s32 %s269, 1
      %s271 = scalar_select %p268, %s269, %s270
      %p274 = pneg %p268
      %p275 = scmp.eq.s32.totalorder %s38, 2
      %p276 = por %p274, %p275
      %p277 = scmp.ne.s32.totalorder %s269, %s272
      %p278 = scmp.eq.s32.totalorder %s38, 0
      %p279 = por %p277, %p278
      %p280 = scmp.ne.s32.totalorder %s269, %s272
      %p281 = scmp.eq.s32.totalorder %s43, 2
      %p282 = por %p280, %p281
      %p283 = scmp.ne.s32.totalorder %s272, %s273
      %p284 = scmp.eq.s32.totalorder %s43, 0
      %p285 = por %p283, %p284
      %p286 = scmp.ne.s32.totalorder %s272, %s273
      %p287 = scmp.eq.s32.totalorder %s44, 2
      %p288 = por %p286, %p287
      %p290 = scmp.ne.s32.totalorder %s273, %s289
      %p291 = scmp.eq.s32.totalorder %s44, 0
      %p292 = por %p290, %p291
      %s293 = ssub.s32 %s38, 1
      %p294 = scmp.gt.s32.totalorder %s293, 0
      %s295 = scalar_select %p294, %s293, 0
      %s296 = ssub.s32 %s45, 1
      %p297 = scmp.gt.s32.totalorder %s296, 0
      %s298 = scalar_select %p297, %s296, 0
      %s299 = ssub.s32 %s295, %s298
      %p300 = scmp.eq.s32.totalorder %s299, 0
      %s302 = sadd.s32 %s301, 1
      %s303 = scalar_select %p300, %s301, %s302
      %p306 = pneg %p300
      %p307 = scmp.eq.s32.totalorder %s38, 2
      %p308 = por %p306, %p307
      %p309 = scmp.ne.s32.totalorder %s301, %s304
      %p310 = scmp.eq.s32.totalorder %s38, 0
      %p311 = por %p309, %p310
      %p312 = scmp.ne.s32.totalorder %s301, %s304
      %p313 = scmp.eq.s32.totalorder %s43, 2
      %p314 = por %p312, %p313
      %p315 = scmp.ne.s32.totalorder %s304, %s305
      %p316 = scmp.eq.s32.totalorder %s43, 0
      %p317 = por %p315, %p316
      %p318 = scmp.ne.s32.totalorder %s304, %s305
      %p319 = scmp.eq.s32.totalorder %s44, 2
      %p320 = por %p318, %p319
      %p322 = scmp.ne.s32.totalorder %s305, %s321
      %p323 = scmp.eq.s32.totalorder %s44, 0
      %p324 = por %p322, %p323
      %s326 = sadd.s32 %s325, 1
      %p329 = scmp.eq.s32.totalorder %s38, 2
      %p330 = scmp.ne.s32.totalorder %s325, %s327
      %p331 = scmp.eq.s32.totalorder %s38, 0
      %p332 = por %p330, %p331
      %p333 = scmp.ne.s32.totalorder %s325, %s327
      %p334 = scmp.eq.s32.totalorder %s43, 2
      %p335 = por %p333, %p334
      %p336 = scmp.ne.s32.totalorder %s327, %s328
      %p337 = scmp.eq.s32.totalorder %s43, 0
      %p338 = por %p336, %p337
      %p339 = scmp.ne.s32.totalorder %s327, %s328
      %p340 = scmp.eq.s32.totalorder %s44, 2
      %p341 = por %p339, %p340
      %p343 = scmp.ne.s32.totalorder %s328, %s342
      %p344 = scmp.eq.s32.totalorder %s44, 0
      %p345 = por %p343, %p344
      %s347 = sadd.s32 %s346, 1
      %p350 = scmp.eq.s32.totalorder %s38, 2
      %p351 = scmp.ne.s32.totalorder %s346, %s348
      %p352 = scmp.eq.s32.totalorder %s38, 0
      %p353 = por %p351, %p352
      %p354 = scmp.ne.s32.totalorder %s346, %s348
      %p355 = scmp.eq.s32.totalorder %s43, 2
      %p356 = por %p354, %p355
      %p357 = scmp.ne.s32.totalorder %s348, %s349
      %p358 = scmp.eq.s32.totalorder %s43, 0
      %p359 = por %p357, %p358
      %p360 = scmp.ne.s32.totalorder %s348, %s349
      %p361 = scmp.eq.s32.totalorder %s44, 2
      %p362 = por %p360, %p361
      %p364 = scmp.ne.s32.totalorder %s349, %s363
      %p365 = scmp.eq.s32.totalorder %s44, 0
      %p366 = por %p364, %p365
      %p367 = scmp.le.s32.totalorder 1, %s38
      %p368 = scmp.lt.s32.totalorder %s38, 4
      %p369 = pnand %p367, %p368
      %p370 = pneg %p369
      // Predicated region
      $region9: #{forward.6} parent=5 // pred_check
        _
      $region10: #{forward.6} parent=5 // pred_check_branch
        %372 = sbr.rel (%p369) target = $region12
      $region11: #{forward.6} parent=5 // pred_region
        %s373 = ssub.s32 %s38, 1
        // Predicated region
        $region13: #{forward.6} parent=11 // pred_check
          %p374 = pneg %p259
        $region14: #{forward.6} parent=11 // pred_check_branch
          %376 = sbr.rel (%p374) target = $region16
        $region15: #{forward.6} parent=11 // pred_region
          %s378 = ssub.s32 256, 256
          %379 = vsyncadd [#allocation16], %s378
          %s380 = sshll.u32 [#allocation15], 4
          %s381 = int_to_ptr.vmem [resolvable:$true] %s380
          %386 = dma.hbm_to_vmem [thread:$0]  %s7, 256, %s381, [#allocation16], 128, 128, 8
        $region16: #{forward.6} parent=11 // pred_fallthru
          _
      $region12: #{forward.6} parent=5 // pred_fallthru
        _
      %p387 = scmp.lt.s32.totalorder %s38, 3
      // Predicated region
      $region17: #{forward.6} parent=5 // pred_check
        %p388 = pneg %p387
      $region18: #{forward.6} parent=5 // pred_check_branch
        %390 = sbr.rel (%p388) target = $region20
      $region19: #{forward.6} parent=5 // pred_region
        // Predicated region
        $region21: #{forward.6} parent=19 // pred_check
          %p391 = pneg %p58
        $region22: #{forward.6} parent=19 // pred_check_branch
          %393 = sbr.rel (%p391) target = $region24
        $region23: #{forward.6} parent=19 // pred_region
          %s394 = sand.u32 %s48, 1
          %s395 = scalar_lea.sflag [#allocation4], %s394
          %s396 = sand.u32 %s48, 1
          %s397 = smul.addr %s396, 8
          %s398 = scalar_lea.vmem [#allocation3], %s397
          %s400 = ssub.s32 128, 128
          %401 = vsyncadd %s395, %s400
          %s402 = smul.addr %s38, 2
          %s403 = smul.addr %s402, 64
          %s404 = scalar_lea.hbm %s0, %s403
          %s405 = sshll.u32 %s398, 4
          %s406 = int_to_ptr.vmem [resolvable:$true] %s405
          %411 = dma.hbm_to_vmem [thread:$0]  %s404, 128, %s406, %s395, 64, 64, 4
        $region24: #{forward.6} parent=19 // pred_fallthru
          _
        // Predicated region
        $region25: #{forward.6} parent=19 // pred_check
          %p412 = pneg %p90
        $region26: #{forward.6} parent=19 // pred_check_branch
          %414 = sbr.rel (%p412) target = $region28
        $region27: #{forward.6} parent=19 // pred_region
          %s415 = sand.u32 %s38, 1
          %s416 = scalar_lea.sflag [#allocation7], %s415
          %s417 = sand.u32 %s80, 1
          %s418 = smul.addr %s417, 8
          %s419 = scalar_lea.vmem [#allocation6], %s418
          %s420 = ssub.s32 %s38, 1
          %p421 = scmp.gt.s32.totalorder %s420, 0
          %s422 = scalar_select %p421, %s420, 0
          %s424 = ssub.s32 128, 128
          %425 = vsyncadd %s416, %s424
          %s426 = smul.addr %s422, 2
          %s427 = smul.addr %s426, 64
          %s428 = scalar_lea.hbm %s1, %s427
          %s429 = sshll.u32 %s419, 4
          %s430 = int_to_ptr.vmem [resolvable:$true] %s429
          %435 = dma.hbm_to_vmem [thread:$0]  %s428, 128, %s430, %s416, 64, 64, 4
        $region28: #{forward.6} parent=19 // pred_fallthru
          _
        // Predicated region
        $region29: #{forward.6} parent=19 // pred_check
          %p436 = pneg %p116
        $region30: #{forward.6} parent=19 // pred_check_branch
          %438 = sbr.rel (%p436) target = $region32
        $region31: #{forward.6} parent=19 // pred_region
          %s439 = sand.u32 %s38, 1
          %s440 = scalar_lea.sflag [#allocation7], %s439
          %s441 = sand.u32 %s106, 1
          %s442 = smul.addr %s441, 8
          %s443 = scalar_lea.vmem [#allocation8], %s442
          %s445 = ssub.s32 128, 128
          %446 = vsyncadd %s440, %s445
          %s447 = smul.addr %s38, 2
          %s448 = smul.addr %s447, 64
          %s449 = scalar_lea.hbm %s2, %s448
          %s450 = sshll.u32 %s443, 4
          %s451 = int_to_ptr.vmem [resolvable:$true] %s450
          %456 = dma.hbm_to_vmem [thread:$0]  %s449, 128, %s451, %s440, 64, 64, 4
        $region32: #{forward.6} parent=19 // pred_fallthru
          _
        // Predicated region
        $region33: #{forward.6} parent=19 // pred_check
          %p457 = pneg %p142
        $region34: #{forward.6} parent=19 // pred_check_branch
          %459 = sbr.rel (%p457) target = $region36
        $region35: #{forward.6} parent=19 // pred_region
          %s460 = sand.u32 %s38, 1
          %s461 = scalar_lea.sflag [#allocation10], %s460
          %s462 = sand.u32 %s132, 1
          %s463 = scalar_lea.vmem [#allocation9], %s462
          %s465 = ssub.s32 16, 16
          %466 = vsyncadd %s461, %s465
          %s467 = smul.addr %s38, 16
          %s468 = scalar_lea.hbm %s3, %s467
          %s470 = sshll.u32 %s463, 4
          %s471 = int_to_ptr.vmem [resolvable:$true] %s470
          %473 = dma.hbm_to_vmem [thread:$0]  %s468, 16, %s471, %s461
        $region36: #{forward.6} parent=19 // pred_fallthru
          _
        // Predicated region
        $region37: #{forward.6} parent=19 // pred_check
          %p474 = pneg %p174
        $region38: #{forward.6} parent=19 // pred_check_branch
          %476 = sbr.rel (%p474) target = $region40
        $region39: #{forward.6} parent=19 // pred_region
          %s477 = sand.u32 %s38, 1
          %s478 = scalar_lea.sflag [#allocation10], %s477
          %s479 = sand.u32 %s164, 1
          %s480 = smul.addr %s479, 16
          %s481 = scalar_lea.vmem [#allocation11], %s480
          %s482 = ssub.s32 %s38, 1
          %p483 = scmp.gt.s32.totalorder %s482, 0
          %s484 = scalar_select %p483, %s482, 0
          %s486 = ssub.s32 256, 256
          %487 = vsyncadd %s478, %s486
          %s488 = smul.addr %s484, 4
          %s489 = smul.addr %s488, 64
          %s490 = scalar_lea.hbm %s4, %s489
          %s491 = sshll.u32 %s481, 4
          %s492 = int_to_ptr.vmem [resolvable:$true] %s491
          %497 = dma.hbm_to_vmem [thread:$0]  %s490, 256, %s492, %s478, 64, 64, 4
        $region40: #{forward.6} parent=19 // pred_fallthru
          _
        // Predicated region
        $region41: #{forward.6} parent=19 // pred_check
          %p498 = pneg %p206
        $region42: #{forward.6} parent=19 // pred_check_branch
          %500 = sbr.rel (%p498) target = $region44
        $region43: #{forward.6} parent=19 // pred_region
          %s501 = sand.u32 %s38, 1
          %s502 = scalar_lea.sflag [#allocation13], %s501
          %s503 = sand.u32 %s196, 1
          %s504 = smul.addr %s503, 16
          %s505 = scalar_lea.vmem [#allocation12], %s504
          %s506 = ssub.s32 %s38, 1
          %p507 = scmp.gt.s32.totalorder %s506, 0
          %s508 = scalar_select %p507, %s506, 0
          %s510 = ssub.s32 256, 256
          %511 = vsyncadd %s502, %s510
          %s512 = smul.addr %s508, 4
          %s513 = smul.addr %s512, 64
          %s514 = scalar_lea.hbm %s5, %s513
          %s515 = sshll.u32 %s505, 4
          %s516 = int_to_ptr.vmem [resolvable:$true] %s515
          %521 = dma.hbm_to_vmem [thread:$0]  %s514, 256, %s516, %s502, 64, 64, 4
        $region44: #{forward.6} parent=19 // pred_fallthru
          _
        // Predicated region
        $region45: #{forward.6} parent=19 // pred_check
          %p522 = pneg %p232
        $region46: #{forward.6} parent=19 // pred_check_branch
          %524 = sbr.rel (%p522) target = $region48
        $region47: #{forward.6} parent=19 // pred_region
          %s525 = sand.u32 %s38, 1
          %s526 = scalar_lea.sflag [#allocation13], %s525
          %s527 = sand.u32 %s222, 1
          %s528 = smul.addr %s527, 8
          %s529 = scalar_lea.vmem [#allocation14], %s528
          %s531 = ssub.s32 128, 128
          %532 = vsyncadd %s526, %s531
          %s533 = smul.addr %s38, 2
          %s534 = smul.addr %s533, 64
          %s535 = scalar_lea.hbm %s6, %s534
          %s536 = sshll.u32 %s529, 4
          %s537 = int_to_ptr.vmem [resolvable:$true] %s536
          %542 = dma.hbm_to_vmem [thread:$0]  %s535, 128, %s537, %s526, 64, 64, 4
        $region48: #{forward.6} parent=19 // pred_fallthru
          _
      $region20: #{forward.6} parent=5 // pred_fallthru
        _
      %p543 = scmp.le.s32.totalorder 1, %s38
      %p544 = scmp.lt.s32.totalorder %s38, 4
      %p545 = pnand %p543, %p544
      %p546 = pneg %p545
      // Predicated region
      $region49: #{forward.6} parent=5 // pred_check
        _
      $region50: #{forward.6} parent=5 // pred_check_branch
        %548 = sbr.rel (%p545) target = $region52
      $region51: #{forward.6} parent=5 // pred_region
        %s549 = ssub.s32 %s38, 1
        %s550 = sand.u32 %s51, 1
        %s551 = scalar_lea.sflag [#allocation4], %s550
        %s552 = sand.u32 %s51, 1
        %s553 = smul.addr %s552, 8
        %s554 = scalar_lea.vmem [#allocation3], %s553
        // Predicated region
        $region53: #{forward.6} parent=51 // pred_check
          %p555 = pneg %p64
        $region54: #{forward.6} parent=51 // pred_check_branch
          %557 = sbr.rel (%p555) target = $region56
        $region55: #{forward.6} parent=51 // pred_region
          %558 = dma.done %s551, 128
        $region56: #{forward.6} parent=51 // pred_fallthru
          _
        %s559 = sand.u32 %s43, 1
        %s560 = scalar_lea.sflag [#allocation7], %s559
        %s561 = sand.u32 %s83, 1
        %s562 = smul.addr %s561, 8
        %s563 = scalar_lea.vmem [#allocation6], %s562
        // Predicated region
        $region57: #{forward.6} parent=51 // pred_check
          %p564 = pneg %p96
        $region58: #{forward.6} parent=51 // pred_check_branch
          %566 = sbr.rel (%p564) target = $region60
        $region59: #{forward.6} parent=51 // pred_region
          %567 = dma.done %s560, 128
        $region60: #{forward.6} parent=51 // pred_fallthru
          _
        %s568 = sand.u32 %s43, 1
        %s569 = scalar_lea.sflag [#allocation7], %s568
        %s570 = sand.u32 %s109, 1
        %s571 = smul.addr %s570, 8
        %s572 = scalar_lea.vmem [#allocation8], %s571
        // Predicated region
        $region61: #{forward.6} parent=51 // pred_check
          %p573 = pneg %p122
        $region62: #{forward.6} parent=51 // pred_check_branch
          %575 = sbr.rel (%p573) target = $region64
        $region63: #{forward.6} parent=51 // pred_region
          %576 = dma.done %s569, 128
        $region64: #{forward.6} parent=51 // pred_fallthru
          _
        %s577 = sand.u32 %s43, 1
        %s578 = scalar_lea.sflag [#allocation10], %s577
        %s579 = sand.u32 %s135, 1
        %s580 = scalar_lea.vmem [#allocation9], %s579
        // Predicated region
        $region65: #{forward.6} parent=51 // pred_check
          %p581 = pneg %p148
        $region66: #{forward.6} parent=51 // pred_check_branch
          %583 = sbr.rel (%p581) target = $region68
        $region67: #{forward.6} parent=51 // pred_region
          %584 = dma.done %s578, 16
        $region68: #{forward.6} parent=51 // pred_fallthru
          _
        %s585 = sand.u32 %s43, 1
        %s586 = scalar_lea.sflag [#allocation10], %s585
        %s587 = sand.u32 %s167, 1
        %s588 = smul.addr %s587, 16
        %s589 = scalar_lea.vmem [#allocation11], %s588
        // Predicated region
        $region69: #{forward.6} parent=51 // pred_check
          %p590 = pneg %p180
        $region70: #{forward.6} parent=51 // pred_check_branch
          %592 = sbr.rel (%p590) target = $region72
        $region71: #{forward.6} parent=51 // pred_region
          %593 = dma.done %s586, 256
        $region72: #{forward.6} parent=51 // pred_fallthru
          _
        %s594 = sand.u32 %s43, 1
        %s595 = scalar_lea.sflag [#allocation13], %s594
        %s596 = sand.u32 %s199, 1
        %s597 = smul.addr %s596, 16
        %s598 = scalar_lea.vmem [#allocation12], %s597
        // Predicated region
        $region73: #{forward.6} parent=51 // pred_check
          %p599 = pneg %p212
        $region74: #{forward.6} parent=51 // pred_check_branch
          %601 = sbr.rel (%p599) target = $region76
        $region75: #{forward.6} parent=51 // pred_region
          %602 = dma.done %s595, 256
        $region76: #{forward.6} parent=51 // pred_fallthru
          _
        %s603 = sand.u32 %s43, 1
        %s604 = scalar_lea.sflag [#allocation13], %s603
        %s605 = sand.u32 %s225, 1
        %s606 = smul.addr %s605, 8
        %s607 = scalar_lea.vmem [#allocation14], %s606
        // Predicated region
        $region77: #{forward.6} parent=51 // pred_check
          %p608 = pneg %p238
        $region78: #{forward.6} parent=51 // pred_check_branch
          %610 = sbr.rel (%p608) target = $region80
        $region79: #{forward.6} parent=51 // pred_region
          %611 = dma.done %s604, 128
        $region80: #{forward.6} parent=51 // pred_fallthru
          _
        // Predicated region
        $region81: #{forward.6} parent=51 // pred_check
          %p612 = pneg %p259
        $region82: #{forward.6} parent=51 // pred_check_branch
          %614 = sbr.rel (%p612) target = $region84
        $region83: #{forward.6} parent=51 // pred_region
          %615 = dma.done [#allocation16], 256
        $region84: #{forward.6} parent=51 // pred_fallthru
          _
        %s616 = sand.u32 %s51, 1
        %s617 = scalar_lea.sflag [#allocation4], %s616
        %s618 = sand.u32 %s51, 1
        %s619 = smul.addr %s618, 8
        %s620 = scalar_lea.vmem [#allocation3], %s619
        %p621 = pneg %p64
        %p622 = pneg %p61
        %s623 = sand.u32 %s43, 1
        %s624 = scalar_lea.sflag [#allocation7], %s623
        %s625 = sand.u32 %s83, 1
        %s626 = smul.addr %s625, 8
        %s627 = scalar_lea.vmem [#allocation6], %s626
        %p628 = pneg %p96
        %p629 = pneg %p93
        %s630 = sand.u32 %s43, 1
        %s631 = scalar_lea.sflag [#allocation7], %s630
        %s632 = sand.u32 %s109, 1
        %s633 = smul.addr %s632, 8
        %s634 = scalar_lea.vmem [#allocation8], %s633
        %p635 = pneg %p122
        %p636 = pneg %p119
        %s637 = sand.u32 %s43, 1
        %s638 = scalar_lea.sflag [#allocation10], %s637
        %s639 = sand.u32 %s135, 1
        %s640 = scalar_lea.vmem [#allocation9], %s639
        %p641 = pneg %p148
        %p642 = pneg %p145
        %s643 = sand.u32 %s43, 1
        %s644 = scalar_lea.sflag [#allocation10], %s643
        %s645 = sand.u32 %s167, 1
        %s646 = smul.addr %s645, 16
        %s647 = scalar_lea.vmem [#allocation11], %s646
        %p648 = pneg %p180
        %p649 = pneg %p177
        %s650 = sand.u32 %s43, 1
        %s651 = scalar_lea.sflag [#allocation13], %s650
        %s652 = sand.u32 %s199, 1
        %s653 = smul.addr %s652, 16
        %s654 = scalar_lea.vmem [#allocation12], %s653
        %p655 = pneg %p212
        %p656 = pneg %p209
        %s657 = sand.u32 %s43, 1
        %s658 = scalar_lea.sflag [#allocation13], %s657
        %s659 = sand.u32 %s225, 1
        %s660 = smul.addr %s659, 8
        %s661 = scalar_lea.vmem [#allocation14], %s660
        %p662 = pneg %p238
        %p663 = pneg %p235
        %p664 = pneg %p259
        %p665 = pneg %p256
        %p666 = pneg %p285
        %p667 = pneg %p282
        %s668 = sand.u32 %s272, 1
        %s669 = scalar_lea.sflag [#allocation5], %s668
        %s670 = sand.u32 %s272, 1
        %s671 = smul.addr %s670, 8
        %s672 = scalar_lea.vmem [#allocation17], %s671
        %p673 = pneg %p317
        %p674 = pneg %p314
        %s675 = sand.u32 %s43, 1
        %s676 = scalar_lea.sflag [#allocation19], %s675
        %s677 = sand.u32 %s304, 1
        %s678 = smul.addr %s677, 8
        %s679 = scalar_lea.vmem [#allocation18], %s678
        %p680 = pneg %p338
        %p681 = pneg %p335
        %p682 = pneg %p359
        %p683 = pneg %p356
        %s684 = ssub.s32 %s43, 1
        %p685 = scmp.gt.s32.totalorder %s684, 0
        %s686 = scalar_select %p685, %s684, 0
        %s687 = ssub.s32 %s43, 1
        %p688 = scmp.gt.s32.totalorder %s687, 0
        %s689 = scalar_select %p688, %s687, 0
        %s690 = ssub.s32 %s43, 1
        %p691 = scmp.gt.s32.totalorder %s690, 0
        %s692 = scalar_select %p691, %s690, 0
        %s693 = ssub.s32 %s43, 1
        %p694 = scmp.gt.s32.totalorder %s693, 0
        %s695 = scalar_select %p694, %s693, 0
        %p697 = scmp.eq.s32.totalorder %s43, 0
        // Predicated region
        $region85: #{forward.6} parent=51 // pred_check
          %p698 = pneg %p697
        $region86: #{forward.6} parent=51 // pred_check_branch
          %700 = sbr.rel (%p698) target = $region88
        $region87: #{forward.6} parent=51 // pred_region
          %vm701 = vcmask 261120
          %702 = vst.msk [vmem:[#allocation2] sm:$0xff] %vm701, 0.0
          %703 = vst.msk [vmem:[#allocation2 + $0x8] sm:$0xff] %vm701, 0.0
        $region88: #{forward.6} parent=51 // pred_fallthru
          _
        %p704 = scmp.lt.s32.totalorder %s43, 1
        // Predicated region
        $region89: #{forward.6} parent=51 // pred_check
          %p705 = pneg %p704
        $region90: #{forward.6} parent=51 // pred_check_branch
          %707 = sbr.rel (%p705) target = $region92
        $region91: #{forward.6} parent=51 // pred_region
          %v708 = vld [vmem:[%s554] sm:$0xf]
          %v709 = vld [vmem:[%s554 + $0x4] sm:$0xf]
          %v710 = vld [vmem:[%s572] sm:$0xf]
          %v711 = vld [vmem:[%s572 + $0x4] sm:$0xf]
          %v712 = vld [vmem:[%s580] sm:$0x1]
          %v714 = vlaneseq
          %v715 = vshrl.u32 %v714, 7
          %v716 = vsub.s32 0, %v715
          %v717 = vrot.slane %v712, %v716
          %v721 = vunpack.c.l.b16 %v708
          %v722 = vunpack.c.l.b16 %v709
          %v723 = vpack.c.b16 %v722, %v721
          %v726 = vunpack.c.l.b16 %v710
          %v727 = vunpack.c.l.b16 %v711
          %v728 = vpack.c.b16 %v727, %v726
          %vm730 = vcmask 130048
          %v732 = vsel %vm730, %v723, 0
          %734 = vmatprep.subr.bf16.mxu0 0
          %735 = vmatpush1.bf16.msra.mxu0 %v728
          %736 = vmatprep.subr.bf16.mxu0 0
          %737 = vmatpush1.bf16.msra.mxu0 0
          %738 = vmatprep.subr.bf16.mxu0 0
          %739 = vmatpush1.bf16.msra.mxu0 0
          %740 = vmatprep.subr.bf16.mxu0 0
          %741 = vmatpush1.bf16.msra.mxu0 0
          %742 = vmatprep.subr.bf16.mxu0 0
          %743 = vmatpush1.bf16.msra.mxu0 0
          %744 = vmatprep.subr.bf16.mxu0 0
          %745 = vmatpush1.bf16.msra.mxu0 0
          %746 = vmatprep.subr.bf16.mxu0 0
          %747 = vmatpush1.bf16.msra.mxu0 0
          %748 = vmatprep.subr.bf16.mxu0 0
          %749 = vmatpush1.bf16.msra.mxu0 0
          %750 = vmatprep.subr.bf16.mxu0 0
          %751 = vmatpush1.bf16.msra.mxu0 0
          %752 = vmatprep.subr.bf16.mxu0 0
          %753 = vmatpush1.bf16.msra.mxu0 0
          %754 = vmatprep.subr.bf16.mxu0 0
          %755 = vmatpush1.bf16.msra.mxu0 0
          %756 = vmatprep.subr.bf16.mxu0 0
          %757 = vmatpush1.bf16.msra.mxu0 0
          %758 = vmatprep.subr.bf16.mxu0 0
          %759 = vmatpush1.bf16.msra.mxu0 0
          %760 = vmatprep.subr.bf16.mxu0 0
          %761 = vmatpush1.bf16.msra.mxu0 0
          %762 = vmatprep.subr.bf16.mxu0 0
          %763 = vmatpush1.bf16.msra.mxu0 0
          %764 = vmatprep.subr.bf16.mxu0 0
          %765 = vmatpush1.bf16.msra.mxu0 0
          %766 = vmatprep.mubr.bf16.mxu0 0
          %767 = vmatmul.mubr.bf16.gmra.mrb[0].mxu0 %v732
          %v768 = vpop.f32.mrb[0].mxu0
          %v769 = vadd.f32 %v717, %v768
          %v770 = vpop.f32.mrb[0].mxu0
          %v771 = vpop.f32.mrb[0].mxu0
          %v772 = vadd.f32 %v717, %v771
          %v773 = vpop.f32.mrb[0].mxu0
          %774 = vdwg.mxu0
          %v775 = vmul.f32 %v769, 0.999995
          %v776 = vmul.f32 %v772, 0.999995
          %v777 = vmax.f32 %v775, 0.0
          %v778 = vmax.f32 %v776, 0.0
          %v779 = vpack.c.bf16 %v778, %v777
          %v781 = vunpack.c.l.b16 %v779
          %v782 = vunpack.c.h.b16 %v779
          %v783 = vpack.c.b16 %v781, %v781
          %v784 = vpack.c.b16 %v782, %v782
          %vm787 = vcmask 257024
          %788 = vst.msk [vmem:[%s672] sm:$0xf] %vm787, %v783
          %789 = vst.msk [vmem:[%s672 + $0x4] sm:$0xf] %vm787, %v784
          %v790 = vld [vmem:[#allocation2] sm:$0xff]
          %v791 = vld [vmem:[#allocation2 + $0x8] sm:$0xff]
          %v792 = vld [vmem:[%s607] sm:$0xf]
          %v793 = vld [vmem:[%s607 + $0x4] sm:$0xf]
          %v796 = vunpack.c.l.b16 %v792
          %v797 = vunpack.c.l.b16 %v793
          %v798 = vpack.c.b16 %v797, %v796
          %800 = vmatprep.subr.bf16.mxu0 0
          %801 = vmatpush1.bf16.msra.mxu0 %v798
          %802 = vmatprep.subr.bf16.mxu0 0
          %803 = vmatpush1.bf16.msra.mxu0 0
          %804 = vmatprep.subr.bf16.mxu0 0
          %805 = vmatpush1.bf16.msra.mxu0 0
          %806 = vmatprep.subr.bf16.mxu0 0
          %807 = vmatpush1.bf16.msra.mxu0 0
          %808 = vmatprep.subr.bf16.mxu0 0
          %809 = vmatpush1.bf16.msra.mxu0 0
          %810 = vmatprep.subr.bf16.mxu0 0
          %811 = vmatpush1.bf16.msra.mxu0 0
          %812 = vmatprep.subr.bf16.mxu0 0
          %813 = vmatpush1.bf16.msra.mxu0 0
          %814 = vmatprep.subr.bf16.mxu0 0
          %815 = vmatpush1.bf16.msra.mxu0 0
          %816 = vmatprep.subr.bf16.mxu0 0
          %817 = vmatpush1.bf16.msra.mxu0 0
          %818 = vmatprep.subr.bf16.mxu0 0
          %819 = vmatpush1.bf16.msra.mxu0 0
          %820 = vmatprep.subr.bf16.mxu0 0
          %821 = vmatpush1.bf16.msra.mxu0 0
          %822 = vmatprep.subr.bf16.mxu0 0
          %823 = vmatpush1.bf16.msra.mxu0 0
          %824 = vmatprep.subr.bf16.mxu0 0
          %825 = vmatpush1.bf16.msra.mxu0 0
          %826 = vmatprep.subr.bf16.mxu0 0
          %827 = vmatpush1.bf16.msra.mxu0 0
          %828 = vmatprep.subr.bf16.mxu0 0
          %829 = vmatpush1.bf16.msra.mxu0 0
          %830 = vmatprep.subr.bf16.mxu0 0
          %831 = vmatpush1.bf16.msra.mxu0 0
          %832 = vmatprep.mubr.bf16.mxu0 0
          %833 = vmatmul.mubr.bf16.gmra.mrb[0].mxu0 %v732
          %v834 = vpop.f32.mrb[0].mxu0
          %v835 = vadd.f32 0.0, %v834
          %v836 = vpop.f32.mrb[0].mxu0
          %v837 = vpop.f32.mrb[0].mxu0
          %v838 = vadd.f32 0.0, %v837
          %v839 = vpop.f32.mrb[0].mxu0
          %840 = vdwg.mxu0
          %v841 = vadd.f32 %v790, %v835
          %v842 = vadd.f32 %v791, %v838
          %vm843 = vcmask 261120
          %844 = vst.msk [vmem:[#allocation2] sm:$0xff] %vm843, %v841
          %845 = vst.msk [vmem:[#allocation2 + $0x8] sm:$0xff] %vm843, %v842
        $region92: #{forward.6} parent=51 // pred_fallthru
          _
        %p846 = scmp.ge.s32.totalorder %s43, 1
        // Predicated region
        $region93: #{forward.6} parent=51 // pred_check
          %p847 = pneg %p846
        $region94: #{forward.6} parent=51 // pred_check_branch
          %849 = sbr.rel (%p847) target = $region96
        $region95: #{forward.6} parent=51 // pred_region
          %v850 = vld [vmem:[%s563] sm:$0xf]
          %v851 = vld [vmem:[%s563 + $0x4] sm:$0xf]
          %v852 = vld [vmem:[%s572] sm:$0xf]
          %v853 = vld [vmem:[%s572 + $0x4] sm:$0xf]
          %v854 = vld [vmem:[%s580] sm:$0x1]
          %v856 = vlaneseq
          %v857 = vshrl.u32 %v856, 7
          %v858 = vsub.s32 0, %v857
          %v859 = vrot.slane %v854, %v858
          %v863 = vunpack.c.l.b16 %v850
          %v864 = vunpack.c.l.b16 %v851
          %v865 = vpack.c.b16 %v864, %v863
          %v868 = vunpack.c.l.b16 %v852
          %v869 = vunpack.c.l.b16 %v853
          %v870 = vpack.c.b16 %v869, %v868
          %vm872 = vcmask 130048
          %v874 = vsel %vm872, %v865, 0
          %876 = vmatprep.subr.bf16.mxu0 0
          %877 = vmatpush1.bf16.msra.mxu0 %v870
          %878 = vmatprep.subr.bf16.mxu0 0
          %879 = vmatpush1.bf16.msra.mxu0 0
          %880 = vmatprep.subr.bf16.mxu0 0
          %881 = vmatpush1.bf16.msra.mxu0 0
          %882 = vmatprep.subr.bf16.mxu0 0
          %883 = vmatpush1.bf16.msra.mxu0 0
          %884 = vmatprep.subr.bf16.mxu0 0
          %885 = vmatpush1.bf16.msra.mxu0 0
          %886 = vmatprep.subr.bf16.mxu0 0
          %887 = vmatpush1.bf16.msra.mxu0 0
          %888 = vmatprep.subr.bf16.mxu0 0
          %889 = vmatpush1.bf16.msra.mxu0 0
          %890 = vmatprep.subr.bf16.mxu0 0
          %891 = vmatpush1.bf16.msra.mxu0 0
          %892 = vmatprep.subr.bf16.mxu0 0
          %893 = vmatpush1.bf16.msra.mxu0 0
          %894 = vmatprep.subr.bf16.mxu0 0
          %895 = vmatpush1.bf16.msra.mxu0 0
          %896 = vmatprep.subr.bf16.mxu0 0
          %897 = vmatpush1.bf16.msra.mxu0 0
          %898 = vmatprep.subr.bf16.mxu0 0
          %899 = vmatpush1.bf16.msra.mxu0 0
          %900 = vmatprep.subr.bf16.mxu0 0
          %901 = vmatpush1.bf16.msra.mxu0 0
          %902 = vmatprep.subr.bf16.mxu0 0
          %903 = vmatpush1.bf16.msra.mxu0 0
          %904 = vmatprep.subr.bf16.mxu0 0
          %905 = vmatpush1.bf16.msra.mxu0 0
          %906 = vmatprep.subr.bf16.mxu0 0
          %907 = vmatpush1.bf16.msra.mxu0 0
          %908 = vmatprep.mubr.bf16.mxu0 0
          %909 = vmatmul.mubr.bf16.gmra.mrb[0].mxu0 %v874
          %v910 = vpop.f32.mrb[0].mxu0
          %v911 = vadd.f32 %v859, %v910
          %v912 = vpop.f32.mrb[0].mxu0
          %v913 = vpop.f32.mrb[0].mxu0
          %v914 = vadd.f32 %v859, %v913
          %v915 = vpop.f32.mrb[0].mxu0
          %916 = vdwg.mxu0
          %v917 = vmul.f32 %v911, 0.999995
          %v918 = vmul.f32 %v914, 0.999995
          %v919 = vmax.f32 %v917, 0.0
          %v920 = vmax.f32 %v918, 0.0
          %v921 = vpack.c.bf16 %v920, %v919
          %v923 = vunpack.c.l.b16 %v921
          %v924 = vunpack.c.h.b16 %v921
          %v925 = vpack.c.b16 %v923, %v923
          %v926 = vpack.c.b16 %v924, %v924
          %vm929 = vcmask 257024
          %930 = vst.msk [vmem:[%s672] sm:$0xf] %vm929, %v925
          %931 = vst.msk [vmem:[%s672 + $0x4] sm:$0xf] %vm929, %v926
          %v932 = vld [vmem:[%s589] sm:$0xf]
          %v933 = vld [vmem:[%s589 + $0x4] sm:$0xf]
          %v934 = vld [vmem:[%s589 + $0x8] sm:$0xf]
          %v935 = vld [vmem:[%s589 + $0xc] sm:$0xf]
          %v940 = vunpack.c.l.b16 %v932
          %v941 = vunpack.c.l.b16 %v933
          %v942 = vunpack.c.l.b16 %v934
          %v943 = vunpack.c.l.b16 %v935
          %v944 = vpack.c.b16 %v941, %v940
          %v945 = vpack.c.b16 %v943, %v942
          %vm948 = vcmask 261120
          %v950 = vsel %vm948, %v921, 0
          %952 = vmatprep.subr.bf16.mxu0 0
          %953 = vmatpush1.bf16.msra.mxu0 %v944
          %954 = vmatprep.subr.bf16.mxu0 0
          %955 = vmatpush1.bf16.msra.mxu0 %v945
          %956 = vmatprep.subr.bf16.mxu0 0
          %957 = vmatpush1.bf16.msra.mxu0 0
          %958 = vmatprep.subr.bf16.mxu0 0
          %959 = vmatpush1.bf16.msra.mxu0 0
          %960 = vmatprep.subr.bf16.mxu0 0
          %961 = vmatpush1.bf16.msra.mxu0 0
          %962 = vmatprep.subr.bf16.mxu0 0
          %963 = vmatpush1.bf16.msra.mxu0 0
          %964 = vmatprep.subr.bf16.mxu0 0
          %965 = vmatpush1.bf16.msra.mxu0 0
          %966 = vmatprep.subr.bf16.mxu0 0
          %967 = vmatpush1.bf16.msra.mxu0 0
          %968 = vmatprep.subr.bf16.mxu0 0
          %969 = vmatpush1.bf16.msra.mxu0 0
          %970 = vmatprep.subr.bf16.mxu0 0
          %971 = vmatpush1.bf16.msra.mxu0 0
          %972 = vmatprep.subr.bf16.mxu0 0
          %973 = vmatpush1.bf16.msra.mxu0 0
          %974 = vmatprep.subr.bf16.mxu0 0
          %975 = vmatpush1.bf16.msra.mxu0 0
          %976 = vmatprep.subr.bf16.mxu0 0
          %977 = vmatpush1.bf16.msra.mxu0 0
          %978 = vmatprep.subr.bf16.mxu0 0
          %979 = vmatpush1.bf16.msra.mxu0 0
          %980 = vmatprep.subr.bf16.mxu0 0
          %981 = vmatpush1.bf16.msra.mxu0 0
          %982 = vmatprep.subr.bf16.mxu0 0
          %983 = vmatpush1.bf16.msra.mxu0 0
          %984 = vmatprep.mubr.bf16.mxu0 0
          %985 = vmatmul.mubr.bf16.gmra.mrb[0].mxu0 %v950
          %v986 = vpop.f32.mrb[0].mxu0
          %v987 = vadd.f32 0.0, %v986
          %v988 = vpop.f32.mrb[0].mxu0
          %v989 = vpop.f32.mrb[0].mxu0
          %v990 = vadd.f32 0.0, %v989
          %v991 = vpop.f32.mrb[0].mxu0
          %992 = vdwg.mxu0
          %v993 = vld [vmem:[%s598] sm:$0xf]
          %v994 = vld [vmem:[%s598 + $0x4] sm:$0xf]
          %v995 = vld [vmem:[%s598 + $0x8] sm:$0xf]
          %v996 = vld [vmem:[%s598 + $0xc] sm:$0xf]
          %v1001 = vunpack.c.l.b16 %v993
          %v1002 = vunpack.c.l.b16 %v994
          %v1003 = vunpack.c.l.b16 %v995
          %v1004 = vunpack.c.l.b16 %v996
          %v1005 = vpack.c.b16 %v1002, %v1001
          %v1006 = vpack.c.b16 %v1004, %v1003
          %1009 = vmatprep.subr.bf16.mxu0 0
          %1010 = vmatpush1.bf16.msra.mxu0 %v1005
          %1011 = vmatprep.subr.bf16.mxu0 0
          %1012 = vmatpush1.bf16.msra.mxu0 %v1006
          %1013 = vmatprep.subr.bf16.mxu0 0
          %1014 = vmatpush1.bf16.msra.mxu0 0
          %1015 = vmatprep.subr.bf16.mxu0 0
          %1016 = vmatpush1.bf16.msra.mxu0 0
          %1017 = vmatprep.subr.bf16.mxu0 0
          %1018 = vmatpush1.bf16.msra.mxu0 0
          %1019 = vmatprep.subr.bf16.mxu0 0
          %1020 = vmatpush1.bf16.msra.mxu0 0
          %1021 = vmatprep.subr.bf16.mxu0 0
          %1022 = vmatpush1.bf16.msra.mxu0 0
          %1023 = vmatprep.subr.bf16.mxu0 0
          %1024 = vmatpush1.bf16.msra.mxu0 0
          %1025 = vmatprep.subr.bf16.mxu0 0
          %1026 = vmatpush1.bf16.msra.mxu0 0
          %1027 = vmatprep.subr.bf16.mxu0 0
          %1028 = vmatpush1.bf16.msra.mxu0 0
          %1029 = vmatprep.subr.bf16.mxu0 0
          %1030 = vmatpush1.bf16.msra.mxu0 0
          %1031 = vmatprep.subr.bf16.mxu0 0
          %1032 = vmatpush1.bf16.msra.mxu0 0
          %1033 = vmatprep.subr.bf16.mxu0 0
          %1034 = vmatpush1.bf16.msra.mxu0 0
          %1035 = vmatprep.subr.bf16.mxu0 0
          %1036 = vmatpush1.bf16.msra.mxu0 0
          %1037 = vmatprep.subr.bf16.mxu0 0
          %1038 = vmatpush1.bf16.msra.mxu0 0
          %1039 = vmatprep.subr.bf16.mxu0 0
          %1040 = vmatpush1.bf16.msra.mxu0 0
          %1041 = vmatprep.mubr.bf16.mxu0 0
          %1042 = vmatmul.mubr.bf16.gmra.mrb[0].mxu0 %v950
          %v1043 = vpop.f32.mrb[0].mxu0
          %v1044 = vadd.f32 0.0, %v1043
          %v1045 = vpop.f32.mrb[0].mxu0
          %v1046 = vpop.f32.mrb[0].mxu0
          %v1047 = vadd.f32 0.0, %v1046
          %v1048 = vpop.f32.mrb[0].mxu0
          %1049 = vdwg.mxu0
          %v1050 = vpack.c.bf16 %v1047, %v1044
          %v1051 = vpack.c.bf16 %v990, %v987
          %v1053 = vsel %vm872, %v1050, 0
          %v1056 = vsel %vm872, %v1051, 0
          %1058 = vmatprep.subr.bf16.mxu0 0
          %1059 = vmatpush1.bf16.xpose.msra.mxu0 %v1056
          %1060 = vmatprep.subr.bf16.mxu0 0
          %1061 = vmatpush1.bf16.xpose.msra.mxu0 0
          %1062 = vmatprep.subr.bf16.mxu0 0
          %1063 = vmatpush1.bf16.xpose.msra.mxu0 0
          %1064 = vmatprep.subr.bf16.mxu0 0
          %1065 = vmatpush1.bf16.xpose.msra.mxu0 0
          %1066 = vmatprep.subr.bf16.mxu0 0
          %1067 = vmatpush1.bf16.xpose.msra.mxu0 0
          %1068 = vmatprep.subr.bf16.mxu0 0
          %1069 = vmatpush1.bf16.xpose.msra.mxu0 0
          %1070 = vmatprep.subr.bf16.mxu0 0
          %1071 = vmatpush1.bf16.xpose.msra.mxu0 0
          %1072 = vmatprep.subr.bf16.mxu0 0
          %1073 = vmatpush1.bf16.xpose.msra.mxu0 0
          %1074 = vmatprep.subr.bf16.mxu0 0
          %1075 = vmatpush1.bf16.xpose.msra.mxu0 0
          %1076 = vmatprep.subr.bf16.mxu0 0
          %1077 = vmatpush1.bf16.xpose.msra.mxu0 0
          %1078 = vmatprep.subr.bf16.mxu0 0
          %1079 = vmatpush1.bf16.xpose.msra.mxu0 0
          %1080 = vmatprep.subr.bf16.mxu0 0
          %1081 = vmatpush1.bf16.xpose.msra.mxu0 0
          %1082 = vmatprep.subr.bf16.mxu0 0
          %1083 = vmatpush1.bf16.xpose.msra.mxu0 0
          %1084 = vmatprep.subr.bf16.mxu0 0
          %1085 = vmatpush1.bf16.xpose.msra.mxu0 0
          %1086 = vmatprep.subr.bf16.mxu0 0
          %1087 = vmatpush1.bf16.xpose.msra.mxu0 0
          %1088 = vmatprep.subr.bf16.mxu0 0
          %1089 = vmatpush1.bf16.xpose.msra.mxu0 0
          %1090 = vmatprep.mubr.bf16.mxu0 0
          %1091 = vmatmul.mubr.bf16.gmra.mrb[0].mxu0 %v1053
          %v1092 = vpop.f32.mrb[0].mxu0
          %v1093 = vadd.f32 0.0, %v1092
          %v1094 = vpop.f32.mrb[0].mxu0
          %v1095 = vpop.f32.mrb[0].mxu0
          %v1096 = vadd.f32 0.0, %v1095
          %v1097 = vpop.f32.mrb[0].mxu0
          %1098 = vdwg.mxu0
          %v1099 = vlaneseq
          %v1100 = vshrl.u32 %v1099, 7
          %v1101 = vadd.s32 %v1100, 8
          %v1102 = vlaneseq
          %v1103 = vand.u32 %v1102, 127
          %v1104 = vsub.s32 %v1100, %v1103
          %v1105 = vsub.s32 %v1101, %v1103
          %vm1106 = vcmp.lt.s32.totalorder %v1104, 0
          %v1107 = vsub.s32 0, %v1104
          %v1108 = vsel %vm1106, %v1107, %v1104
          %vm1109 = vcmp.lt.s32.totalorder %v1105, 0
          %v1110 = vsub.s32 0, %v1105
          %v1111 = vsel %vm1109, %v1110, %v1105
          %vm1112 = vcmp.le.s32.totalorder %v1108, 4
          %vm1113 = vcmp.le.s32.totalorder %v1111, 4
          %v1114 = vsel %vm1112, %v1093, -1e+30
          %v1115 = vsel %vm1113, %v1096, -1e+30
          %v1116 = vsel %vm872, %v1114, -inf
          %v1117 = vsel %vm872, %v1115, -inf
          %v1118 = vmax.f32 %v1116, %v1117
          %v1119 = vrot.slane %v1118, 4
          %v1120 = vmax.f32 %v1118, %v1119
          %v1121 = vrot.slane %v1120, 2
          %v1122 = vmax.f32 %v1120, %v1121
          %v1123 = vrot.slane %v1122, 1
          %v1124 = vmax.f32 %v1122, %v1123
          %vm1125 = vcmp.ge.f32.partialorder %v1114, %v1124
          %vm1126 = vcmp.ge.f32.partialorder %v1115, %v1124
          %v1127 = vsel %vm1125, -1e+30, %v1114
          %v1128 = vsel %vm1126, -1e+30, %v1115
          %v1129 = vsel %vm872, %v1127, -inf
          %v1130 = vsel %vm872, %v1128, -inf
          %v1131 = vmax.f32 %v1129, %v1130
          %v1132 = vrot.slane %v1131, 4
          %v1133 = vmax.f32 %v1131, %v1132
          %v1134 = vrot.slane %v1133, 2
          %v1135 = vmax.f32 %v1133, %v1134
          %v1136 = vrot.slane %v1135, 1
          %v1137 = vmax.f32 %v1135, %v1136
          %vm1138 = vcmp.ge.f32.partialorder %v1127, %v1137
          %vm1139 = vcmp.ge.f32.partialorder %v1128, %v1137
          %v1140 = vsel %vm1138, -1e+30, %v1127
          %v1141 = vsel %vm1139, -1e+30, %v1128
          %v1142 = vsel %vm872, %v1140, -inf
          %v1143 = vsel %vm872, %v1141, -inf
          %v1144 = vmax.f32 %v1142, %v1143
          %v1145 = vrot.slane %v1144, 4
          %v1146 = vmax.f32 %v1144, %v1145
          %v1147 = vrot.slane %v1146, 2
          %v1148 = vmax.f32 %v1146, %v1147
          %v1149 = vrot.slane %v1148, 1
          %v1150 = vmax.f32 %v1148, %v1149
          %vm1151 = vcmp.ge.f32.partialorder %v1114, %v1150
          %vm1152 = vcmp.ge.f32.partialorder %v1115, %v1150
          %vm1153 = vmand %vm1151, %vm1112
          %vm1154 = vmand %vm1152, %vm1113
          %v1155 = vld [vmem:[%s554] sm:$0xf]
          %v1156 = vld [vmem:[%s554 + $0x4] sm:$0xf]
          %v1157 = vunpack.c.l.bf16 %v1155
          %v1158 = vunpack.c.l.bf16 %v1156
          %v1159 = vsel %vm1153, 1, 0
          %v1160 = vsel %vm1154, 1, 0
          %v1161 = vcvt.s32.f32 %v1159
          %v1162 = vcvt.s32.f32 %v1160
          %v1163 = vmax.f32 %v1157, %v1161
          %v1164 = vmax.f32 %v1158, %v1162
          %v1165 = vpack.c.bf16 %v1164, %v1163
          %v1167 = vunpack.c.l.b16 %v1165
          %v1168 = vunpack.c.h.b16 %v1165
          %v1169 = vpack.c.b16 %v1167, %v1167
          %v1170 = vpack.c.b16 %v1168, %v1168
          %vm1173 = vcmask 125952
          %1174 = vst.msk [vmem:[%s679] sm:$0xf] %vm1173, %v1169
          %1175 = vst.msk [vmem:[%s679 + $0x4] sm:$0xf] %vm1173, %v1170
          %v1176 = vld [vmem:[#allocation2] sm:$0xff]
          %v1177 = vld [vmem:[#allocation2 + $0x8] sm:$0xff]
          %v1178 = vld [vmem:[%s607] sm:$0xf]
          %v1179 = vld [vmem:[%s607 + $0x4] sm:$0xf]
          %v1182 = vunpack.c.l.b16 %v1178
          %v1183 = vunpack.c.l.b16 %v1179
          %v1184 = vpack.c.b16 %v1183, %v1182
          %v1187 = vsel %vm872, %v1165, 0
          %1189 = vmatprep.subr.bf16.mxu0 0
          %1190 = vmatpush1.bf16.msra.mxu0 %v1184
          %1191 = vmatprep.subr.bf16.mxu0 0
          %1192 = vmatpush1.bf16.msra.mxu0 0
          %1193 = vmatprep.subr.bf16.mxu0 0
          %1194 = vmatpush1.bf16.msra.mxu0 0
          %1195 = vmatprep.subr.bf16.mxu0 0
          %1196 = vmatpush1.bf16.msra.mxu0 0
          %1197 = vmatprep.subr.bf16.mxu0 0
          %1198 = vmatpush1.bf16.msra.mxu0 0
          %1199 = vmatprep.subr.bf16.mxu0 0
          %1200 = vmatpush1.bf16.msra.mxu0 0
          %1201 = vmatprep.subr.bf16.mxu0 0
          %1202 = vmatpush1.bf16.msra.mxu0 0
          %1203 = vmatprep.subr.bf16.mxu0 0
          %1204 = vmatpush1.bf16.msra.mxu0 0
          %1205 = vmatprep.subr.bf16.mxu0 0
          %1206 = vmatpush1.bf16.msra.mxu0 0
          %1207 = vmatprep.subr.bf16.mxu0 0
          %1208 = vmatpush1.bf16.msra.mxu0 0
          %1209 = vmatprep.subr.bf16.mxu0 0
          %1210 = vmatpush1.bf16.msra.mxu0 0
          %1211 = vmatprep.subr.bf16.mxu0 0
          %1212 = vmatpush1.bf16.msra.mxu0 0
          %1213 = vmatprep.subr.bf16.mxu0 0
          %1214 = vmatpush1.bf16.msra.mxu0 0
          %1215 = vmatprep.subr.bf16.mxu0 0
          %1216 = vmatpush1.bf16.msra.mxu0 0
          %1217 = vmatprep.subr.bf16.mxu0 0
          %1218 = vmatpush1.bf16.msra.mxu0 0
          %1219 = vmatprep.subr.bf16.mxu0 0
          %1220 = vmatpush1.bf16.msra.mxu0 0
          %1221 = vmatprep.mubr.bf16.mxu0 0
          %1222 = vmatmul.mubr.bf16.gmra.mrb[0].mxu0 %v1187
          %v1223 = vpop.f32.mrb[0].mxu0
          %v1224 = vadd.f32 0.0, %v1223
          %v1225 = vpop.f32.mrb[0].mxu0
          %v1226 = vpop.f32.mrb[0].mxu0
          %v1227 = vadd.f32 0.0, %v1226
          %v1228 = vpop.f32.mrb[0].mxu0
          %1229 = vdwg.mxu0
          %v1230 = vadd.f32 %v1176, %v1224
          %v1231 = vadd.f32 %v1177, %v1227
          %1232 = vst.msk [vmem:[#allocation2] sm:$0xff] %vm948, %v1230
          %1233 = vst.msk [vmem:[#allocation2 + $0x8] sm:$0xff] %vm948, %v1231
        $region96: #{forward.6} parent=51 // pred_fallthru
          _
        %p1234 = scmp.eq.s32.totalorder %s43, 2
        // Predicated region
        $region97: #{forward.6} parent=51 // pred_check
          %p1235 = pneg %p1234
        $region98: #{forward.6} parent=51 // pred_check_branch
          %1237 = sbr.rel (%p1235) target = $region100
        $region99: #{forward.6} parent=51 // pred_region
          %v1238 = vld [vmem:[#allocation2] sm:$0xff]
          %v1239 = vld [vmem:[#allocation2 + $0x8] sm:$0xff]
          %v1240 = vld [vmem:[#allocation15] sm:$0xff]
          %v1241 = vld [vmem:[#allocation15 + $0x8] sm:$0xff]
          %v1242 = vadd.f32 %v1238, %v1240
          %v1243 = vadd.f32 %v1239, %v1241
          %v1244 = vmul.f32 %v1242, 0.999995
          %v1245 = vmul.f32 %v1243, 0.999995
          %v1246 = vmax.f32 %v1244, 0.0
          %v1247 = vmax.f32 %v1245, 0.0
          %vm1248 = vcmask 261120
          %1249 = vst.msk [vmem:[#allocation20] sm:$0xff] %vm1248, %v1246
          %1250 = vst.msk [vmem:[#allocation20 + $0x8] sm:$0xff] %vm1248, %v1247
          %v1251 = vsel %vm1248, %v1246, 0.0
          %v1252 = vsel %vm1248, %v1247, 0.0
          %v1253 = vadd.f32 %v1251, %v1252
          %v1254 = vrot.slane %v1253, 4
          %v1255 = vadd.f32 %v1253, %v1254
          %v1256 = vrot.slane %v1255, 2
          %v1257 = vadd.f32 %v1255, %v1256
          %v1258 = vrot.slane %v1257, 1
          %v1259 = vadd.f32 %v1257, %v1258
          %vm1260 = vcmask 253952
          %1261 = vst.msk [vmem:[#allocation21] sm:$0x1] %vm1260, %v1259
        $region100: #{forward.6} parent=51 // pred_fallthru
          _
        %s1262 = sand.u32 %s272, 1
        %s1263 = scalar_lea.sflag [#allocation5], %s1262
        %s1264 = sand.u32 %s272, 1
        %s1265 = smul.addr %s1264, 8
        %s1266 = scalar_lea.vmem [#allocation17], %s1265
        %s1267 = sand.u32 %s43, 1
        %s1268 = scalar_lea.sflag [#allocation19], %s1267
        %s1269 = sand.u32 %s304, 1
        %s1270 = smul.addr %s1269, 8
        %s1271 = scalar_lea.vmem [#allocation18], %s1270
        // Predicated region
        $region101: #{forward.6} parent=51 // pred_check
          %p1272 = pneg %p282
        $region102: #{forward.6} parent=51 // pred_check_branch
          %1274 = sbr.rel (%p1272) target = $region104
        $region103: #{forward.6} parent=51 // pred_region
          %s1276 = ssub.s32 128, 128
          %1277 = vsyncadd %s1263, %s1276
          %s1278 = smul.addr %s43, 2
          %s1279 = smul.addr %s1278, 64
          %s1280 = scalar_lea.hbm %s8, %s1279
          %s1281 = sshll.u32 %s1266, 4
          %s1282 = int_to_ptr.vmem [resolvable:$true] %s1281
          %1287 = dma.vmem_to_hbm [thread:$0]  %s1282, 128, %s1280, %s1263, 64, 64, 4
        $region104: #{forward.6} parent=51 // pred_fallthru
          _
        // Predicated region
        $region105: #{forward.6} parent=51 // pred_check
          %p1288 = pneg %p314
        $region106: #{forward.6} parent=51 // pred_check_branch
          %1290 = sbr.rel (%p1288) target = $region108
        $region107: #{forward.6} parent=51 // pred_region
          %s1291 = ssub.s32 %s43, 1
          %p1292 = scmp.gt.s32.totalorder %s1291, 0
          %s1293 = scalar_select %p1292, %s1291, 0
          %s1295 = ssub.s32 128, 128
          %1296 = vsyncadd %s1268, %s1295
          %s1297 = smul.addr %s1293, 2
          %s1298 = smul.addr %s1297, 64
          %s1299 = scalar_lea.hbm %s9, %s1298
          %s1300 = sshll.u32 %s1271, 4
          %s1301 = int_to_ptr.vmem [resolvable:$true] %s1300
          %1306 = dma.vmem_to_hbm [thread:$0]  %s1301, 128, %s1299, %s1268, 64, 64, 4
        $region108: #{forward.6} parent=51 // pred_fallthru
          _
        // Predicated region
        $region109: #{forward.6} parent=51 // pred_check
          %p1307 = pneg %p335
        $region110: #{forward.6} parent=51 // pred_check_branch
          %1309 = sbr.rel (%p1307) target = $region112
        $region111: #{forward.6} parent=51 // pred_region
          %s1311 = ssub.s32 256, 256
          %1312 = vsyncadd [#allocation19], %s1311
          %s1313 = sshll.u32 [#allocation20], 4
          %s1314 = int_to_ptr.vmem [resolvable:$true] %s1313
          %1319 = dma.vmem_to_hbm [thread:$0]  %s1314, 256, %s10, [#allocation19], 128, 128, 8
        $region112: #{forward.6} parent=51 // pred_fallthru
          _
        // Predicated region
        $region113: #{forward.6} parent=51 // pred_check
          %p1320 = pneg %p356
        $region114: #{forward.6} parent=51 // pred_check_branch
          %1322 = sbr.rel (%p1320) target = $region116
        $region115: #{forward.6} parent=51 // pred_region
          %s1324 = ssub.s32 16, 16
          %1325 = vsyncadd [#allocation22], %s1324
          %s1327 = sshll.u32 [#allocation21], 4
          %s1328 = int_to_ptr.vmem [resolvable:$true] %s1327
          %1330 = dma.vmem_to_hbm [thread:$0]  %s1328, 16, %s11, [#allocation22]
        $region116: #{forward.6} parent=51 // pred_fallthru
          _
        // Predicated region
        $region117: #{forward.6} parent=51 // pred_check
          %p1331 = pneg %p335
        $region118: #{forward.6} parent=51 // pred_check_branch
          %1333 = sbr.rel (%p1331) target = $region120
        $region119: #{forward.6} parent=51 // pred_region
          %1334 = dma.done [#allocation19], 256
        $region120: #{forward.6} parent=51 // pred_fallthru
          _
        // Predicated region
        $region121: #{forward.6} parent=51 // pred_check
          %p1335 = pneg %p356
        $region122: #{forward.6} parent=51 // pred_check_branch
          %1337 = sbr.rel (%p1335) target = $region124
        $region123: #{forward.6} parent=51 // pred_region
          %1338 = dma.done [#allocation22], 16
        $region124: #{forward.6} parent=51 // pred_fallthru
          _
      $region52: #{forward.6} parent=5 // pred_fallthru
        _
      %p1339 = scmp.le.s32.totalorder 2, %s38
      // Predicated region
      $region125: #{forward.6} parent=5 // pred_check
        %p1340 = pneg %p1339
      $region126: #{forward.6} parent=5 // pred_check_branch
        %1342 = sbr.rel (%p1340) target = $region128
      $region127: #{forward.6} parent=5 // pred_region
        %s1343 = ssub.s32 %s38, 2
        // Predicated region
        $region129: #{forward.6} parent=127 // pred_check
          %p1344 = pneg %p288
        $region130: #{forward.6} parent=127 // pred_check_branch
          %1346 = sbr.rel (%p1344) target = $region132
        $region131: #{forward.6} parent=127 // pred_region
          %s1347 = sand.u32 %s273, 1
          %s1348 = scalar_lea.sflag [#allocation5], %s1347
          %s1349 = sand.u32 %s273, 1
          %s1350 = smul.addr %s1349, 8
          %s1351 = scalar_lea.vmem [#allocation17], %s1350
          %1352 = dma.done %s1348, 128
        $region132: #{forward.6} parent=127 // pred_fallthru
          _
        // Predicated region
        $region133: #{forward.6} parent=127 // pred_check
          %p1353 = pneg %p320
        $region134: #{forward.6} parent=127 // pred_check_branch
          %1355 = sbr.rel (%p1353) target = $region136
        $region135: #{forward.6} parent=127 // pred_region
          %s1356 = sand.u32 %s44, 1
          %s1357 = scalar_lea.sflag [#allocation19], %s1356
          %s1358 = sand.u32 %s305, 1
          %s1359 = smul.addr %s1358, 8
          %s1360 = scalar_lea.vmem [#allocation18], %s1359
          %1361 = dma.done %s1357, 128
        $region136: #{forward.6} parent=127 // pred_fallthru
          _
      $region128: #{forward.6} parent=5 // pred_fallthru
        _
    $region6: #{forward.6} parent=1 // loop_footer
      %s42 = sadd.s32 1, %s38
    $region7: #{forward.6} parent=1 // loop_footer_branch
      %37 = sbr.rel target = $region3
    $region8: #{forward.6} parent=1 // loop_exit
      _
    %1362 = vsyncpa [#allocation4], 1
    %s1363 = scalar_lea.sflag [#allocation4], 1
    %1364 = vsyncpa %s1363, 1
    %1365 = vsyncpa [#allocation7], 1
    %s1366 = scalar_lea.sflag [#allocation7], 1
    %1367 = vsyncpa %s1366, 1
    %1368 = vsyncpa [#allocation10], 1
    %s1369 = scalar_lea.sflag [#allocation10], 1
    %1370 = vsyncpa %s1369, 1
    %1371 = vsyncpa [#allocation13], 1
    %s1372 = scalar_lea.sflag [#allocation13], 1
    %1373 = vsyncpa %s1372, 1
    %1374 = vsyncpa [#allocation16], 1
    %1375 = vsyncpa [#allocation5], 1
    %s1376 = scalar_lea.sflag [#allocation5], 1
    %1377 = vsyncpa %s1376, 1
    %1378 = vsyncpa [#allocation19], 1
    %s1379 = scalar_lea.sflag [#allocation19], 1
    %1380 = vsyncpa %s1379, 1
    %1381 = vsyncpa [#allocation22], 1

</llo_original>
